<compile_context>
chip_gen: v5e
topology: v5e:2x2
jax: 0.10.0
libtpu: 0.0.40
codegen_flags: <defaults>
</compile_context>

<pallas_src>
import functools

import jax
import jax.numpy as jnp
from jax.experimental import pallas as pl
from jax.experimental.pallas import tpu as pltpu

NUM_BOND_TYPE = 6
NUM_BOND_DIRECTION = 3
SELF_LOOP_TOKEN = 4
NUM_ATOM_TYPE = 120
NUM_CHIRALITY_TAG = 3

BN_EPS = 1e-5


def _round_up(x, m):
    return (x + m - 1) // m * m


# ----------------------------- Pallas kernel -------------------------------

def fused_gin_kernel(adj_ref, x0_ref, ebias_ref, w1_ref, w2_ref, vecs_ref,
                     o_ref, *, num_layers: int, n_real: int, d_pad: int,
                     eps: float):
    n_pad = adj_ref.shape[0]

    adj = adj_ref[...]                      # [n_pad, n_pad] bf16, VMEM-resident
    h = x0_ref[...]                         # [n_pad, d_pad] f32 running embedding

    # BatchNorm pad-row mask: computed ONCE per kernel call (hoisted out of
    # the layer loop); padded rows are excluded from the batch statistics.
    row_ids = jax.lax.broadcasted_iota(jnp.int32, (n_pad, 1), 0)
    mask = (row_ids < n_real).astype(jnp.float32)
    inv_n = 1.0 / float(n_real)

    # Statically-unrolled layer loop (num_layers is small and fixed).
    for l in range(num_layers):
        vecs = vecs_ref[l]                  # [8, h_pad] f32 packed small vectors
        b1 = vecs[0:1, :]                   # [1, h_pad]
        b2 = vecs[1:2, :d_pad]              # [1, d_pad]
        gamma = vecs[2:3, :d_pad]
        beta = vecs[3:4, :d_pad]

        # --- GIN 'add' aggregation: (A @ h)[i] + ebias_l[i] ------------------
        aggr = jnp.dot(adj, h.astype(jnp.bfloat16),
                       preferred_element_type=jnp.float32)
        aggr = aggr + ebias_ref[l].astype(jnp.float32)

        # --- GIN update MLP: Linear(D, 2D) -> ReLU -> Linear(2D, D) ----------
        hid = jnp.dot(aggr.astype(jnp.bfloat16), w1_ref[l],
                      preferred_element_type=jnp.float32) + b1
        hid = jnp.maximum(hid, 0.0)
        hh = jnp.dot(hid.astype(jnp.bfloat16), w2_ref[l],
                     preferred_element_type=jnp.float32) + b2

        # --- BatchNorm1d (training-mode batch stats), two-pass, f32 ----------
        mean = jnp.sum(hh * mask, axis=0, keepdims=True) * inv_n      # [1, D]
        cent = (hh - mean) * mask
        var = jnp.sum(cent * cent, axis=0, keepdims=True) * inv_n     # biased
        scale = gamma * jax.lax.rsqrt(var + eps)
        shift = beta - mean * scale
        h = hh * scale + shift

        # Inter-layer ReLU (not on the last layer).
        if l != num_layers - 1:
            h = jnp.maximum(h, 0.0)

    o_ref[...] = h


def fused_gnn_pallas(adj, x0, ebias, w1, w2, vecs, *, n_real):
    num_layers, n_pad, d_pad = ebias.shape
    h_pad = w1.shape[-1]

    kern = functools.partial(fused_gin_kernel, num_layers=num_layers,
                             n_real=n_real, d_pad=d_pad, eps=BN_EPS)

    flops = num_layers * (2 * n_pad * n_pad * d_pad          # aggregation
                          + 2 * n_pad * d_pad * h_pad        # linear 1
                          + 2 * n_pad * h_pad * d_pad)       # linear 2
    out_bytes = 4 * n_pad * d_pad
    in_bytes = sum(int(a.size) * a.dtype.itemsize
                   for a in (adj, x0, ebias, w1, w2, vecs))
    bytes_accessed = in_bytes + out_bytes

    # VMEM limit from actual buffer sizes (2x for compiler temps / copies),
    # capped under v7x's 64 MiB physical VMEM.
    vmem_limit = min(56 * 1024 * 1024,
                     max(16 * 1024 * 1024, 2 * bytes_accessed + (4 << 20)))

    vmem = pltpu.MemorySpace.VMEM
    return pl.pallas_call(
        kern,
        out_shape=jax.ShapeDtypeStruct((n_pad, d_pad), jnp.float32),
        in_specs=[pl.BlockSpec(memory_space=vmem)] * 6,
        out_specs=pl.BlockSpec(memory_space=vmem),
        compiler_params=pltpu.CompilerParams(vmem_limit_bytes=vmem_limit),
        cost_estimate=pl.CostEstimate(flops=flops,
                                      transcendentals=num_layers * d_pad,
                                      bytes_accessed=bytes_accessed),
    )(adj, x0, ebias, w1, w2, vecs)


# ------------------------------ parameters ---------------------------------

def _xavier_uniform(key, shape):
    fan_out, fan_in = shape
    bound = jnp.sqrt(6.0 / (fan_in + fan_out))
    return jax.random.uniform(key, shape, jnp.float32, -bound, bound)


def init_params(key, num_layers, embed_dim):
    keys = jax.random.split(key, 2 + num_layers)
    params = {
        "x_emb1": _xavier_uniform(keys[0], (NUM_ATOM_TYPE, embed_dim)),
        "x_emb2": _xavier_uniform(keys[1], (NUM_CHIRALITY_TAG, embed_dim)),
        "layers": [],
    }
    for l in range(num_layers):
        k = jax.random.split(keys[2 + l], 4)
        layer = {
            "edge_emb1": _xavier_uniform(k[0], (NUM_BOND_TYPE, embed_dim)),
            "edge_emb2": _xavier_uniform(k[1], (NUM_BOND_DIRECTION, embed_dim)),
            # Linear weights stored as [in, out] so the kernel does x @ W + b.
            "w1": _xavier_uniform(k[2], (embed_dim, 2 * embed_dim)),
            "b1": jnp.zeros((1, 2 * embed_dim), jnp.float32),
            "w2": _xavier_uniform(k[3], (2 * embed_dim, embed_dim)),
            "b2": jnp.zeros((1, embed_dim), jnp.float32),
            # BatchNorm1d affine params (PyTorch default init: weight=1, bias=0).
            "gamma": jnp.ones((1, embed_dim), jnp.float32),
            "beta": jnp.zeros((1, embed_dim), jnp.float32),
        }
        params["layers"].append(layer)
    return params


# ------------------------------ forward pass --------------------------------

def gnn_forward(params, x_idx, edge_index, edge_attr):
    """x_idx: [N, 2] int, edge_index: [2, E] int, edge_attr: [E, 2] int."""
    n = x_idx.shape[0]
    d = params["x_emb1"].shape[1]
    num_layers = len(params["layers"])

    # initial node embedding (glue): emb1(x[:,0]) + emb2(x[:,1])
    h0 = params["x_emb1"][x_idx[:, 0]] + params["x_emb2"][x_idx[:, 1]]

    # add self loops to the edge list and their [SELF_LOOP_TOKEN, 0] attributes
    loop = jnp.arange(n, dtype=edge_index.dtype)
    ei = jnp.concatenate([edge_index, jnp.stack([loop, loop])], axis=1)
    self_loop_attr = jnp.concatenate(
        [jnp.full((n, 1), SELF_LOOP_TOKEN, dtype=edge_attr.dtype),
         jnp.zeros((n, 1), dtype=edge_attr.dtype)], axis=1)
    ea = jnp.concatenate([edge_attr, self_loop_attr], axis=0)
    src, dst = ei[0], ei[1]

    # padded sizes: nodes AND features padded to lane-dense 128 multiples so
    # the A @ h contraction and all matmul lane dims are unmasked/single-pass.
    n_pad = _round_up(n, 128)
    d_pad = _round_up(d, 128)
    h_pad = _round_up(2 * d, 128)

    # dense (multi-)adjacency with self loops; padded rows/cols are zero.
    # Counts are small integers -> exact in bf16.
    adj = (jnp.zeros((n_pad, n_pad), jnp.float32)
           .at[dst, src].add(1.0).astype(jnp.bfloat16))

    # padded initial node features (kept in f32; h stays f32 elementwise)
    x0 = jnp.zeros((n_pad, d_pad), jnp.float32).at[:n, :d].set(h0)

    # per-layer operands, zero-padded and stacked along a leading layer axis
    ebias_l, w1_l, w2_l, vecs_l = [], [], [], []
    for lp in params["layers"]:
        # edge embedding lookup + per-destination scatter-add (glue); this
        # replaces the dense one-hot Dmat @ eemb matmul inside the kernel.
        eemb = lp["edge_emb1"][ea[:, 0]] + lp["edge_emb2"][ea[:, 1]]     # [E, d]
        eb = jnp.zeros((n_pad, d), jnp.float32).at[dst].add(eemb)
        ebias_l.append(jnp.zeros((n_pad, d_pad), jnp.float32)
                       .at[:, :d].set(eb).astype(jnp.bfloat16))
        w1_l.append(jnp.zeros((d_pad, h_pad), jnp.float32)
                    .at[:d, :2 * d].set(lp["w1"]).astype(jnp.bfloat16))
        w2_l.append(jnp.zeros((h_pad, d_pad), jnp.float32)
                    .at[:2 * d, :d].set(lp["w2"]).astype(jnp.bfloat16))
        # pack the four tiny vectors (b1, b2, gamma, beta) into one [8, h_pad]
        vec = jnp.zeros((8, h_pad), jnp.float32)
        vec = vec.at[0, :2 * d].set(lp["b1"][0])
        vec = vec.at[1, :d].set(lp["b2"][0])
        vec = vec.at[2, :d].set(lp["gamma"][0])
        vec = vec.at[3, :d].set(lp["beta"][0])
        vecs_l.append(vec)

    stack = lambda xs: jnp.stack(xs, axis=0)
    out_pad = fused_gnn_pallas(adj, x0,
                               stack(ebias_l), stack(w1_l), stack(w2_l),
                               stack(vecs_l),
                               n_real=n)
    return out_pad[:n, :d]


# ---------------------------------- main -------------------------------------

if __name__ == "__main__":
    NUM_LAYERS = 5
    EMBED_DIM = 32
    N_NODES = 16
    N_EDGES = 24

    key = jax.random.PRNGKey(0)
    kp, kx, ke, ka1, ka2 = jax.random.split(key, 5)

    params = init_params(kp, NUM_LAYERS, EMBED_DIM)

    x_idx = jnp.stack(
        [jax.random.randint(kx, (N_NODES,), 0, NUM_ATOM_TYPE),
         jax.random.randint(jax.random.fold_in(kx, 1), (N_NODES,), 0,
                            NUM_CHIRALITY_TAG)],
        axis=1).astype(jnp.int32)
    edge_index = jax.random.randint(ke, (2, N_EDGES), 0, N_NODES).astype(jnp.int32)
    edge_attr = jnp.stack(
        [jax.random.randint(ka1, (N_EDGES,), 0, NUM_BOND_TYPE),
         jax.random.randint(ka2, (N_EDGES,), 0, NUM_BOND_DIRECTION)],
        axis=1).astype(jnp.int32)

    fwd = jax.jit(gnn_forward)
    out = fwd(params, x_idx, edge_index, edge_attr)
    out = jax.block_until_ready(out)
    assert out.shape == (N_NODES, EMBED_DIM)
    assert jnp.all(jnp.isfinite(out))
    print("KERNEL_OK")
</pallas_src>

<mosaic_0001>
module attributes {stable_mosaic.version = 11 : i64} {
  func.func @fused_gin_kernel(%arg0: memref<128x128xbf16, #tpu.memory_space<vmem>>, %arg1: memref<128x128xf32, #tpu.memory_space<vmem>>, %arg2: memref<5x128x128xbf16, #tpu.memory_space<vmem>>, %arg3: memref<5x128x128xbf16, #tpu.memory_space<vmem>>, %arg4: memref<5x128x128xbf16, #tpu.memory_space<vmem>>, %arg5: memref<5x8x128xf32, #tpu.memory_space<vmem>>, %arg6: memref<128x128xf32, #tpu.memory_space<vmem>>) attributes {dimension_semantics = [], scalar_prefetch = 0 : i64, scratch_operands = 0 : i64, tpu.core_type = #tpu.core_type<tc>} {
    %c0 = arith.constant 0 : index
    %c0_0 = arith.constant 0 : index
    %0 = vector.load %arg0[%c0, %c0_0] : memref<128x128xbf16, #tpu.memory_space<vmem>>, vector<128x128xbf16>
    %c0_1 = arith.constant 0 : index
    %c0_2 = arith.constant 0 : index
    %1 = vector.load %arg1[%c0_1, %c0_2] : memref<128x128xf32, #tpu.memory_space<vmem>>, vector<128x128xf32>
    %2 = tpu.iota {dimensions = array<i32: 0>} : vector<128x1xi32>
    %c16_i32 = arith.constant 16 : i32
    %3 = vector.broadcast %c16_i32 : i32 to vector<128x1xi32>
    %4 = arith.cmpi slt, %2, %3 : vector<128x1xi32>
    %5 = arith.extui %4 : vector<128x1xi1> to vector<128x1xi32>
    %6 = arith.sitofp %5 : vector<128x1xi32> to vector<128x1xf32>
    %c0_3 = arith.constant 0 : index
    %c0_4 = arith.constant 0 : index
    %c0_5 = arith.constant 0 : index
    %7 = vector.load %arg5[%c0_3, %c0_4, %c0_5] : memref<5x8x128xf32, #tpu.memory_space<vmem>>, vector<1x8x128xf32>
    %8 = vector.shape_cast %7 : vector<1x8x128xf32> to vector<8x128xf32>
    %9 = vector.extract_strided_slice %8 {offsets = [0, 0], sizes = [1, 128], strides = [1, 1]} : vector<8x128xf32> to vector<1x128xf32>
    %10 = vector.extract_strided_slice %8 {offsets = [1, 0], sizes = [1, 128], strides = [1, 1]} : vector<8x128xf32> to vector<1x128xf32>
    %11 = vector.extract_strided_slice %8 {offsets = [2, 0], sizes = [1, 128], strides = [1, 1]} : vector<8x128xf32> to vector<1x128xf32>
    %12 = vector.extract_strided_slice %8 {offsets = [3, 0], sizes = [1, 128], strides = [1, 1]} : vector<8x128xf32> to vector<1x128xf32>
    %13 = arith.truncf %1 : vector<128x128xf32> to vector<128x128xbf16>
    %cst = arith.constant dense<0.000000e+00> : vector<128x128xf32>
    %14 = tpu.matmul %0, %13, %cst {dimension_numbers = #tpu.dot_dimension_numbers<[1], [0], [0], [1], [0, 0, 1, 1], [], []>} : vector<128x128xbf16>, vector<128x128xbf16>, vector<128x128xf32> -> vector<128x128xf32>
    %c0_6 = arith.constant 0 : index
    %c0_7 = arith.constant 0 : index
    %c0_8 = arith.constant 0 : index
    %15 = vector.load %arg2[%c0_6, %c0_7, %c0_8] : memref<5x128x128xbf16, #tpu.memory_space<vmem>>, vector<1x128x128xbf16>
    %16 = vector.shape_cast %15 : vector<1x128x128xbf16> to vector<128x128xbf16>
    %17 = arith.extf %16 : vector<128x128xbf16> to vector<128x128xf32>
    %18 = arith.addf %14, %17 : vector<128x128xf32>
    %19 = arith.truncf %18 : vector<128x128xf32> to vector<128x128xbf16>
    %c0_9 = arith.constant 0 : index
    %c0_10 = arith.constant 0 : index
    %c0_11 = arith.constant 0 : index
    %20 = vector.load %arg3[%c0_9, %c0_10, %c0_11] : memref<5x128x128xbf16, #tpu.memory_space<vmem>>, vector<1x128x128xbf16>
    %21 = vector.shape_cast %20 : vector<1x128x128xbf16> to vector<128x128xbf16>
    %cst_12 = arith.constant dense<0.000000e+00> : vector<128x128xf32>
    %22 = tpu.matmul %19, %21, %cst_12 {dimension_numbers = #tpu.dot_dimension_numbers<[1], [0], [0], [1], [0, 0, 1, 1], [], []>} : vector<128x128xbf16>, vector<128x128xbf16>, vector<128x128xf32> -> vector<128x128xf32>
    %23 = vector.broadcast %9 : vector<1x128xf32> to vector<128x128xf32>
    %24 = arith.addf %22, %23 : vector<128x128xf32>
    %cst_13 = arith.constant 0.000000e+00 : f32
    %25 = vector.broadcast %cst_13 : f32 to vector<128x128xf32>
    %26 = arith.maximumf %24, %25 : vector<128x128xf32>
    %27 = arith.truncf %26 : vector<128x128xf32> to vector<128x128xbf16>
    %c0_14 = arith.constant 0 : index
    %c0_15 = arith.constant 0 : index
    %c0_16 = arith.constant 0 : index
    %28 = vector.load %arg4[%c0_14, %c0_15, %c0_16] : memref<5x128x128xbf16, #tpu.memory_space<vmem>>, vector<1x128x128xbf16>
    %29 = vector.shape_cast %28 : vector<1x128x128xbf16> to vector<128x128xbf16>
    %cst_17 = arith.constant dense<0.000000e+00> : vector<128x128xf32>
    %30 = tpu.matmul %27, %29, %cst_17 {dimension_numbers = #tpu.dot_dimension_numbers<[1], [0], [0], [1], [0, 0, 1, 1], [], []>} : vector<128x128xbf16>, vector<128x128xbf16>, vector<128x128xf32> -> vector<128x128xf32>
    %31 = vector.broadcast %10 : vector<1x128xf32> to vector<128x128xf32>
    %32 = arith.addf %30, %31 : vector<128x128xf32>
    %33 = vector.broadcast %6 : vector<128x1xf32> to vector<128x128xf32>
    %34 = arith.mulf %32, %33 : vector<128x128xf32>
    %cst_18 = arith.constant dense<0.000000e+00> : vector<128xf32>
    %35 = vector.multi_reduction <add>, %34, %cst_18 [0] : vector<128x128xf32> to vector<128xf32>
    %36 = vector.shape_cast %35 : vector<128xf32> to vector<1x128xf32>
    %cst_19 = arith.constant 6.250000e-02 : f32
    %37 = vector.broadcast %cst_19 : f32 to vector<1x128xf32>
    %38 = arith.mulf %36, %37 : vector<1x128xf32>
    %39 = vector.broadcast %38 : vector<1x128xf32> to vector<128x128xf32>
    %40 = arith.subf %32, %39 : vector<128x128xf32>
    %41 = vector.broadcast %6 : vector<128x1xf32> to vector<128x128xf32>
    %42 = arith.mulf %40, %41 : vector<128x128xf32>
    %43 = arith.mulf %42, %42 : vector<128x128xf32>
    %cst_20 = arith.constant dense<0.000000e+00> : vector<128xf32>
    %44 = vector.multi_reduction <add>, %43, %cst_20 [0] : vector<128x128xf32> to vector<128xf32>
    %45 = vector.shape_cast %44 : vector<128xf32> to vector<1x128xf32>
    %cst_21 = arith.constant 6.250000e-02 : f32
    %46 = vector.broadcast %cst_21 : f32 to vector<1x128xf32>
    %47 = arith.mulf %45, %46 : vector<1x128xf32>
    %cst_22 = arith.constant 9.99999974E-6 : f32
    %48 = vector.broadcast %cst_22 : f32 to vector<1x128xf32>
    %49 = arith.addf %47, %48 : vector<1x128xf32>
    %50 = math.rsqrt %49 : vector<1x128xf32>
    %51 = arith.mulf %11, %50 : vector<1x128xf32>
    %52 = arith.mulf %38, %51 : vector<1x128xf32>
    %53 = arith.subf %12, %52 : vector<1x128xf32>
    %54 = vector.broadcast %51 : vector<1x128xf32> to vector<128x128xf32>
    %55 = arith.mulf %32, %54 : vector<128x128xf32>
    %56 = vector.broadcast %53 : vector<1x128xf32> to vector<128x128xf32>
    %57 = arith.addf %55, %56 : vector<128x128xf32>
    %cst_23 = arith.constant 0.000000e+00 : f32
    %58 = vector.broadcast %cst_23 : f32 to vector<128x128xf32>
    %59 = arith.maximumf %57, %58 : vector<128x128xf32>
    %c1 = arith.constant 1 : index
    %c0_24 = arith.constant 0 : index
    %c0_25 = arith.constant 0 : index
    %60 = vector.load %arg5[%c1, %c0_24, %c0_25] : memref<5x8x128xf32, #tpu.memory_space<vmem>>, vector<1x8x128xf32>
    %61 = vector.shape_cast %60 : vector<1x8x128xf32> to vector<8x128xf32>
    %62 = vector.extract_strided_slice %61 {offsets = [0, 0], sizes = [1, 128], strides = [1, 1]} : vector<8x128xf32> to vector<1x128xf32>
    %63 = vector.extract_strided_slice %61 {offsets = [1, 0], sizes = [1, 128], strides = [1, 1]} : vector<8x128xf32> to vector<1x128xf32>
    %64 = vector.extract_strided_slice %61 {offsets = [2, 0], sizes = [1, 128], strides = [1, 1]} : vector<8x128xf32> to vector<1x128xf32>
    %65 = vector.extract_strided_slice %61 {offsets = [3, 0], sizes = [1, 128], strides = [1, 1]} : vector<8x128xf32> to vector<1x128xf32>
    %66 = arith.truncf %59 : vector<128x128xf32> to vector<128x128xbf16>
    %cst_26 = arith.constant dense<0.000000e+00> : vector<128x128xf32>
    %67 = tpu.matmul %0, %66, %cst_26 {dimension_numbers = #tpu.dot_dimension_numbers<[1], [0], [0], [1], [0, 0, 1, 1], [], []>} : vector<128x128xbf16>, vector<128x128xbf16>, vector<128x128xf32> -> vector<128x128xf32>
    %c1_27 = arith.constant 1 : index
    %c0_28 = arith.constant 0 : index
    %c0_29 = arith.constant 0 : index
    %68 = vector.load %arg2[%c1_27, %c0_28, %c0_29] : memref<5x128x128xbf16, #tpu.memory_space<vmem>>, vector<1x128x128xbf16>
    %69 = vector.shape_cast %68 : vector<1x128x128xbf16> to vector<128x128xbf16>
    %70 = arith.extf %69 : vector<128x128xbf16> to vector<128x128xf32>
    %71 = arith.addf %67, %70 : vector<128x128xf32>
    %72 = arith.truncf %71 : vector<128x128xf32> to vector<128x128xbf16>
    %c1_30 = arith.constant 1 : index
    %c0_31 = arith.constant 0 : index
    %c0_32 = arith.constant 0 : index
    %73 = vector.load %arg3[%c1_30, %c0_31, %c0_32] : memref<5x128x128xbf16, #tpu.memory_space<vmem>>, vector<1x128x128xbf16>
    %74 = vector.shape_cast %73 : vector<1x128x128xbf16> to vector<128x128xbf16>
    %cst_33 = arith.constant dense<0.000000e+00> : vector<128x128xf32>
    %75 = tpu.matmul %72, %74, %cst_33 {dimension_numbers = #tpu.dot_dimension_numbers<[1], [0], [0], [1], [0, 0, 1, 1], [], []>} : vector<128x128xbf16>, vector<128x128xbf16>, vector<128x128xf32> -> vector<128x128xf32>
    %76 = vector.broadcast %62 : vector<1x128xf32> to vector<128x128xf32>
    %77 = arith.addf %75, %76 : vector<128x128xf32>
    %cst_34 = arith.constant 0.000000e+00 : f32
    %78 = vector.broadcast %cst_34 : f32 to vector<128x128xf32>
    %79 = arith.maximumf %77, %78 : vector<128x128xf32>
    %80 = arith.truncf %79 : vector<128x128xf32> to vector<128x128xbf16>
    %c1_35 = arith.constant 1 : index
    %c0_36 = arith.constant 0 : index
    %c0_37 = arith.constant 0 : index
    %81 = vector.load %arg4[%c1_35, %c0_36, %c0_37] : memref<5x128x128xbf16, #tpu.memory_space<vmem>>, vector<1x128x128xbf16>
    %82 = vector.shape_cast %81 : vector<1x128x128xbf16> to vector<128x128xbf16>
    %cst_38 = arith.constant dense<0.000000e+00> : vector<128x128xf32>
    %83 = tpu.matmul %80, %82, %cst_38 {dimension_numbers = #tpu.dot_dimension_numbers<[1], [0], [0], [1], [0, 0, 1, 1], [], []>} : vector<128x128xbf16>, vector<128x128xbf16>, vector<128x128xf32> -> vector<128x128xf32>
    %84 = vector.broadcast %63 : vector<1x128xf32> to vector<128x128xf32>
    %85 = arith.addf %83, %84 : vector<128x128xf32>
    %86 = vector.broadcast %6 : vector<128x1xf32> to vector<128x128xf32>
    %87 = arith.mulf %85, %86 : vector<128x128xf32>
    %cst_39 = arith.constant dense<0.000000e+00> : vector<128xf32>
    %88 = vector.multi_reduction <add>, %87, %cst_39 [0] : vector<128x128xf32> to vector<128xf32>
    %89 = vector.shape_cast %88 : vector<128xf32> to vector<1x128xf32>
    %cst_40 = arith.constant 6.250000e-02 : f32
    %90 = vector.broadcast %cst_40 : f32 to vector<1x128xf32>
    %91 = arith.mulf %89, %90 : vector<1x128xf32>
    %92 = vector.broadcast %91 : vector<1x128xf32> to vector<128x128xf32>
    %93 = arith.subf %85, %92 : vector<128x128xf32>
    %94 = vector.broadcast %6 : vector<128x1xf32> to vector<128x128xf32>
    %95 = arith.mulf %93, %94 : vector<128x128xf32>
    %96 = arith.mulf %95, %95 : vector<128x128xf32>
    %cst_41 = arith.constant dense<0.000000e+00> : vector<128xf32>
    %97 = vector.multi_reduction <add>, %96, %cst_41 [0] : vector<128x128xf32> to vector<128xf32>
    %98 = vector.shape_cast %97 : vector<128xf32> to vector<1x128xf32>
    %cst_42 = arith.constant 6.250000e-02 : f32
    %99 = vector.broadcast %cst_42 : f32 to vector<1x128xf32>
    %100 = arith.mulf %98, %99 : vector<1x128xf32>
    %cst_43 = arith.constant 9.99999974E-6 : f32
    %101 = vector.broadcast %cst_43 : f32 to vector<1x128xf32>
    %102 = arith.addf %100, %101 : vector<1x128xf32>
    %103 = math.rsqrt %102 : vector<1x128xf32>
    %104 = arith.mulf %64, %103 : vector<1x128xf32>
    %105 = arith.mulf %91, %104 : vector<1x128xf32>
    %106 = arith.subf %65, %105 : vector<1x128xf32>
    %107 = vector.broadcast %104 : vector<1x128xf32> to vector<128x128xf32>
    %108 = arith.mulf %85, %107 : vector<128x128xf32>
    %109 = vector.broadcast %106 : vector<1x128xf32> to vector<128x128xf32>
    %110 = arith.addf %108, %109 : vector<128x128xf32>
    %cst_44 = arith.constant 0.000000e+00 : f32
    %111 = vector.broadcast %cst_44 : f32 to vector<128x128xf32>
    %112 = arith.maximumf %110, %111 : vector<128x128xf32>
    %c2 = arith.constant 2 : index
    %c0_45 = arith.constant 0 : index
    %c0_46 = arith.constant 0 : index
    %113 = vector.load %arg5[%c2, %c0_45, %c0_46] : memref<5x8x128xf32, #tpu.memory_space<vmem>>, vector<1x8x128xf32>
    %114 = vector.shape_cast %113 : vector<1x8x128xf32> to vector<8x128xf32>
    %115 = vector.extract_strided_slice %114 {offsets = [0, 0], sizes = [1, 128], strides = [1, 1]} : vector<8x128xf32> to vector<1x128xf32>
    %116 = vector.extract_strided_slice %114 {offsets = [1, 0], sizes = [1, 128], strides = [1, 1]} : vector<8x128xf32> to vector<1x128xf32>
    %117 = vector.extract_strided_slice %114 {offsets = [2, 0], sizes = [1, 128], strides = [1, 1]} : vector<8x128xf32> to vector<1x128xf32>
    %118 = vector.extract_strided_slice %114 {offsets = [3, 0], sizes = [1, 128], strides = [1, 1]} : vector<8x128xf32> to vector<1x128xf32>
    %119 = arith.truncf %112 : vector<128x128xf32> to vector<128x128xbf16>
    %cst_47 = arith.constant dense<0.000000e+00> : vector<128x128xf32>
    %120 = tpu.matmul %0, %119, %cst_47 {dimension_numbers = #tpu.dot_dimension_numbers<[1], [0], [0], [1], [0, 0, 1, 1], [], []>} : vector<128x128xbf16>, vector<128x128xbf16>, vector<128x128xf32> -> vector<128x128xf32>
    %c2_48 = arith.constant 2 : index
    %c0_49 = arith.constant 0 : index
    %c0_50 = arith.constant 0 : index
    %121 = vector.load %arg2[%c2_48, %c0_49, %c0_50] : memref<5x128x128xbf16, #tpu.memory_space<vmem>>, vector<1x128x128xbf16>
    %122 = vector.shape_cast %121 : vector<1x128x128xbf16> to vector<128x128xbf16>
    %123 = arith.extf %122 : vector<128x128xbf16> to vector<128x128xf32>
    %124 = arith.addf %120, %123 : vector<128x128xf32>
    %125 = arith.truncf %124 : vector<128x128xf32> to vector<128x128xbf16>
    %c2_51 = arith.constant 2 : index
    %c0_52 = arith.constant 0 : index
    %c0_53 = arith.constant 0 : index
    %126 = vector.load %arg3[%c2_51, %c0_52, %c0_53] : memref<5x128x128xbf16, #tpu.memory_space<vmem>>, vector<1x128x128xbf16>
    %127 = vector.shape_cast %126 : vector<1x128x128xbf16> to vector<128x128xbf16>
    %cst_54 = arith.constant dense<0.000000e+00> : vector<128x128xf32>
    %128 = tpu.matmul %125, %127, %cst_54 {dimension_numbers = #tpu.dot_dimension_numbers<[1], [0], [0], [1], [0, 0, 1, 1], [], []>} : vector<128x128xbf16>, vector<128x128xbf16>, vector<128x128xf32> -> vector<128x128xf32>
    %129 = vector.broadcast %115 : vector<1x128xf32> to vector<128x128xf32>
    %130 = arith.addf %128, %129 : vector<128x128xf32>
    %cst_55 = arith.constant 0.000000e+00 : f32
    %131 = vector.broadcast %cst_55 : f32 to vector<128x128xf32>
    %132 = arith.maximumf %130, %131 : vector<128x128xf32>
    %133 = arith.truncf %132 : vector<128x128xf32> to vector<128x128xbf16>
    %c2_56 = arith.constant 2 : index
    %c0_57 = arith.constant 0 : index
    %c0_58 = arith.constant 0 : index
    %134 = vector.load %arg4[%c2_56, %c0_57, %c0_58] : memref<5x128x128xbf16, #tpu.memory_space<vmem>>, vector<1x128x128xbf16>
    %135 = vector.shape_cast %134 : vector<1x128x128xbf16> to vector<128x128xbf16>
    %cst_59 = arith.constant dense<0.000000e+00> : vector<128x128xf32>
    %136 = tpu.matmul %133, %135, %cst_59 {dimension_numbers = #tpu.dot_dimension_numbers<[1], [0], [0], [1], [0, 0, 1, 1], [], []>} : vector<128x128xbf16>, vector<128x128xbf16>, vector<128x128xf32> -> vector<128x128xf32>
    %137 = vector.broadcast %116 : vector<1x128xf32> to vector<128x128xf32>
    %138 = arith.addf %136, %137 : vector<128x128xf32>
    %139 = vector.broadcast %6 : vector<128x1xf32> to vector<128x128xf32>
    %140 = arith.mulf %138, %139 : vector<128x128xf32>
    %cst_60 = arith.constant dense<0.000000e+00> : vector<128xf32>
    %141 = vector.multi_reduction <add>, %140, %cst_60 [0] : vector<128x128xf32> to vector<128xf32>
    %142 = vector.shape_cast %141 : vector<128xf32> to vector<1x128xf32>
    %cst_61 = arith.constant 6.250000e-02 : f32
    %143 = vector.broadcast %cst_61 : f32 to vector<1x128xf32>
    %144 = arith.mulf %142, %143 : vector<1x128xf32>
    %145 = vector.broadcast %144 : vector<1x128xf32> to vector<128x128xf32>
    %146 = arith.subf %138, %145 : vector<128x128xf32>
    %147 = vector.broadcast %6 : vector<128x1xf32> to vector<128x128xf32>
    %148 = arith.mulf %146, %147 : vector<128x128xf32>
    %149 = arith.mulf %148, %148 : vector<128x128xf32>
    %cst_62 = arith.constant dense<0.000000e+00> : vector<128xf32>
    %150 = vector.multi_reduction <add>, %149, %cst_62 [0] : vector<128x128xf32> to vector<128xf32>
    %151 = vector.shape_cast %150 : vector<128xf32> to vector<1x128xf32>
    %cst_63 = arith.constant 6.250000e-02 : f32
    %152 = vector.broadcast %cst_63 : f32 to vector<1x128xf32>
    %153 = arith.mulf %151, %152 : vector<1x128xf32>
    %cst_64 = arith.constant 9.99999974E-6 : f32
    %154 = vector.broadcast %cst_64 : f32 to vector<1x128xf32>
    %155 = arith.addf %153, %154 : vector<1x128xf32>
    %156 = math.rsqrt %155 : vector<1x128xf32>
    %157 = arith.mulf %117, %156 : vector<1x128xf32>
    %158 = arith.mulf %144, %157 : vector<1x128xf32>
    %159 = arith.subf %118, %158 : vector<1x128xf32>
    %160 = vector.broadcast %157 : vector<1x128xf32> to vector<128x128xf32>
    %161 = arith.mulf %138, %160 : vector<128x128xf32>
    %162 = vector.broadcast %159 : vector<1x128xf32> to vector<128x128xf32>
    %163 = arith.addf %161, %162 : vector<128x128xf32>
    %cst_65 = arith.constant 0.000000e+00 : f32
    %164 = vector.broadcast %cst_65 : f32 to vector<128x128xf32>
    %165 = arith.maximumf %163, %164 : vector<128x128xf32>
    %c3 = arith.constant 3 : index
    %c0_66 = arith.constant 0 : index
    %c0_67 = arith.constant 0 : index
    %166 = vector.load %arg5[%c3, %c0_66, %c0_67] : memref<5x8x128xf32, #tpu.memory_space<vmem>>, vector<1x8x128xf32>
    %167 = vector.shape_cast %166 : vector<1x8x128xf32> to vector<8x128xf32>
    %168 = vector.extract_strided_slice %167 {offsets = [0, 0], sizes = [1, 128], strides = [1, 1]} : vector<8x128xf32> to vector<1x128xf32>
    %169 = vector.extract_strided_slice %167 {offsets = [1, 0], sizes = [1, 128], strides = [1, 1]} : vector<8x128xf32> to vector<1x128xf32>
    %170 = vector.extract_strided_slice %167 {offsets = [2, 0], sizes = [1, 128], strides = [1, 1]} : vector<8x128xf32> to vector<1x128xf32>
    %171 = vector.extract_strided_slice %167 {offsets = [3, 0], sizes = [1, 128], strides = [1, 1]} : vector<8x128xf32> to vector<1x128xf32>
    %172 = arith.truncf %165 : vector<128x128xf32> to vector<128x128xbf16>
    %cst_68 = arith.constant dense<0.000000e+00> : vector<128x128xf32>
    %173 = tpu.matmul %0, %172, %cst_68 {dimension_numbers = #tpu.dot_dimension_numbers<[1], [0], [0], [1], [0, 0, 1, 1], [], []>} : vector<128x128xbf16>, vector<128x128xbf16>, vector<128x128xf32> -> vector<128x128xf32>
    %c3_69 = arith.constant 3 : index
    %c0_70 = arith.constant 0 : index
    %c0_71 = arith.constant 0 : index
    %174 = vector.load %arg2[%c3_69, %c0_70, %c0_71] : memref<5x128x128xbf16, #tpu.memory_space<vmem>>, vector<1x128x128xbf16>
    %175 = vector.shape_cast %174 : vector<1x128x128xbf16> to vector<128x128xbf16>
    %176 = arith.extf %175 : vector<128x128xbf16> to vector<128x128xf32>
    %177 = arith.addf %173, %176 : vector<128x128xf32>
    %178 = arith.truncf %177 : vector<128x128xf32> to vector<128x128xbf16>
    %c3_72 = arith.constant 3 : index
    %c0_73 = arith.constant 0 : index
    %c0_74 = arith.constant 0 : index
    %179 = vector.load %arg3[%c3_72, %c0_73, %c0_74] : memref<5x128x128xbf16, #tpu.memory_space<vmem>>, vector<1x128x128xbf16>
    %180 = vector.shape_cast %179 : vector<1x128x128xbf16> to vector<128x128xbf16>
    %cst_75 = arith.constant dense<0.000000e+00> : vector<128x128xf32>
    %181 = tpu.matmul %178, %180, %cst_75 {dimension_numbers = #tpu.dot_dimension_numbers<[1], [0], [0], [1], [0, 0, 1, 1], [], []>} : vector<128x128xbf16>, vector<128x128xbf16>, vector<128x128xf32> -> vector<128x128xf32>
    %182 = vector.broadcast %168 : vector<1x128xf32> to vector<128x128xf32>
    %183 = arith.addf %181, %182 : vector<128x128xf32>
    %cst_76 = arith.constant 0.000000e+00 : f32
    %184 = vector.broadcast %cst_76 : f32 to vector<128x128xf32>
    %185 = arith.maximumf %183, %184 : vector<128x128xf32>
    %186 = arith.truncf %185 : vector<128x128xf32> to vector<128x128xbf16>
    %c3_77 = arith.constant 3 : index
    %c0_78 = arith.constant 0 : index
    %c0_79 = arith.constant 0 : index
    %187 = vector.load %arg4[%c3_77, %c0_78, %c0_79] : memref<5x128x128xbf16, #tpu.memory_space<vmem>>, vector<1x128x128xbf16>
    %188 = vector.shape_cast %187 : vector<1x128x128xbf16> to vector<128x128xbf16>
    %cst_80 = arith.constant dense<0.000000e+00> : vector<128x128xf32>
    %189 = tpu.matmul %186, %188, %cst_80 {dimension_numbers = #tpu.dot_dimension_numbers<[1], [0], [0], [1], [0, 0, 1, 1], [], []>} : vector<128x128xbf16>, vector<128x128xbf16>, vector<128x128xf32> -> vector<128x128xf32>
    %190 = vector.broadcast %169 : vector<1x128xf32> to vector<128x128xf32>
    %191 = arith.addf %189, %190 : vector<128x128xf32>
    %192 = vector.broadcast %6 : vector<128x1xf32> to vector<128x128xf32>
    %193 = arith.mulf %191, %192 : vector<128x128xf32>
    %cst_81 = arith.constant dense<0.000000e+00> : vector<128xf32>
    %194 = vector.multi_reduction <add>, %193, %cst_81 [0] : vector<128x128xf32> to vector<128xf32>
    %195 = vector.shape_cast %194 : vector<128xf32> to vector<1x128xf32>
    %cst_82 = arith.constant 6.250000e-02 : f32
    %196 = vector.broadcast %cst_82 : f32 to vector<1x128xf32>
    %197 = arith.mulf %195, %196 : vector<1x128xf32>
    %198 = vector.broadcast %197 : vector<1x128xf32> to vector<128x128xf32>
    %199 = arith.subf %191, %198 : vector<128x128xf32>
    %200 = vector.broadcast %6 : vector<128x1xf32> to vector<128x128xf32>
    %201 = arith.mulf %199, %200 : vector<128x128xf32>
    %202 = arith.mulf %201, %201 : vector<128x128xf32>
    %cst_83 = arith.constant dense<0.000000e+00> : vector<128xf32>
    %203 = vector.multi_reduction <add>, %202, %cst_83 [0] : vector<128x128xf32> to vector<128xf32>
    %204 = vector.shape_cast %203 : vector<128xf32> to vector<1x128xf32>
    %cst_84 = arith.constant 6.250000e-02 : f32
    %205 = vector.broadcast %cst_84 : f32 to vector<1x128xf32>
    %206 = arith.mulf %204, %205 : vector<1x128xf32>
    %cst_85 = arith.constant 9.99999974E-6 : f32
    %207 = vector.broadcast %cst_85 : f32 to vector<1x128xf32>
    %208 = arith.addf %206, %207 : vector<1x128xf32>
    %209 = math.rsqrt %208 : vector<1x128xf32>
    %210 = arith.mulf %170, %209 : vector<1x128xf32>
    %211 = arith.mulf %197, %210 : vector<1x128xf32>
    %212 = arith.subf %171, %211 : vector<1x128xf32>
    %213 = vector.broadcast %210 : vector<1x128xf32> to vector<128x128xf32>
    %214 = arith.mulf %191, %213 : vector<128x128xf32>
    %215 = vector.broadcast %212 : vector<1x128xf32> to vector<128x128xf32>
    %216 = arith.addf %214, %215 : vector<128x128xf32>
    %cst_86 = arith.constant 0.000000e+00 : f32
    %217 = vector.broadcast %cst_86 : f32 to vector<128x128xf32>
    %218 = arith.maximumf %216, %217 : vector<128x128xf32>
    %c4 = arith.constant 4 : index
    %c0_87 = arith.constant 0 : index
    %c0_88 = arith.constant 0 : index
    %219 = vector.load %arg5[%c4, %c0_87, %c0_88] : memref<5x8x128xf32, #tpu.memory_space<vmem>>, vector<1x8x128xf32>
    %220 = vector.shape_cast %219 : vector<1x8x128xf32> to vector<8x128xf32>
    %221 = vector.extract_strided_slice %220 {offsets = [0, 0], sizes = [1, 128], strides = [1, 1]} : vector<8x128xf32> to vector<1x128xf32>
    %222 = vector.extract_strided_slice %220 {offsets = [1, 0], sizes = [1, 128], strides = [1, 1]} : vector<8x128xf32> to vector<1x128xf32>
    %223 = vector.extract_strided_slice %220 {offsets = [2, 0], sizes = [1, 128], strides = [1, 1]} : vector<8x128xf32> to vector<1x128xf32>
    %224 = vector.extract_strided_slice %220 {offsets = [3, 0], sizes = [1, 128], strides = [1, 1]} : vector<8x128xf32> to vector<1x128xf32>
    %225 = arith.truncf %218 : vector<128x128xf32> to vector<128x128xbf16>
    %cst_89 = arith.constant dense<0.000000e+00> : vector<128x128xf32>
    %226 = tpu.matmul %0, %225, %cst_89 {dimension_numbers = #tpu.dot_dimension_numbers<[1], [0], [0], [1], [0, 0, 1, 1], [], []>} : vector<128x128xbf16>, vector<128x128xbf16>, vector<128x128xf32> -> vector<128x128xf32>
    %c4_90 = arith.constant 4 : index
    %c0_91 = arith.constant 0 : index
    %c0_92 = arith.constant 0 : index
    %227 = vector.load %arg2[%c4_90, %c0_91, %c0_92] : memref<5x128x128xbf16, #tpu.memory_space<vmem>>, vector<1x128x128xbf16>
    %228 = vector.shape_cast %227 : vector<1x128x128xbf16> to vector<128x128xbf16>
    %229 = arith.extf %228 : vector<128x128xbf16> to vector<128x128xf32>
    %230 = arith.addf %226, %229 : vector<128x128xf32>
    %231 = arith.truncf %230 : vector<128x128xf32> to vector<128x128xbf16>
    %c4_93 = arith.constant 4 : index
    %c0_94 = arith.constant 0 : index
    %c0_95 = arith.constant 0 : index
    %232 = vector.load %arg3[%c4_93, %c0_94, %c0_95] : memref<5x128x128xbf16, #tpu.memory_space<vmem>>, vector<1x128x128xbf16>
    %233 = vector.shape_cast %232 : vector<1x128x128xbf16> to vector<128x128xbf16>
    %cst_96 = arith.constant dense<0.000000e+00> : vector<128x128xf32>
    %234 = tpu.matmul %231, %233, %cst_96 {dimension_numbers = #tpu.dot_dimension_numbers<[1], [0], [0], [1], [0, 0, 1, 1], [], []>} : vector<128x128xbf16>, vector<128x128xbf16>, vector<128x128xf32> -> vector<128x128xf32>
    %235 = vector.broadcast %221 : vector<1x128xf32> to vector<128x128xf32>
    %236 = arith.addf %234, %235 : vector<128x128xf32>
    %cst_97 = arith.constant 0.000000e+00 : f32
    %237 = vector.broadcast %cst_97 : f32 to vector<128x128xf32>
    %238 = arith.maximumf %236, %237 : vector<128x128xf32>
    %239 = arith.truncf %238 : vector<128x128xf32> to vector<128x128xbf16>
    %c4_98 = arith.constant 4 : index
    %c0_99 = arith.constant 0 : index
    %c0_100 = arith.constant 0 : index
    %240 = vector.load %arg4[%c4_98, %c0_99, %c0_100] : memref<5x128x128xbf16, #tpu.memory_space<vmem>>, vector<1x128x128xbf16>
    %241 = vector.shape_cast %240 : vector<1x128x128xbf16> to vector<128x128xbf16>
    %cst_101 = arith.constant dense<0.000000e+00> : vector<128x128xf32>
    %242 = tpu.matmul %239, %241, %cst_101 {dimension_numbers = #tpu.dot_dimension_numbers<[1], [0], [0], [1], [0, 0, 1, 1], [], []>} : vector<128x128xbf16>, vector<128x128xbf16>, vector<128x128xf32> -> vector<128x128xf32>
    %243 = vector.broadcast %222 : vector<1x128xf32> to vector<128x128xf32>
    %244 = arith.addf %242, %243 : vector<128x128xf32>
    %245 = vector.broadcast %6 : vector<128x1xf32> to vector<128x128xf32>
    %246 = arith.mulf %244, %245 : vector<128x128xf32>
    %cst_102 = arith.constant dense<0.000000e+00> : vector<128xf32>
    %247 = vector.multi_reduction <add>, %246, %cst_102 [0] : vector<128x128xf32> to vector<128xf32>
    %248 = vector.shape_cast %247 : vector<128xf32> to vector<1x128xf32>
    %cst_103 = arith.constant 6.250000e-02 : f32
    %249 = vector.broadcast %cst_103 : f32 to vector<1x128xf32>
    %250 = arith.mulf %248, %249 : vector<1x128xf32>
    %251 = vector.broadcast %250 : vector<1x128xf32> to vector<128x128xf32>
    %252 = arith.subf %244, %251 : vector<128x128xf32>
    %253 = vector.broadcast %6 : vector<128x1xf32> to vector<128x128xf32>
    %254 = arith.mulf %252, %253 : vector<128x128xf32>
    %255 = arith.mulf %254, %254 : vector<128x128xf32>
    %cst_104 = arith.constant dense<0.000000e+00> : vector<128xf32>
    %256 = vector.multi_reduction <add>, %255, %cst_104 [0] : vector<128x128xf32> to vector<128xf32>
    %257 = vector.shape_cast %256 : vector<128xf32> to vector<1x128xf32>
    %cst_105 = arith.constant 6.250000e-02 : f32
    %258 = vector.broadcast %cst_105 : f32 to vector<1x128xf32>
    %259 = arith.mulf %257, %258 : vector<1x128xf32>
    %cst_106 = arith.constant 9.99999974E-6 : f32
    %260 = vector.broadcast %cst_106 : f32 to vector<1x128xf32>
    %261 = arith.addf %259, %260 : vector<1x128xf32>
    %262 = math.rsqrt %261 : vector<1x128xf32>
    %263 = arith.mulf %223, %262 : vector<1x128xf32>
    %264 = arith.mulf %250, %263 : vector<1x128xf32>
    %265 = arith.subf %224, %264 : vector<1x128xf32>
    %266 = vector.broadcast %263 : vector<1x128xf32> to vector<128x128xf32>
    %267 = arith.mulf %244, %266 : vector<128x128xf32>
    %268 = vector.broadcast %265 : vector<1x128xf32> to vector<128x128xf32>
    %269 = arith.addf %267, %268 : vector<128x128xf32>
    %c0_107 = arith.constant 0 : index
    %c0_108 = arith.constant 0 : index
    %270 = vector.load %arg6[%c0_107, %c0_108] : memref<128x128xf32, #tpu.memory_space<vmem>>, vector<128x128xf32>
    tpu.vector_store %arg6[%c0_107, %c0_108], %269 {strides = array<i32>} : memref<128x128xf32, #tpu.memory_space<vmem>>, vector<128x128xf32>,
    return
  }
}

</mosaic_0001>

<llo_original>
// kernel: gnn_forward.1
$region0: #{gnn_forward.1}
  #allocation0 [shape = 'u32[]', space=smem, size = 0x4, offset = 0x4, fixed_abs, tag = 'smem constant byte address 0x4 - core index']
  #allocation1 [shape = 'u32[72,128]{1,0:T(1,128)}', space=vmem, size = 0x9000, scoped, tag = 'internal scratch']
  %s0 = inlined_call_operand.vmem [shape: bf16[128,128], index: 0, kind: input, shape index: {}]
  %s1 = inlined_call_operand.vmem [shape: f32[128,128], index: 1, kind: input, shape index: {}]
  %s2 = inlined_call_operand.vmem [shape: bf16[5,128,128], index: 2, kind: input, shape index: {}]
  %s3 = inlined_call_operand.vmem [shape: bf16[5,128,128], index: 3, kind: input, shape index: {}]
  %s4 = inlined_call_operand.vmem [shape: bf16[5,128,128], index: 4, kind: input, shape index: {}]
  %s5 = inlined_call_operand.vmem [shape: f32[5,8,128], index: 5, kind: input, shape index: {}]
  %s6 = inlined_call_operand.vmem [shape: f32[128,128], index: 6, kind: output, shape index: {}]
  %s7 = sld [smem:[#allocation0]]
  $region34: #{gnn_forward.1} parent=0
    _
  %s9 = ssub.s32 1, %s7
  %s10 = scalar_select 0, %s9, %s7
  // Predicated region
  $region2: #{gnn_forward.1} parent=0 // pred_check
    _
  $region3: #{gnn_forward.1} parent=0 // pred_check_branch
    %12 = sbr.rel (0) target = $region5
  $region4: #{gnn_forward.1} parent=0 // pred_region
    _
  $region5: #{gnn_forward.1} parent=0 // pred_fallthru
    _
  // Predicated region
  $region6: #{gnn_forward.1} parent=0 // pred_check
    _
  $region7: #{gnn_forward.1} parent=0 // pred_check_branch
    %14 = sbr.rel (0) target = $region9
  $region8: #{gnn_forward.1} parent=0 // pred_region
    _
  $region9: #{gnn_forward.1} parent=0 // pred_fallthru
    _
  // Predicated region
  $region10: #{gnn_forward.1} parent=0 // pred_check
    _
  $region11: #{gnn_forward.1} parent=0 // pred_check_branch
    %16 = sbr.rel (0) target = $region13
  $region12: #{gnn_forward.1} parent=0 // pred_region
    _
  $region13: #{gnn_forward.1} parent=0 // pred_fallthru
    _
  // Predicated region
  $region14: #{gnn_forward.1} parent=0 // pred_check
    _
  $region15: #{gnn_forward.1} parent=0 // pred_check_branch
    %18 = sbr.rel (0) target = $region17
  $region16: #{gnn_forward.1} parent=0 // pred_region
    _
  $region17: #{gnn_forward.1} parent=0 // pred_fallthru
    _
  // Predicated region
  $region18: #{gnn_forward.1} parent=0 // pred_check
    _
  $region19: #{gnn_forward.1} parent=0 // pred_check_branch
    %20 = sbr.rel (0) target = $region21
  $region20: #{gnn_forward.1} parent=0 // pred_region
    _
  $region21: #{gnn_forward.1} parent=0 // pred_fallthru
    _
  // Predicated region
  $region22: #{gnn_forward.1} parent=0 // pred_check
    _
  $region23: #{gnn_forward.1} parent=0 // pred_check_branch
    %22 = sbr.rel (0) target = $region25
  $region24: #{gnn_forward.1} parent=0 // pred_region
    _
  $region25: #{gnn_forward.1} parent=0 // pred_fallthru
    _
  %v23 = vld [vmem:[%s0] sm:$0xf]
  %v24 = vld [vmem:[%s0 + $0x4] sm:$0xf]
  %v25 = vld [vmem:[%s0 + $0x8] sm:$0xf]
  %v26 = vld [vmem:[%s0 + $0xc] sm:$0xf]
  %v27 = vld [vmem:[%s0 + $0x10] sm:$0xf]
  %v28 = vld [vmem:[%s0 + $0x14] sm:$0xf]
  %v29 = vld [vmem:[%s0 + $0x18] sm:$0xf]
  %v30 = vld [vmem:[%s0 + $0x1c] sm:$0xf]
  %v31 = vld [vmem:[%s0 + $0x20] sm:$0xf]
  %v32 = vld [vmem:[%s0 + $0x24] sm:$0xf]
  %v33 = vld [vmem:[%s0 + $0x28] sm:$0xf]
  %v34 = vld [vmem:[%s0 + $0x2c] sm:$0xf]
  %v35 = vld [vmem:[%s0 + $0x30] sm:$0xf]
  %v36 = vld [vmem:[%s0 + $0x34] sm:$0xf]
  %v37 = vld [vmem:[%s0 + $0x38] sm:$0xf]
  %v38 = vld [vmem:[%s0 + $0x3c] sm:$0xf]
  %v39 = vld [vmem:[%s1] sm:$0xff]
  %v40 = vld [vmem:[%s1 + $0x8] sm:$0xff]
  %v41 = vld [vmem:[%s1 + $0x10] sm:$0xff]
  %v42 = vld [vmem:[%s1 + $0x18] sm:$0xff]
  %v43 = vld [vmem:[%s1 + $0x20] sm:$0xff]
  %v44 = vld [vmem:[%s1 + $0x28] sm:$0xff]
  %v45 = vld [vmem:[%s1 + $0x30] sm:$0xff]
  %v46 = vld [vmem:[%s1 + $0x38] sm:$0xff]
  %v47 = vld [vmem:[%s1 + $0x40] sm:$0xff]
  %v48 = vld [vmem:[%s1 + $0x48] sm:$0xff]
  %v49 = vld [vmem:[%s1 + $0x50] sm:$0xff]
  %v50 = vld [vmem:[%s1 + $0x58] sm:$0xff]
  %v51 = vld [vmem:[%s1 + $0x60] sm:$0xff]
  %v52 = vld [vmem:[%s1 + $0x68] sm:$0xff]
  %v53 = vld [vmem:[%s1 + $0x70] sm:$0xff]
  %v54 = vld [vmem:[%s1 + $0x78] sm:$0xff]
  %v55 = vlaneseq
  %v56 = vshrl.u32 %v55, 7
  %v57 = vadd.s32 %v56, 8
  %v58 = vadd.s32 %v56, 16
  %v59 = vadd.s32 %v56, 24
  %v60 = vadd.s32 %v56, 32
  %v61 = vadd.s32 %v56, 40
  %v62 = vadd.s32 %v56, 48
  %v63 = vadd.s32 %v56, 56
  %v64 = vadd.s32 %v56, 64
  %v65 = vadd.s32 %v56, 72
  %v66 = vadd.s32 %v56, 80
  %v67 = vadd.s32 %v56, 88
  %v68 = vadd.s32 %v56, 96
  %v69 = vadd.s32 %v56, 104
  %v70 = vadd.s32 %v56, 112
  %v71 = vadd.s32 %v56, 120
  %vm72 = vcmp.lt.s32.totalorder %v56, 16
  %vm73 = vcmp.lt.s32.totalorder %v57, 16
  %vm74 = vcmp.lt.s32.totalorder %v58, 16
  %vm75 = vcmp.lt.s32.totalorder %v59, 16
  %vm76 = vcmp.lt.s32.totalorder %v60, 16
  %vm77 = vcmp.lt.s32.totalorder %v61, 16
  %vm78 = vcmp.lt.s32.totalorder %v62, 16
  %vm79 = vcmp.lt.s32.totalorder %v63, 16
  %vm80 = vcmp.lt.s32.totalorder %v64, 16
  %vm81 = vcmp.lt.s32.totalorder %v65, 16
  %vm82 = vcmp.lt.s32.totalorder %v66, 16
  %vm83 = vcmp.lt.s32.totalorder %v67, 16
  %vm84 = vcmp.lt.s32.totalorder %v68, 16
  %vm85 = vcmp.lt.s32.totalorder %v69, 16
  %vm86 = vcmp.lt.s32.totalorder %v70, 16
  %vm87 = vcmp.lt.s32.totalorder %v71, 16
  %v88 = vsel %vm72, 1, 0
  %v89 = vsel %vm73, 1, 0
  %v90 = vsel %vm74, 1, 0
  %v91 = vsel %vm75, 1, 0
  %v92 = vsel %vm76, 1, 0
  %v93 = vsel %vm77, 1, 0
  %v94 = vsel %vm78, 1, 0
  %v95 = vsel %vm79, 1, 0
  %v96 = vsel %vm80, 1, 0
  %v97 = vsel %vm81, 1, 0
  %v98 = vsel %vm82, 1, 0
  %v99 = vsel %vm83, 1, 0
  %v100 = vsel %vm84, 1, 0
  %v101 = vsel %vm85, 1, 0
  %v102 = vsel %vm86, 1, 0
  %v103 = vsel %vm87, 1, 0
  %v104 = vcvt.s32.f32 %v88
  %v105 = vcvt.s32.f32 %v89
  %v106 = vcvt.s32.f32 %v90
  %v107 = vcvt.s32.f32 %v91
  %v108 = vcvt.s32.f32 %v92
  %v109 = vcvt.s32.f32 %v93
  %v110 = vcvt.s32.f32 %v94
  %v111 = vcvt.s32.f32 %v95
  %v112 = vcvt.s32.f32 %v96
  %v113 = vcvt.s32.f32 %v97
  %v114 = vcvt.s32.f32 %v98
  %v115 = vcvt.s32.f32 %v99
  %v116 = vcvt.s32.f32 %v100
  %v117 = vcvt.s32.f32 %v101
  %v118 = vcvt.s32.f32 %v102
  %v119 = vcvt.s32.f32 %v103
  %v120 = vld [vmem:[%s5] sm:$0xff]
  %v121 = vpack.c.bf16 %v40, %v39
  %v122 = vpack.c.bf16 %v42, %v41
  %v123 = vpack.c.bf16 %v44, %v43
  %v124 = vpack.c.bf16 %v46, %v45
  %v125 = vpack.c.bf16 %v48, %v47
  %v126 = vpack.c.bf16 %v50, %v49
  %v127 = vpack.c.bf16 %v52, %v51
  %v128 = vpack.c.bf16 %v54, %v53
  %v129 = vld [vmem:[%s2] sm:$0xf]
  %v130 = vld [vmem:[%s2 + $0x4] sm:$0xf]
  %v131 = vld [vmem:[%s2 + $0x8] sm:$0xf]
  %v132 = vld [vmem:[%s2 + $0xc] sm:$0xf]
  %v133 = vld [vmem:[%s2 + $0x10] sm:$0xf]
  %v134 = vld [vmem:[%s2 + $0x14] sm:$0xf]
  %v135 = vld [vmem:[%s2 + $0x18] sm:$0xf]
  %v136 = vld [vmem:[%s2 + $0x1c] sm:$0xf]
  %v137 = vld [vmem:[%s2 + $0x20] sm:$0xf]
  %v138 = vld [vmem:[%s2 + $0x24] sm:$0xf]
  %v139 = vld [vmem:[%s2 + $0x28] sm:$0xf]
  %v140 = vld [vmem:[%s2 + $0x2c] sm:$0xf]
  %v141 = vld [vmem:[%s2 + $0x30] sm:$0xf]
  %v142 = vld [vmem:[%s2 + $0x34] sm:$0xf]
  %v143 = vld [vmem:[%s2 + $0x38] sm:$0xf]
  %v144 = vld [vmem:[%s2 + $0x3c] sm:$0xf]
  %v145 = vunpack.c.l.bf16 %v129
  %v146 = vunpack.c.l.bf16 %v130
  %v147 = vunpack.c.l.bf16 %v131
  %v148 = vunpack.c.l.bf16 %v132
  %v149 = vunpack.c.l.bf16 %v133
  %v150 = vunpack.c.l.bf16 %v134
  %v151 = vunpack.c.l.bf16 %v135
  %v152 = vunpack.c.l.bf16 %v136
  %v153 = vunpack.c.l.bf16 %v137
  %v154 = vunpack.c.l.bf16 %v138
  %v155 = vunpack.c.l.bf16 %v139
  %v156 = vunpack.c.l.bf16 %v140
  %v157 = vunpack.c.l.bf16 %v141
  %v158 = vunpack.c.l.bf16 %v142
  %v159 = vunpack.c.l.bf16 %v143
  %v160 = vunpack.c.l.bf16 %v144
  %v177 = vunpack.c.l.b16 %v23
  %v178 = vunpack.c.l.b16 %v24
  %v179 = vunpack.c.l.b16 %v25
  %v180 = vunpack.c.l.b16 %v26
  %v181 = vunpack.c.l.b16 %v27
  %v182 = vunpack.c.l.b16 %v28
  %v183 = vunpack.c.l.b16 %v29
  %v184 = vunpack.c.l.b16 %v30
  %v185 = vunpack.c.l.b16 %v31
  %v186 = vunpack.c.l.b16 %v32
  %v187 = vunpack.c.l.b16 %v33
  %v188 = vunpack.c.l.b16 %v34
  %v189 = vunpack.c.l.b16 %v35
  %v190 = vunpack.c.l.b16 %v36
  %v191 = vunpack.c.l.b16 %v37
  %v192 = vunpack.c.l.b16 %v38
  %v193 = vpack.c.b16 %v178, %v177
  %v194 = vpack.c.b16 %v180, %v179
  %v195 = vpack.c.b16 %v182, %v181
  %v196 = vpack.c.b16 %v184, %v183
  %v197 = vpack.c.b16 %v186, %v185
  %v198 = vpack.c.b16 %v188, %v187
  %v199 = vpack.c.b16 %v190, %v189
  %v200 = vpack.c.b16 %v192, %v191
  %209 = vmatpush.bf16.msra.mxu0 %v128
  %210 = vmatpush.bf16.msra.mxu0 %v127
  %211 = vmatpush.bf16.msra.mxu0 %v126
  %212 = vmatpush.bf16.msra.mxu0 %v125
  %213 = vmatpush.bf16.msra.mxu0 %v124
  %214 = vmatpush.bf16.msra.mxu0 %v123
  %215 = vmatpush.bf16.msra.mxu0 %v122
  %216 = vmatpush.bf16.msra.mxu0 %v121
  %217 = vmatmul.bf16.gmra.mxu0 %v193
  %v218 = vpop.f32.mrf.mxu0
  %v219 = vadd.f32 %v145, %v218
  %v220 = vpop.f32.mrf.mxu0
  %v221 = vadd.f32 %v146, %v220
  %222 = vmatmul.bf16.gmra.mxu0 %v194
  %v223 = vpop.f32.mrf.mxu0
  %v224 = vadd.f32 %v147, %v223
  %v225 = vpop.f32.mrf.mxu0
  %v226 = vadd.f32 %v148, %v225
  %227 = vmatmul.bf16.gmra.mxu0 %v195
  %v228 = vpop.f32.mrf.mxu0
  %v229 = vadd.f32 %v149, %v228
  %v230 = vpop.f32.mrf.mxu0
  %v231 = vadd.f32 %v150, %v230
  %232 = vmatmul.bf16.gmra.mxu0 %v196
  %v233 = vpop.f32.mrf.mxu0
  %v234 = vadd.f32 %v151, %v233
  %v235 = vpop.f32.mrf.mxu0
  %v236 = vadd.f32 %v152, %v235
  %237 = vmatmul.bf16.gmra.mxu0 %v197
  %v238 = vpop.f32.mrf.mxu0
  %v239 = vadd.f32 %v153, %v238
  %v240 = vpop.f32.mrf.mxu0
  %v241 = vadd.f32 %v154, %v240
  %242 = vmatmul.bf16.gmra.mxu0 %v198
  %v243 = vpop.f32.mrf.mxu0
  %v244 = vadd.f32 %v155, %v243
  %v245 = vpop.f32.mrf.mxu0
  %v246 = vadd.f32 %v156, %v245
  %247 = vmatmul.bf16.gmra.mxu0 %v199
  %v248 = vpop.f32.mrf.mxu0
  %v249 = vadd.f32 %v157, %v248
  %v250 = vpop.f32.mrf.mxu0
  %v251 = vadd.f32 %v158, %v250
  %252 = vmatmul.bf16.gmra.mxu0 %v200
  %v253 = vpop.f32.mrf.mxu0
  %v254 = vadd.f32 %v159, %v253
  %v255 = vpop.f32.mrf.mxu0
  %v256 = vadd.f32 %v160, %v255
  %257 = vdwg.mxu0
  %v258 = vpack.c.bf16 %v221, %v219
  %v259 = vpack.c.bf16 %v226, %v224
  %v260 = vpack.c.bf16 %v231, %v229
  %v261 = vpack.c.bf16 %v236, %v234
  %v262 = vpack.c.bf16 %v241, %v239
  %v263 = vpack.c.bf16 %v246, %v244
  %v264 = vpack.c.bf16 %v251, %v249
  %v265 = vpack.c.bf16 %v256, %v254
  %v266 = vld [vmem:[%s3] sm:$0xf]
  %v267 = vld [vmem:[%s3 + $0x4] sm:$0xf]
  %v268 = vld [vmem:[%s3 + $0x8] sm:$0xf]
  %v269 = vld [vmem:[%s3 + $0xc] sm:$0xf]
  %v270 = vld [vmem:[%s3 + $0x10] sm:$0xf]
  %v271 = vld [vmem:[%s3 + $0x14] sm:$0xf]
  %v272 = vld [vmem:[%s3 + $0x18] sm:$0xf]
  %v273 = vld [vmem:[%s3 + $0x1c] sm:$0xf]
  %v274 = vld [vmem:[%s3 + $0x20] sm:$0xf]
  %v275 = vld [vmem:[%s3 + $0x24] sm:$0xf]
  %v276 = vld [vmem:[%s3 + $0x28] sm:$0xf]
  %v277 = vld [vmem:[%s3 + $0x2c] sm:$0xf]
  %v278 = vld [vmem:[%s3 + $0x30] sm:$0xf]
  %v279 = vld [vmem:[%s3 + $0x34] sm:$0xf]
  %v280 = vld [vmem:[%s3 + $0x38] sm:$0xf]
  %v281 = vld [vmem:[%s3 + $0x3c] sm:$0xf]
  %v282 = vperm.slane %v120, 0
  %v299 = vunpack.c.l.b16 %v266
  %v300 = vunpack.c.l.b16 %v267
  %v301 = vunpack.c.l.b16 %v268
  %v302 = vunpack.c.l.b16 %v269
  %v303 = vunpack.c.l.b16 %v270
  %v304 = vunpack.c.l.b16 %v271
  %v305 = vunpack.c.l.b16 %v272
  %v306 = vunpack.c.l.b16 %v273
  %v307 = vunpack.c.l.b16 %v274
  %v308 = vunpack.c.l.b16 %v275
  %v309 = vunpack.c.l.b16 %v276
  %v310 = vunpack.c.l.b16 %v277
  %v311 = vunpack.c.l.b16 %v278
  %v312 = vunpack.c.l.b16 %v279
  %v313 = vunpack.c.l.b16 %v280
  %v314 = vunpack.c.l.b16 %v281
  %v315 = vpack.c.b16 %v300, %v299
  %v316 = vpack.c.b16 %v302, %v301
  %v317 = vpack.c.b16 %v304, %v303
  %v318 = vpack.c.b16 %v306, %v305
  %v319 = vpack.c.b16 %v308, %v307
  %v320 = vpack.c.b16 %v310, %v309
  %v321 = vpack.c.b16 %v312, %v311
  %v322 = vpack.c.b16 %v314, %v313
  %331 = vmatpush.bf16.msra.mxu0 %v322
  %332 = vmatpush.bf16.msra.mxu0 %v321
  %333 = vmatpush.bf16.msra.mxu0 %v320
  %334 = vmatpush.bf16.msra.mxu0 %v319
  %335 = vmatpush.bf16.msra.mxu0 %v318
  %336 = vmatpush.bf16.msra.mxu0 %v317
  %337 = vmatpush.bf16.msra.mxu0 %v316
  %338 = vmatpush.bf16.msra.mxu0 %v315
  %339 = vmatmul.bf16.gmra.mxu0 %v258
  %v340 = vpop.f32.mrf.mxu0
  %v341 = vadd.f32 %v282, %v340
  %v342 = vpop.f32.mrf.mxu0
  %v343 = vadd.f32 %v282, %v342
  %344 = vmatmul.bf16.gmra.mxu0 %v259
  %v345 = vpop.f32.mrf.mxu0
  %v346 = vadd.f32 %v282, %v345
  %v347 = vpop.f32.mrf.mxu0
  %v348 = vadd.f32 %v282, %v347
  %349 = vmatmul.bf16.gmra.mxu0 %v260
  %v350 = vpop.f32.mrf.mxu0
  %v351 = vadd.f32 %v282, %v350
  %v352 = vpop.f32.mrf.mxu0
  %v353 = vadd.f32 %v282, %v352
  %354 = vmatmul.bf16.gmra.mxu0 %v261
  %v355 = vpop.f32.mrf.mxu0
  %v356 = vadd.f32 %v282, %v355
  %v357 = vpop.f32.mrf.mxu0
  %v358 = vadd.f32 %v282, %v357
  %359 = vmatmul.bf16.gmra.mxu0 %v262
  %v360 = vpop.f32.mrf.mxu0
  %v361 = vadd.f32 %v282, %v360
  %v362 = vpop.f32.mrf.mxu0
  %v363 = vadd.f32 %v282, %v362
  %364 = vmatmul.bf16.gmra.mxu0 %v263
  %v365 = vpop.f32.mrf.mxu0
  %v366 = vadd.f32 %v282, %v365
  %v367 = vpop.f32.mrf.mxu0
  %v368 = vadd.f32 %v282, %v367
  %369 = vmatmul.bf16.gmra.mxu0 %v264
  %v370 = vpop.f32.mrf.mxu0
  %v371 = vadd.f32 %v282, %v370
  %v372 = vpop.f32.mrf.mxu0
  %v373 = vadd.f32 %v282, %v372
  %374 = vmatmul.bf16.gmra.mxu0 %v265
  %v375 = vpop.f32.mrf.mxu0
  %v376 = vadd.f32 %v282, %v375
  %v377 = vpop.f32.mrf.mxu0
  %v378 = vadd.f32 %v282, %v377
  %379 = vdwg.mxu0
  %v380 = vmax.f32 %v341, 0.0
  %v381 = vmax.f32 %v343, 0.0
  %v382 = vmax.f32 %v346, 0.0
  %v383 = vmax.f32 %v348, 0.0
  %v384 = vmax.f32 %v351, 0.0
  %v385 = vmax.f32 %v353, 0.0
  %v386 = vmax.f32 %v356, 0.0
  %v387 = vmax.f32 %v358, 0.0
  %v388 = vmax.f32 %v361, 0.0
  %v389 = vmax.f32 %v363, 0.0
  %v390 = vmax.f32 %v366, 0.0
  %v391 = vmax.f32 %v368, 0.0
  %v392 = vmax.f32 %v371, 0.0
  %v393 = vmax.f32 %v373, 0.0
  %v394 = vmax.f32 %v376, 0.0
  %v395 = vmax.f32 %v378, 0.0
  %v396 = vpack.c.bf16 %v381, %v380
  %v397 = vpack.c.bf16 %v383, %v382
  %v398 = vpack.c.bf16 %v385, %v384
  %v399 = vpack.c.bf16 %v387, %v386
  %v400 = vpack.c.bf16 %v389, %v388
  %v401 = vpack.c.bf16 %v391, %v390
  %v402 = vpack.c.bf16 %v393, %v392
  %v403 = vpack.c.bf16 %v395, %v394
  %v404 = vld [vmem:[%s4] sm:$0xf]
  %v405 = vld [vmem:[%s4 + $0x4] sm:$0xf]
  %v406 = vld [vmem:[%s4 + $0x8] sm:$0xf]
  %v407 = vld [vmem:[%s4 + $0xc] sm:$0xf]
  %v408 = vld [vmem:[%s4 + $0x10] sm:$0xf]
  %v409 = vld [vmem:[%s4 + $0x14] sm:$0xf]
  %v410 = vld [vmem:[%s4 + $0x18] sm:$0xf]
  %v411 = vld [vmem:[%s4 + $0x1c] sm:$0xf]
  %v412 = vld [vmem:[%s4 + $0x20] sm:$0xf]
  %v413 = vld [vmem:[%s4 + $0x24] sm:$0xf]
  %v414 = vld [vmem:[%s4 + $0x28] sm:$0xf]
  %v415 = vld [vmem:[%s4 + $0x2c] sm:$0xf]
  %v416 = vld [vmem:[%s4 + $0x30] sm:$0xf]
  %v417 = vld [vmem:[%s4 + $0x34] sm:$0xf]
  %v418 = vld [vmem:[%s4 + $0x38] sm:$0xf]
  %v419 = vld [vmem:[%s4 + $0x3c] sm:$0xf]
  %v420 = vperm.slane %v120, 1
  %v437 = vunpack.c.l.b16 %v404
  %v438 = vunpack.c.l.b16 %v405
  %v439 = vunpack.c.l.b16 %v406
  %v440 = vunpack.c.l.b16 %v407
  %v441 = vunpack.c.l.b16 %v408
  %v442 = vunpack.c.l.b16 %v409
  %v443 = vunpack.c.l.b16 %v410
  %v444 = vunpack.c.l.b16 %v411
  %v445 = vunpack.c.l.b16 %v412
  %v446 = vunpack.c.l.b16 %v413
  %v447 = vunpack.c.l.b16 %v414
  %v448 = vunpack.c.l.b16 %v415
  %v449 = vunpack.c.l.b16 %v416
  %v450 = vunpack.c.l.b16 %v417
  %v451 = vunpack.c.l.b16 %v418
  %v452 = vunpack.c.l.b16 %v419
  %v453 = vpack.c.b16 %v438, %v437
  %v454 = vpack.c.b16 %v440, %v439
  %v455 = vpack.c.b16 %v442, %v441
  %v456 = vpack.c.b16 %v444, %v443
  %v457 = vpack.c.b16 %v446, %v445
  %v458 = vpack.c.b16 %v448, %v447
  %v459 = vpack.c.b16 %v450, %v449
  %v460 = vpack.c.b16 %v452, %v451
  %469 = vmatpush.bf16.msra.mxu0 %v460
  %470 = vmatpush.bf16.msra.mxu0 %v459
  %471 = vmatpush.bf16.msra.mxu0 %v458
  %472 = vmatpush.bf16.msra.mxu0 %v457
  %473 = vmatpush.bf16.msra.mxu0 %v456
  %474 = vmatpush.bf16.msra.mxu0 %v455
  %475 = vmatpush.bf16.msra.mxu0 %v454
  %476 = vmatpush.bf16.msra.mxu0 %v453
  %477 = vmatmul.bf16.gmra.mxu0 %v396
  %v478 = vpop.f32.mrf.mxu0
  %v479 = vadd.f32 %v420, %v478
  %v480 = vpop.f32.mrf.mxu0
  %v481 = vadd.f32 %v420, %v480
  %482 = vmatmul.bf16.gmra.mxu0 %v397
  %v483 = vpop.f32.mrf.mxu0
  %v484 = vadd.f32 %v420, %v483
  %v485 = vpop.f32.mrf.mxu0
  %v486 = vadd.f32 %v420, %v485
  %487 = vmatmul.bf16.gmra.mxu0 %v398
  %v488 = vpop.f32.mrf.mxu0
  %v489 = vadd.f32 %v420, %v488
  %v490 = vpop.f32.mrf.mxu0
  %v491 = vadd.f32 %v420, %v490
  %492 = vmatmul.bf16.gmra.mxu0 %v399
  %v493 = vpop.f32.mrf.mxu0
  %v494 = vadd.f32 %v420, %v493
  %v495 = vpop.f32.mrf.mxu0
  %v496 = vadd.f32 %v420, %v495
  %497 = vmatmul.bf16.gmra.mxu0 %v400
  %v498 = vpop.f32.mrf.mxu0
  %v499 = vadd.f32 %v420, %v498
  %v500 = vpop.f32.mrf.mxu0
  %v501 = vadd.f32 %v420, %v500
  %502 = vmatmul.bf16.gmra.mxu0 %v401
  %v503 = vpop.f32.mrf.mxu0
  %v504 = vadd.f32 %v420, %v503
  %v505 = vpop.f32.mrf.mxu0
  %v506 = vadd.f32 %v420, %v505
  %507 = vmatmul.bf16.gmra.mxu0 %v402
  %v508 = vpop.f32.mrf.mxu0
  %v509 = vadd.f32 %v420, %v508
  %v510 = vpop.f32.mrf.mxu0
  %v511 = vadd.f32 %v420, %v510
  %512 = vmatmul.bf16.gmra.mxu0 %v403
  %v513 = vpop.f32.mrf.mxu0
  %v514 = vadd.f32 %v420, %v513
  %v515 = vpop.f32.mrf.mxu0
  %v516 = vadd.f32 %v420, %v515
  %517 = vdwg.mxu0
  %v518 = vmul.f32 %v479, %v104
  %v519 = vmul.f32 %v481, %v105
  %v520 = vmul.f32 %v484, %v106
  %v521 = vmul.f32 %v486, %v107
  %v522 = vmul.f32 %v489, %v108
  %v523 = vmul.f32 %v491, %v109
  %v524 = vmul.f32 %v494, %v110
  %v525 = vmul.f32 %v496, %v111
  %v526 = vmul.f32 %v499, %v112
  %v527 = vmul.f32 %v501, %v113
  %v528 = vmul.f32 %v504, %v114
  %v529 = vmul.f32 %v506, %v115
  %v530 = vmul.f32 %v509, %v116
  %v531 = vmul.f32 %v511, %v117
  %v532 = vmul.f32 %v514, %v118
  %v533 = vmul.f32 %v516, %v119
  %v534 = vadd.f32 %v518, %v519
  %v535 = vadd.f32 %v534, %v520
  %v536 = vadd.f32 %v535, %v521
  %v537 = vadd.f32 %v536, %v522
  %v538 = vadd.f32 %v537, %v523
  %v539 = vadd.f32 %v538, %v524
  %v540 = vadd.f32 %v539, %v525
  %v541 = vadd.f32 %v540, %v526
  %v542 = vadd.f32 %v541, %v527
  %v543 = vadd.f32 %v542, %v528
  %v544 = vadd.f32 %v543, %v529
  %v545 = vadd.f32 %v544, %v530
  %v546 = vadd.f32 %v545, %v531
  %v547 = vadd.f32 %v546, %v532
  %v548 = vadd.f32 %v547, %v533
  %v549 = vrot.slane %v548, 4
  %v550 = vadd.f32 %v548, %v549
  %v551 = vrot.slane %v550, 2
  %v552 = vadd.f32 %v550, %v551
  %v553 = vrot.slane %v552, 1
  %v554 = vadd.f32 %v552, %v553
  %v555 = vmul.f32 %v554, 0.0625
  %v556 = vsub.f32 %v479, %v555
  %v557 = vsub.f32 %v481, %v555
  %v558 = vsub.f32 %v484, %v555
  %v559 = vsub.f32 %v486, %v555
  %v560 = vsub.f32 %v489, %v555
  %v561 = vsub.f32 %v491, %v555
  %v562 = vsub.f32 %v494, %v555
  %v563 = vsub.f32 %v496, %v555
  %v564 = vsub.f32 %v499, %v555
  %v565 = vsub.f32 %v501, %v555
  %v566 = vsub.f32 %v504, %v555
  %v567 = vsub.f32 %v506, %v555
  %v568 = vsub.f32 %v509, %v555
  %v569 = vsub.f32 %v511, %v555
  %v570 = vsub.f32 %v514, %v555
  %v571 = vsub.f32 %v516, %v555
  %v572 = vmul.f32 %v556, %v104
  %v573 = vmul.f32 %v557, %v105
  %v574 = vmul.f32 %v558, %v106
  %v575 = vmul.f32 %v559, %v107
  %v576 = vmul.f32 %v560, %v108
  %v577 = vmul.f32 %v561, %v109
  %v578 = vmul.f32 %v562, %v110
  %v579 = vmul.f32 %v563, %v111
  %v580 = vmul.f32 %v564, %v112
  %v581 = vmul.f32 %v565, %v113
  %v582 = vmul.f32 %v566, %v114
  %v583 = vmul.f32 %v567, %v115
  %v584 = vmul.f32 %v568, %v116
  %v585 = vmul.f32 %v569, %v117
  %v586 = vmul.f32 %v570, %v118
  %v587 = vmul.f32 %v571, %v119
  %v588 = vmul.f32 %v572, %v572
  %v589 = vmul.f32 %v573, %v573
  %v590 = vmul.f32 %v574, %v574
  %v591 = vmul.f32 %v575, %v575
  %v592 = vmul.f32 %v576, %v576
  %v593 = vmul.f32 %v577, %v577
  %v594 = vmul.f32 %v578, %v578
  %v595 = vmul.f32 %v579, %v579
  %v596 = vmul.f32 %v580, %v580
  %v597 = vmul.f32 %v581, %v581
  %v598 = vmul.f32 %v582, %v582
  %v599 = vmul.f32 %v583, %v583
  %v600 = vmul.f32 %v584, %v584
  %v601 = vmul.f32 %v585, %v585
  %v602 = vmul.f32 %v586, %v586
  %v603 = vmul.f32 %v587, %v587
  %v604 = vadd.f32 %v588, %v589
  %v605 = vadd.f32 %v604, %v590
  %v606 = vadd.f32 %v605, %v591
  %v607 = vadd.f32 %v606, %v592
  %v608 = vadd.f32 %v607, %v593
  %v609 = vadd.f32 %v608, %v594
  %v610 = vadd.f32 %v609, %v595
  %v611 = vadd.f32 %v610, %v596
  %v612 = vadd.f32 %v611, %v597
  %v613 = vadd.f32 %v612, %v598
  %v614 = vadd.f32 %v613, %v599
  %v615 = vadd.f32 %v614, %v600
  %v616 = vadd.f32 %v615, %v601
  %v617 = vadd.f32 %v616, %v602
  %v618 = vadd.f32 %v617, %v603
  %v619 = vrot.slane %v618, 4
  %v620 = vadd.f32 %v618, %v619
  %v621 = vrot.slane %v620, 2
  %v622 = vadd.f32 %v620, %v621
  %v623 = vrot.slane %v622, 1
  %v624 = vadd.f32 %v622, %v623
  %v625 = vmul.f32 %v624, 0.0625
  %v626 = vadd.f32 %v625, 1e-05
  %v627 = vrsqrt.pop %v626
  %v628 = vmul.f32 %v627, %v626
  %v629 = vmul.f32 %v628, %v627
  %v630 = vmul.f32 0.5, %v629
  %v631 = vsub.f32 1.5, %v630
  %v632 = vmul.f32 %v627, %v631
  %vm633 = vweird.f32 %v626
  %vm634 = vweird.f32 %v627
  %vm635 = vmor %vm633, %vm634
  %v636 = vsel %vm635, %v627, %v632
  %v637 = vmul.f32 %v120, %v636
  %v638 = vmul.f32 %v555, %v637
  %v640 = vrot.slane %v638, 7
  %v642 = vsub.f32 %v120, %v640
  %v643 = vperm.slane %v637, 2
  %v644 = vmul.f32 %v479, %v643
  %v645 = vmul.f32 %v481, %v643
  %v646 = vmul.f32 %v484, %v643
  %v647 = vmul.f32 %v486, %v643
  %v648 = vmul.f32 %v489, %v643
  %v649 = vmul.f32 %v491, %v643
  %v650 = vmul.f32 %v494, %v643
  %v651 = vmul.f32 %v496, %v643
  %v652 = vmul.f32 %v499, %v643
  %v653 = vmul.f32 %v501, %v643
  %v654 = vmul.f32 %v504, %v643
  %v655 = vmul.f32 %v506, %v643
  %v656 = vmul.f32 %v509, %v643
  %v657 = vmul.f32 %v511, %v643
  %v658 = vmul.f32 %v514, %v643
  %v659 = vmul.f32 %v516, %v643
  %v660 = vperm.slane %v642, 3
  %v661 = vadd.f32 %v644, %v660
  %v662 = vadd.f32 %v645, %v660
  %v663 = vadd.f32 %v646, %v660
  %v664 = vadd.f32 %v647, %v660
  %v665 = vadd.f32 %v648, %v660
  %v666 = vadd.f32 %v649, %v660
  %v667 = vadd.f32 %v650, %v660
  %v668 = vadd.f32 %v651, %v660
  %v669 = vadd.f32 %v652, %v660
  %v670 = vadd.f32 %v653, %v660
  %v671 = vadd.f32 %v654, %v660
  %v672 = vadd.f32 %v655, %v660
  %v673 = vadd.f32 %v656, %v660
  %v674 = vadd.f32 %v657, %v660
  %v675 = vadd.f32 %v658, %v660
  %v676 = vadd.f32 %v659, %v660
  %v677 = vmax.f32 %v661, 0.0
  %v678 = vmax.f32 %v662, 0.0
  %v679 = vmax.f32 %v663, 0.0
  %v680 = vmax.f32 %v664, 0.0
  %v681 = vmax.f32 %v665, 0.0
  %v682 = vmax.f32 %v666, 0.0
  %v683 = vmax.f32 %v667, 0.0
  %v684 = vmax.f32 %v668, 0.0
  %v685 = vmax.f32 %v669, 0.0
  %v686 = vmax.f32 %v670, 0.0
  %v687 = vmax.f32 %v671, 0.0
  %v688 = vmax.f32 %v672, 0.0
  %v689 = vmax.f32 %v673, 0.0
  %v690 = vmax.f32 %v674, 0.0
  %v691 = vmax.f32 %v675, 0.0
  %v692 = vmax.f32 %v676, 0.0
  %s693 = scalar_lea.vmem %s5, 8
  %v694 = vld [vmem:[%s693] sm:$0xff]
  %v695 = vpack.c.bf16 %v678, %v677
  %v696 = vpack.c.bf16 %v680, %v679
  %v697 = vpack.c.bf16 %v682, %v681
  %v698 = vpack.c.bf16 %v684, %v683
  %v699 = vpack.c.bf16 %v686, %v685
  %v700 = vpack.c.bf16 %v688, %v687
  %v701 = vpack.c.bf16 %v690, %v689
  %v702 = vpack.c.bf16 %v692, %v691
  %s703 = scalar_lea.vmem %s2, 64
  %v704 = vld [vmem:[%s703] sm:$0xf]
  %v705 = vld [vmem:[%s703 + $0x4] sm:$0xf]
  %v706 = vld [vmem:[%s703 + $0x8] sm:$0xf]
  %v707 = vld [vmem:[%s703 + $0xc] sm:$0xf]
  %v708 = vld [vmem:[%s703 + $0x10] sm:$0xf]
  %v709 = vld [vmem:[%s703 + $0x14] sm:$0xf]
  %v710 = vld [vmem:[%s703 + $0x18] sm:$0xf]
  %v711 = vld [vmem:[%s703 + $0x1c] sm:$0xf]
  %v712 = vld [vmem:[%s703 + $0x20] sm:$0xf]
  %v713 = vld [vmem:[%s703 + $0x24] sm:$0xf]
  %v714 = vld [vmem:[%s703 + $0x28] sm:$0xf]
  %v715 = vld [vmem:[%s703 + $0x2c] sm:$0xf]
  %v716 = vld [vmem:[%s703 + $0x30] sm:$0xf]
  %v717 = vld [vmem:[%s703 + $0x34] sm:$0xf]
  %v718 = vld [vmem:[%s703 + $0x38] sm:$0xf]
  %v719 = vld [vmem:[%s703 + $0x3c] sm:$0xf]
  %v720 = vunpack.c.l.bf16 %v704
  %v721 = vunpack.c.l.bf16 %v705
  %v722 = vunpack.c.l.bf16 %v706
  %v723 = vunpack.c.l.bf16 %v707
  %v724 = vunpack.c.l.bf16 %v708
  %v725 = vunpack.c.l.bf16 %v709
  %v726 = vunpack.c.l.bf16 %v710
  %v727 = vunpack.c.l.bf16 %v711
  %v728 = vunpack.c.l.bf16 %v712
  %v729 = vunpack.c.l.bf16 %v713
  %v730 = vunpack.c.l.bf16 %v714
  %v731 = vunpack.c.l.bf16 %v715
  %v732 = vunpack.c.l.bf16 %v716
  %v733 = vunpack.c.l.bf16 %v717
  %v734 = vunpack.c.l.bf16 %v718
  %v735 = vunpack.c.l.bf16 %v719
  %736 = vmatpush.bf16.msra.mxu0 %v702
  %737 = vmatpush.bf16.msra.mxu0 %v701
  %738 = vmatpush.bf16.msra.mxu0 %v700
  %739 = vmatpush.bf16.msra.mxu0 %v699
  %740 = vmatpush.bf16.msra.mxu0 %v698
  %741 = vmatpush.bf16.msra.mxu0 %v697
  %742 = vmatpush.bf16.msra.mxu0 %v696
  %743 = vmatpush.bf16.msra.mxu0 %v695
  %744 = vmatmul.bf16.gmra.mxu0 %v193
  %v745 = vpop.f32.mrf.mxu0
  %v746 = vadd.f32 %v720, %v745
  %v747 = vpop.f32.mrf.mxu0
  %v748 = vadd.f32 %v721, %v747
  %749 = vmatmul.bf16.gmra.mxu0 %v194
  %v750 = vpop.f32.mrf.mxu0
  %v751 = vadd.f32 %v722, %v750
  %v752 = vpop.f32.mrf.mxu0
  %v753 = vadd.f32 %v723, %v752
  %754 = vmatmul.bf16.gmra.mxu0 %v195
  %v755 = vpop.f32.mrf.mxu0
  %v756 = vadd.f32 %v724, %v755
  %v757 = vpop.f32.mrf.mxu0
  %v758 = vadd.f32 %v725, %v757
  %759 = vmatmul.bf16.gmra.mxu0 %v196
  %v760 = vpop.f32.mrf.mxu0
  %v761 = vadd.f32 %v726, %v760
  %v762 = vpop.f32.mrf.mxu0
  %v763 = vadd.f32 %v727, %v762
  %764 = vmatmul.bf16.gmra.mxu0 %v197
  %v765 = vpop.f32.mrf.mxu0
  %v766 = vadd.f32 %v728, %v765
  %v767 = vpop.f32.mrf.mxu0
  %v768 = vadd.f32 %v729, %v767
  %769 = vmatmul.bf16.gmra.mxu0 %v198
  %v770 = vpop.f32.mrf.mxu0
  %v771 = vadd.f32 %v730, %v770
  %v772 = vpop.f32.mrf.mxu0
  %v773 = vadd.f32 %v731, %v772
  %774 = vmatmul.bf16.gmra.mxu0 %v199
  %v775 = vpop.f32.mrf.mxu0
  %v776 = vadd.f32 %v732, %v775
  %v777 = vpop.f32.mrf.mxu0
  %v778 = vadd.f32 %v733, %v777
  %779 = vmatmul.bf16.gmra.mxu0 %v200
  %v780 = vpop.f32.mrf.mxu0
  %v781 = vadd.f32 %v734, %v780
  %v782 = vpop.f32.mrf.mxu0
  %v783 = vadd.f32 %v735, %v782
  %784 = vdwg.mxu0
  %v785 = vpack.c.bf16 %v748, %v746
  %v786 = vpack.c.bf16 %v753, %v751
  %v787 = vpack.c.bf16 %v758, %v756
  %v788 = vpack.c.bf16 %v763, %v761
  %v789 = vpack.c.bf16 %v768, %v766
  %v790 = vpack.c.bf16 %v773, %v771
  %v791 = vpack.c.bf16 %v778, %v776
  %v792 = vpack.c.bf16 %v783, %v781
  %s793 = scalar_lea.vmem %s3, 64
  %v794 = vld [vmem:[%s793] sm:$0xf]
  %v795 = vld [vmem:[%s793 + $0x4] sm:$0xf]
  %v796 = vld [vmem:[%s793 + $0x8] sm:$0xf]
  %v797 = vld [vmem:[%s793 + $0xc] sm:$0xf]
  %v798 = vld [vmem:[%s793 + $0x10] sm:$0xf]
  %v799 = vld [vmem:[%s793 + $0x14] sm:$0xf]
  %v800 = vld [vmem:[%s793 + $0x18] sm:$0xf]
  %v801 = vld [vmem:[%s793 + $0x1c] sm:$0xf]
  %v802 = vld [vmem:[%s793 + $0x20] sm:$0xf]
  %v803 = vld [vmem:[%s793 + $0x24] sm:$0xf]
  %v804 = vld [vmem:[%s793 + $0x28] sm:$0xf]
  %v805 = vld [vmem:[%s793 + $0x2c] sm:$0xf]
  %v806 = vld [vmem:[%s793 + $0x30] sm:$0xf]
  %v807 = vld [vmem:[%s793 + $0x34] sm:$0xf]
  %v808 = vld [vmem:[%s793 + $0x38] sm:$0xf]
  %v809 = vld [vmem:[%s793 + $0x3c] sm:$0xf]
  %v810 = vperm.slane %v694, 0
  %v827 = vunpack.c.l.b16 %v794
  %v828 = vunpack.c.l.b16 %v795
  %v829 = vunpack.c.l.b16 %v796
  %v830 = vunpack.c.l.b16 %v797
  %v831 = vunpack.c.l.b16 %v798
  %v832 = vunpack.c.l.b16 %v799
  %v833 = vunpack.c.l.b16 %v800
  %v834 = vunpack.c.l.b16 %v801
  %v835 = vunpack.c.l.b16 %v802
  %v836 = vunpack.c.l.b16 %v803
  %v837 = vunpack.c.l.b16 %v804
  %v838 = vunpack.c.l.b16 %v805
  %v839 = vunpack.c.l.b16 %v806
  %v840 = vunpack.c.l.b16 %v807
  %v841 = vunpack.c.l.b16 %v808
  %v842 = vunpack.c.l.b16 %v809
  %v843 = vpack.c.b16 %v828, %v827
  %v844 = vpack.c.b16 %v830, %v829
  %v845 = vpack.c.b16 %v832, %v831
  %v846 = vpack.c.b16 %v834, %v833
  %v847 = vpack.c.b16 %v836, %v835
  %v848 = vpack.c.b16 %v838, %v837
  %v849 = vpack.c.b16 %v840, %v839
  %v850 = vpack.c.b16 %v842, %v841
  %859 = vmatpush.bf16.msra.mxu0 %v850
  %860 = vmatpush.bf16.msra.mxu0 %v849
  %861 = vmatpush.bf16.msra.mxu0 %v848
  %862 = vmatpush.bf16.msra.mxu0 %v847
  %863 = vmatpush.bf16.msra.mxu0 %v846
  %864 = vmatpush.bf16.msra.mxu0 %v845
  %865 = vmatpush.bf16.msra.mxu0 %v844
  %866 = vmatpush.bf16.msra.mxu0 %v843
  %867 = vmatmul.bf16.gmra.mxu0 %v785
  %v868 = vpop.f32.mrf.mxu0
  %v869 = vadd.f32 %v810, %v868
  %v870 = vpop.f32.mrf.mxu0
  %v871 = vadd.f32 %v810, %v870
  %872 = vmatmul.bf16.gmra.mxu0 %v786
  %v873 = vpop.f32.mrf.mxu0
  %v874 = vadd.f32 %v810, %v873
  %v875 = vpop.f32.mrf.mxu0
  %v876 = vadd.f32 %v810, %v875
  %877 = vmatmul.bf16.gmra.mxu0 %v787
  %v878 = vpop.f32.mrf.mxu0
  %v879 = vadd.f32 %v810, %v878
  %v880 = vpop.f32.mrf.mxu0
  %v881 = vadd.f32 %v810, %v880
  %882 = vmatmul.bf16.gmra.mxu0 %v788
  %v883 = vpop.f32.mrf.mxu0
  %v884 = vadd.f32 %v810, %v883
  %v885 = vpop.f32.mrf.mxu0
  %v886 = vadd.f32 %v810, %v885
  %887 = vmatmul.bf16.gmra.mxu0 %v789
  %v888 = vpop.f32.mrf.mxu0
  %v889 = vadd.f32 %v810, %v888
  %v890 = vpop.f32.mrf.mxu0
  %v891 = vadd.f32 %v810, %v890
  %892 = vmatmul.bf16.gmra.mxu0 %v790
  %v893 = vpop.f32.mrf.mxu0
  %v894 = vadd.f32 %v810, %v893
  %v895 = vpop.f32.mrf.mxu0
  %v896 = vadd.f32 %v810, %v895
  %897 = vmatmul.bf16.gmra.mxu0 %v791
  %v898 = vpop.f32.mrf.mxu0
  %v899 = vadd.f32 %v810, %v898
  %v900 = vpop.f32.mrf.mxu0
  %v901 = vadd.f32 %v810, %v900
  %902 = vmatmul.bf16.gmra.mxu0 %v792
  %v903 = vpop.f32.mrf.mxu0
  %v904 = vadd.f32 %v810, %v903
  %v905 = vpop.f32.mrf.mxu0
  %v906 = vadd.f32 %v810, %v905
  %907 = vdwg.mxu0
  %v908 = vmax.f32 %v869, 0.0
  %v909 = vmax.f32 %v871, 0.0
  %v910 = vmax.f32 %v874, 0.0
  %v911 = vmax.f32 %v876, 0.0
  %v912 = vmax.f32 %v879, 0.0
  %v913 = vmax.f32 %v881, 0.0
  %v914 = vmax.f32 %v884, 0.0
  %v915 = vmax.f32 %v886, 0.0
  %v916 = vmax.f32 %v889, 0.0
  %v917 = vmax.f32 %v891, 0.0
  %v918 = vmax.f32 %v894, 0.0
  %v919 = vmax.f32 %v896, 0.0
  %v920 = vmax.f32 %v899, 0.0
  %v921 = vmax.f32 %v901, 0.0
  %v922 = vmax.f32 %v904, 0.0
  %v923 = vmax.f32 %v906, 0.0
  %v924 = vpack.c.bf16 %v909, %v908
  %v925 = vpack.c.bf16 %v911, %v910
  %v926 = vpack.c.bf16 %v913, %v912
  %v927 = vpack.c.bf16 %v915, %v914
  %v928 = vpack.c.bf16 %v917, %v916
  %v929 = vpack.c.bf16 %v919, %v918
  %v930 = vpack.c.bf16 %v921, %v920
  %v931 = vpack.c.bf16 %v923, %v922
  %s932 = scalar_lea.vmem %s4, 64
  %v933 = vld [vmem:[%s932] sm:$0xf]
  %v934 = vld [vmem:[%s932 + $0x4] sm:$0xf]
  %v935 = vld [vmem:[%s932 + $0x8] sm:$0xf]
  %v936 = vld [vmem:[%s932 + $0xc] sm:$0xf]
  %v937 = vld [vmem:[%s932 + $0x10] sm:$0xf]
  %v938 = vld [vmem:[%s932 + $0x14] sm:$0xf]
  %v939 = vld [vmem:[%s932 + $0x18] sm:$0xf]
  %v940 = vld [vmem:[%s932 + $0x1c] sm:$0xf]
  %v941 = vld [vmem:[%s932 + $0x20] sm:$0xf]
  %v942 = vld [vmem:[%s932 + $0x24] sm:$0xf]
  %v943 = vld [vmem:[%s932 + $0x28] sm:$0xf]
  %v944 = vld [vmem:[%s932 + $0x2c] sm:$0xf]
  %v945 = vld [vmem:[%s932 + $0x30] sm:$0xf]
  %v946 = vld [vmem:[%s932 + $0x34] sm:$0xf]
  %v947 = vld [vmem:[%s932 + $0x38] sm:$0xf]
  %v948 = vld [vmem:[%s932 + $0x3c] sm:$0xf]
  %v949 = vperm.slane %v694, 1
  %v966 = vunpack.c.l.b16 %v933
  %v967 = vunpack.c.l.b16 %v934
  %v968 = vunpack.c.l.b16 %v935
  %v969 = vunpack.c.l.b16 %v936
  %v970 = vunpack.c.l.b16 %v937
  %v971 = vunpack.c.l.b16 %v938
  %v972 = vunpack.c.l.b16 %v939
  %v973 = vunpack.c.l.b16 %v940
  %v974 = vunpack.c.l.b16 %v941
  %v975 = vunpack.c.l.b16 %v942
  %v976 = vunpack.c.l.b16 %v943
  %v977 = vunpack.c.l.b16 %v944
  %v978 = vunpack.c.l.b16 %v945
  %v979 = vunpack.c.l.b16 %v946
  %v980 = vunpack.c.l.b16 %v947
  %v981 = vunpack.c.l.b16 %v948
  %v982 = vpack.c.b16 %v967, %v966
  %v983 = vpack.c.b16 %v969, %v968
  %v984 = vpack.c.b16 %v971, %v970
  %v985 = vpack.c.b16 %v973, %v972
  %v986 = vpack.c.b16 %v975, %v974
  %v987 = vpack.c.b16 %v977, %v976
  %v988 = vpack.c.b16 %v979, %v978
  %v989 = vpack.c.b16 %v981, %v980
  %998 = vmatpush.bf16.msra.mxu0 %v989
  %999 = vmatpush.bf16.msra.mxu0 %v988
  %1000 = vmatpush.bf16.msra.mxu0 %v987
  %1001 = vmatpush.bf16.msra.mxu0 %v986
  %1002 = vmatpush.bf16.msra.mxu0 %v985
  %1003 = vmatpush.bf16.msra.mxu0 %v984
  %1004 = vmatpush.bf16.msra.mxu0 %v983
  %1005 = vmatpush.bf16.msra.mxu0 %v982
  %1006 = vmatmul.bf16.gmra.mxu0 %v924
  %v1007 = vpop.f32.mrf.mxu0
  %v1008 = vadd.f32 %v949, %v1007
  %v1009 = vpop.f32.mrf.mxu0
  %v1010 = vadd.f32 %v949, %v1009
  %1011 = vmatmul.bf16.gmra.mxu0 %v925
  %v1012 = vpop.f32.mrf.mxu0
  %v1013 = vadd.f32 %v949, %v1012
  %v1014 = vpop.f32.mrf.mxu0
  %v1015 = vadd.f32 %v949, %v1014
  %1016 = vmatmul.bf16.gmra.mxu0 %v926
  %v1017 = vpop.f32.mrf.mxu0
  %v1018 = vadd.f32 %v949, %v1017
  %v1019 = vpop.f32.mrf.mxu0
  %v1020 = vadd.f32 %v949, %v1019
  %1021 = vmatmul.bf16.gmra.mxu0 %v927
  %v1022 = vpop.f32.mrf.mxu0
  %v1023 = vadd.f32 %v949, %v1022
  %v1024 = vpop.f32.mrf.mxu0
  %v1025 = vadd.f32 %v949, %v1024
  %1026 = vmatmul.bf16.gmra.mxu0 %v928
  %v1027 = vpop.f32.mrf.mxu0
  %v1028 = vadd.f32 %v949, %v1027
  %v1029 = vpop.f32.mrf.mxu0
  %v1030 = vadd.f32 %v949, %v1029
  %1031 = vmatmul.bf16.gmra.mxu0 %v929
  %v1032 = vpop.f32.mrf.mxu0
  %v1033 = vadd.f32 %v949, %v1032
  %v1034 = vpop.f32.mrf.mxu0
  %v1035 = vadd.f32 %v949, %v1034
  %1036 = vmatmul.bf16.gmra.mxu0 %v930
  %v1037 = vpop.f32.mrf.mxu0
  %v1038 = vadd.f32 %v949, %v1037
  %v1039 = vpop.f32.mrf.mxu0
  %v1040 = vadd.f32 %v949, %v1039
  %1041 = vmatmul.bf16.gmra.mxu0 %v931
  %v1042 = vpop.f32.mrf.mxu0
  %v1043 = vadd.f32 %v949, %v1042
  %v1044 = vpop.f32.mrf.mxu0
  %v1045 = vadd.f32 %v949, %v1044
  %1046 = vdwg.mxu0
  %v1047 = vmul.f32 %v1008, %v104
  %v1048 = vmul.f32 %v1010, %v105
  %v1049 = vmul.f32 %v1013, %v106
  %v1050 = vmul.f32 %v1015, %v107
  %v1051 = vmul.f32 %v1018, %v108
  %v1052 = vmul.f32 %v1020, %v109
  %v1053 = vmul.f32 %v1023, %v110
  %v1054 = vmul.f32 %v1025, %v111
  %v1055 = vmul.f32 %v1028, %v112
  %v1056 = vmul.f32 %v1030, %v113
  %v1057 = vmul.f32 %v1033, %v114
  %v1058 = vmul.f32 %v1035, %v115
  %v1059 = vmul.f32 %v1038, %v116
  %v1060 = vmul.f32 %v1040, %v117
  %v1061 = vmul.f32 %v1043, %v118
  %v1062 = vmul.f32 %v1045, %v119
  %v1063 = vadd.f32 %v1047, %v1048
  %v1064 = vadd.f32 %v1063, %v1049
  %v1065 = vadd.f32 %v1064, %v1050
  %v1066 = vadd.f32 %v1065, %v1051
  %v1067 = vadd.f32 %v1066, %v1052
  %v1068 = vadd.f32 %v1067, %v1053
  %v1069 = vadd.f32 %v1068, %v1054
  %v1070 = vadd.f32 %v1069, %v1055
  %v1071 = vadd.f32 %v1070, %v1056
  %v1072 = vadd.f32 %v1071, %v1057
  %v1073 = vadd.f32 %v1072, %v1058
  %v1074 = vadd.f32 %v1073, %v1059
  %v1075 = vadd.f32 %v1074, %v1060
  %v1076 = vadd.f32 %v1075, %v1061
  %v1077 = vadd.f32 %v1076, %v1062
  %v1078 = vrot.slane %v1077, 4
  %v1079 = vadd.f32 %v1077, %v1078
  %v1080 = vrot.slane %v1079, 2
  %v1081 = vadd.f32 %v1079, %v1080
  %v1082 = vrot.slane %v1081, 1
  %v1083 = vadd.f32 %v1081, %v1082
  %v1084 = vmul.f32 %v1083, 0.0625
  %v1085 = vsub.f32 %v1008, %v1084
  %v1086 = vsub.f32 %v1010, %v1084
  %v1087 = vsub.f32 %v1013, %v1084
  %v1088 = vsub.f32 %v1015, %v1084
  %v1089 = vsub.f32 %v1018, %v1084
  %v1090 = vsub.f32 %v1020, %v1084
  %v1091 = vsub.f32 %v1023, %v1084
  %v1092 = vsub.f32 %v1025, %v1084
  %v1093 = vsub.f32 %v1028, %v1084
  %v1094 = vsub.f32 %v1030, %v1084
  %v1095 = vsub.f32 %v1033, %v1084
  %v1096 = vsub.f32 %v1035, %v1084
  %v1097 = vsub.f32 %v1038, %v1084
  %v1098 = vsub.f32 %v1040, %v1084
  %v1099 = vsub.f32 %v1043, %v1084
  %v1100 = vsub.f32 %v1045, %v1084
  %v1101 = vmul.f32 %v1085, %v104
  %v1102 = vmul.f32 %v1086, %v105
  %v1103 = vmul.f32 %v1087, %v106
  %v1104 = vmul.f32 %v1088, %v107
  %v1105 = vmul.f32 %v1089, %v108
  %v1106 = vmul.f32 %v1090, %v109
  %v1107 = vmul.f32 %v1091, %v110
  %v1108 = vmul.f32 %v1092, %v111
  %v1109 = vmul.f32 %v1093, %v112
  %v1110 = vmul.f32 %v1094, %v113
  %v1111 = vmul.f32 %v1095, %v114
  %v1112 = vmul.f32 %v1096, %v115
  %v1113 = vmul.f32 %v1097, %v116
  %v1114 = vmul.f32 %v1098, %v117
  %v1115 = vmul.f32 %v1099, %v118
  %v1116 = vmul.f32 %v1100, %v119
  %v1117 = vmul.f32 %v1101, %v1101
  %v1118 = vmul.f32 %v1102, %v1102
  %v1119 = vmul.f32 %v1103, %v1103
  %v1120 = vmul.f32 %v1104, %v1104
  %v1121 = vmul.f32 %v1105, %v1105
  %v1122 = vmul.f32 %v1106, %v1106
  %v1123 = vmul.f32 %v1107, %v1107
  %v1124 = vmul.f32 %v1108, %v1108
  %v1125 = vmul.f32 %v1109, %v1109
  %v1126 = vmul.f32 %v1110, %v1110
  %v1127 = vmul.f32 %v1111, %v1111
  %v1128 = vmul.f32 %v1112, %v1112
  %v1129 = vmul.f32 %v1113, %v1113
  %v1130 = vmul.f32 %v1114, %v1114
  %v1131 = vmul.f32 %v1115, %v1115
  %v1132 = vmul.f32 %v1116, %v1116
  %v1133 = vadd.f32 %v1117, %v1118
  %v1134 = vadd.f32 %v1133, %v1119
  %v1135 = vadd.f32 %v1134, %v1120
  %v1136 = vadd.f32 %v1135, %v1121
  %v1137 = vadd.f32 %v1136, %v1122
  %v1138 = vadd.f32 %v1137, %v1123
  %v1139 = vadd.f32 %v1138, %v1124
  %v1140 = vadd.f32 %v1139, %v1125
  %v1141 = vadd.f32 %v1140, %v1126
  %v1142 = vadd.f32 %v1141, %v1127
  %v1143 = vadd.f32 %v1142, %v1128
  %v1144 = vadd.f32 %v1143, %v1129
  %v1145 = vadd.f32 %v1144, %v1130
  %v1146 = vadd.f32 %v1145, %v1131
  %v1147 = vadd.f32 %v1146, %v1132
  %v1148 = vrot.slane %v1147, 4
  %v1149 = vadd.f32 %v1147, %v1148
  %v1150 = vrot.slane %v1149, 2
  %v1151 = vadd.f32 %v1149, %v1150
  %v1152 = vrot.slane %v1151, 1
  %v1153 = vadd.f32 %v1151, %v1152
  %v1154 = vmul.f32 %v1153, 0.0625
  %v1155 = vadd.f32 %v1154, 1e-05
  %v1156 = vrsqrt.pop %v1155
  %v1157 = vmul.f32 %v1156, %v1155
  %v1158 = vmul.f32 %v1157, %v1156
  %v1159 = vmul.f32 0.5, %v1158
  %v1160 = vsub.f32 1.5, %v1159
  %v1161 = vmul.f32 %v1156, %v1160
  %vm1162 = vweird.f32 %v1155
  %vm1163 = vweird.f32 %v1156
  %vm1164 = vmor %vm1162, %vm1163
  %v1165 = vsel %vm1164, %v1156, %v1161
  %v1166 = vmul.f32 %v694, %v1165
  %v1167 = vmul.f32 %v1084, %v1166
  %v1169 = vrot.slane %v1167, 7
  %v1171 = vsub.f32 %v694, %v1169
  %v1172 = vperm.slane %v1166, 2
  %v1173 = vmul.f32 %v1008, %v1172
  %v1174 = vmul.f32 %v1010, %v1172
  %v1175 = vmul.f32 %v1013, %v1172
  %v1176 = vmul.f32 %v1015, %v1172
  %v1177 = vmul.f32 %v1018, %v1172
  %v1178 = vmul.f32 %v1020, %v1172
  %v1179 = vmul.f32 %v1023, %v1172
  %v1180 = vmul.f32 %v1025, %v1172
  %v1181 = vmul.f32 %v1028, %v1172
  %v1182 = vmul.f32 %v1030, %v1172
  %v1183 = vmul.f32 %v1033, %v1172
  %v1184 = vmul.f32 %v1035, %v1172
  %v1185 = vmul.f32 %v1038, %v1172
  %v1186 = vmul.f32 %v1040, %v1172
  %v1187 = vmul.f32 %v1043, %v1172
  %v1188 = vmul.f32 %v1045, %v1172
  %v1189 = vperm.slane %v1171, 3
  %v1190 = vadd.f32 %v1173, %v1189
  %v1191 = vadd.f32 %v1174, %v1189
  %v1192 = vadd.f32 %v1175, %v1189
  %v1193 = vadd.f32 %v1176, %v1189
  %v1194 = vadd.f32 %v1177, %v1189
  %v1195 = vadd.f32 %v1178, %v1189
  %v1196 = vadd.f32 %v1179, %v1189
  %v1197 = vadd.f32 %v1180, %v1189
  %v1198 = vadd.f32 %v1181, %v1189
  %v1199 = vadd.f32 %v1182, %v1189
  %v1200 = vadd.f32 %v1183, %v1189
  %v1201 = vadd.f32 %v1184, %v1189
  %v1202 = vadd.f32 %v1185, %v1189
  %v1203 = vadd.f32 %v1186, %v1189
  %v1204 = vadd.f32 %v1187, %v1189
  %v1205 = vadd.f32 %v1188, %v1189
  %v1206 = vmax.f32 %v1190, 0.0
  %v1207 = vmax.f32 %v1191, 0.0
  %v1208 = vmax.f32 %v1192, 0.0
  %v1209 = vmax.f32 %v1193, 0.0
  %v1210 = vmax.f32 %v1194, 0.0
  %v1211 = vmax.f32 %v1195, 0.0
  %v1212 = vmax.f32 %v1196, 0.0
  %v1213 = vmax.f32 %v1197, 0.0
  %v1214 = vmax.f32 %v1198, 0.0
  %v1215 = vmax.f32 %v1199, 0.0
  %v1216 = vmax.f32 %v1200, 0.0
  %v1217 = vmax.f32 %v1201, 0.0
  %v1218 = vmax.f32 %v1202, 0.0
  %v1219 = vmax.f32 %v1203, 0.0
  %v1220 = vmax.f32 %v1204, 0.0
  %v1221 = vmax.f32 %v1205, 0.0
  %s1222 = scalar_lea.vmem %s5, 16
  %v1223 = vld [vmem:[%s1222] sm:$0xff]
  %v1224 = vpack.c.bf16 %v1207, %v1206
  %v1225 = vpack.c.bf16 %v1209, %v1208
  %v1226 = vpack.c.bf16 %v1211, %v1210
  %v1227 = vpack.c.bf16 %v1213, %v1212
  %v1228 = vpack.c.bf16 %v1215, %v1214
  %v1229 = vpack.c.bf16 %v1217, %v1216
  %v1230 = vpack.c.bf16 %v1219, %v1218
  %v1231 = vpack.c.bf16 %v1221, %v1220
  %s1232 = scalar_lea.vmem %s2, 128
  %v1233 = vld [vmem:[%s1232] sm:$0xf]
  %v1234 = vld [vmem:[%s1232 + $0x4] sm:$0xf]
  %v1235 = vld [vmem:[%s1232 + $0x8] sm:$0xf]
  %v1236 = vld [vmem:[%s1232 + $0xc] sm:$0xf]
  %v1237 = vld [vmem:[%s1232 + $0x10] sm:$0xf]
  %v1238 = vld [vmem:[%s1232 + $0x14] sm:$0xf]
  %v1239 = vld [vmem:[%s1232 + $0x18] sm:$0xf]
  %v1240 = vld [vmem:[%s1232 + $0x1c] sm:$0xf]
  %v1241 = vld [vmem:[%s1232 + $0x20] sm:$0xf]
  %v1242 = vld [vmem:[%s1232 + $0x24] sm:$0xf]
  %v1243 = vld [vmem:[%s1232 + $0x28] sm:$0xf]
  %v1244 = vld [vmem:[%s1232 + $0x2c] sm:$0xf]
  %v1245 = vld [vmem:[%s1232 + $0x30] sm:$0xf]
  %v1246 = vld [vmem:[%s1232 + $0x34] sm:$0xf]
  %v1247 = vld [vmem:[%s1232 + $0x38] sm:$0xf]
  %v1248 = vld [vmem:[%s1232 + $0x3c] sm:$0xf]
  %v1249 = vunpack.c.l.bf16 %v1233
  %v1250 = vunpack.c.l.bf16 %v1234
  %v1251 = vunpack.c.l.bf16 %v1235
  %v1252 = vunpack.c.l.bf16 %v1236
  %v1253 = vunpack.c.l.bf16 %v1237
  %v1254 = vunpack.c.l.bf16 %v1238
  %v1255 = vunpack.c.l.bf16 %v1239
  %v1256 = vunpack.c.l.bf16 %v1240
  %v1257 = vunpack.c.l.bf16 %v1241
  %v1258 = vunpack.c.l.bf16 %v1242
  %v1259 = vunpack.c.l.bf16 %v1243
  %v1260 = vunpack.c.l.bf16 %v1244
  %v1261 = vunpack.c.l.bf16 %v1245
  %v1262 = vunpack.c.l.bf16 %v1246
  %v1263 = vunpack.c.l.bf16 %v1247
  %v1264 = vunpack.c.l.bf16 %v1248
  %1265 = vmatpush.bf16.msra.mxu0 %v1231
  %1266 = vmatpush.bf16.msra.mxu0 %v1230
  %1267 = vmatpush.bf16.msra.mxu0 %v1229
  %1268 = vmatpush.bf16.msra.mxu0 %v1228
  %1269 = vmatpush.bf16.msra.mxu0 %v1227
  %1270 = vmatpush.bf16.msra.mxu0 %v1226
  %1271 = vmatpush.bf16.msra.mxu0 %v1225
  %1272 = vmatpush.bf16.msra.mxu0 %v1224
  %1273 = vmatmul.bf16.gmra.mxu0 %v193
  %v1274 = vpop.f32.mrf.mxu0
  %v1275 = vadd.f32 %v1249, %v1274
  %v1276 = vpop.f32.mrf.mxu0
  %v1277 = vadd.f32 %v1250, %v1276
  %1278 = vmatmul.bf16.gmra.mxu0 %v194
  %v1279 = vpop.f32.mrf.mxu0
  %v1280 = vadd.f32 %v1251, %v1279
  %v1281 = vpop.f32.mrf.mxu0
  %v1282 = vadd.f32 %v1252, %v1281
  %1283 = vmatmul.bf16.gmra.mxu0 %v195
  %v1284 = vpop.f32.mrf.mxu0
  %v1285 = vadd.f32 %v1253, %v1284
  %v1286 = vpop.f32.mrf.mxu0
  %v1287 = vadd.f32 %v1254, %v1286
  %1288 = vmatmul.bf16.gmra.mxu0 %v196
  %v1289 = vpop.f32.mrf.mxu0
  %v1290 = vadd.f32 %v1255, %v1289
  %v1291 = vpop.f32.mrf.mxu0
  %v1292 = vadd.f32 %v1256, %v1291
  %1293 = vmatmul.bf16.gmra.mxu0 %v197
  %v1294 = vpop.f32.mrf.mxu0
  %v1295 = vadd.f32 %v1257, %v1294
  %v1296 = vpop.f32.mrf.mxu0
  %v1297 = vadd.f32 %v1258, %v1296
  %1298 = vmatmul.bf16.gmra.mxu0 %v198
  %v1299 = vpop.f32.mrf.mxu0
  %v1300 = vadd.f32 %v1259, %v1299
  %v1301 = vpop.f32.mrf.mxu0
  %v1302 = vadd.f32 %v1260, %v1301
  %1303 = vmatmul.bf16.gmra.mxu0 %v199
  %v1304 = vpop.f32.mrf.mxu0
  %v1305 = vadd.f32 %v1261, %v1304
  %v1306 = vpop.f32.mrf.mxu0
  %v1307 = vadd.f32 %v1262, %v1306
  %1308 = vmatmul.bf16.gmra.mxu0 %v200
  %v1309 = vpop.f32.mrf.mxu0
  %v1310 = vadd.f32 %v1263, %v1309
  %v1311 = vpop.f32.mrf.mxu0
  %v1312 = vadd.f32 %v1264, %v1311
  %1313 = vdwg.mxu0
  %v1314 = vpack.c.bf16 %v1277, %v1275
  %v1315 = vpack.c.bf16 %v1282, %v1280
  %v1316 = vpack.c.bf16 %v1287, %v1285
  %v1317 = vpack.c.bf16 %v1292, %v1290
  %v1318 = vpack.c.bf16 %v1297, %v1295
  %v1319 = vpack.c.bf16 %v1302, %v1300
  %v1320 = vpack.c.bf16 %v1307, %v1305
  %v1321 = vpack.c.bf16 %v1312, %v1310
  %s1322 = scalar_lea.vmem %s3, 128
  %v1323 = vld [vmem:[%s1322] sm:$0xf]
  %v1324 = vld [vmem:[%s1322 + $0x4] sm:$0xf]
  %v1325 = vld [vmem:[%s1322 + $0x8] sm:$0xf]
  %v1326 = vld [vmem:[%s1322 + $0xc] sm:$0xf]
  %v1327 = vld [vmem:[%s1322 + $0x10] sm:$0xf]
  %v1328 = vld [vmem:[%s1322 + $0x14] sm:$0xf]
  %v1329 = vld [vmem:[%s1322 + $0x18] sm:$0xf]
  %v1330 = vld [vmem:[%s1322 + $0x1c] sm:$0xf]
  %v1331 = vld [vmem:[%s1322 + $0x20] sm:$0xf]
  %v1332 = vld [vmem:[%s1322 + $0x24] sm:$0xf]
  %v1333 = vld [vmem:[%s1322 + $0x28] sm:$0xf]
  %v1334 = vld [vmem:[%s1322 + $0x2c] sm:$0xf]
  %v1335 = vld [vmem:[%s1322 + $0x30] sm:$0xf]
  %v1336 = vld [vmem:[%s1322 + $0x34] sm:$0xf]
  %v1337 = vld [vmem:[%s1322 + $0x38] sm:$0xf]
  %v1338 = vld [vmem:[%s1322 + $0x3c] sm:$0xf]
  %v1339 = vperm.slane %v1223, 0
  %v1356 = vunpack.c.l.b16 %v1323
  %v1357 = vunpack.c.l.b16 %v1324
  %v1358 = vunpack.c.l.b16 %v1325
  %v1359 = vunpack.c.l.b16 %v1326
  %v1360 = vunpack.c.l.b16 %v1327
  %v1361 = vunpack.c.l.b16 %v1328
  %v1362 = vunpack.c.l.b16 %v1329
  %v1363 = vunpack.c.l.b16 %v1330
  %v1364 = vunpack.c.l.b16 %v1331
  %v1365 = vunpack.c.l.b16 %v1332
  %v1366 = vunpack.c.l.b16 %v1333
  %v1367 = vunpack.c.l.b16 %v1334
  %v1368 = vunpack.c.l.b16 %v1335
  %v1369 = vunpack.c.l.b16 %v1336
  %v1370 = vunpack.c.l.b16 %v1337
  %v1371 = vunpack.c.l.b16 %v1338
  %v1372 = vpack.c.b16 %v1357, %v1356
  %v1373 = vpack.c.b16 %v1359, %v1358
  %v1374 = vpack.c.b16 %v1361, %v1360
  %v1375 = vpack.c.b16 %v1363, %v1362
  %v1376 = vpack.c.b16 %v1365, %v1364
  %v1377 = vpack.c.b16 %v1367, %v1366
  %v1378 = vpack.c.b16 %v1369, %v1368
  %v1379 = vpack.c.b16 %v1371, %v1370
  %1388 = vmatpush.bf16.msra.mxu0 %v1379
  %1389 = vmatpush.bf16.msra.mxu0 %v1378
  %1390 = vmatpush.bf16.msra.mxu0 %v1377
  %1391 = vmatpush.bf16.msra.mxu0 %v1376
  %1392 = vmatpush.bf16.msra.mxu0 %v1375
  %1393 = vmatpush.bf16.msra.mxu0 %v1374
  %1394 = vmatpush.bf16.msra.mxu0 %v1373
  %1395 = vmatpush.bf16.msra.mxu0 %v1372
  %1396 = vmatmul.bf16.gmra.mxu0 %v1314
  %v1397 = vpop.f32.mrf.mxu0
  %v1398 = vadd.f32 %v1339, %v1397
  %v1399 = vpop.f32.mrf.mxu0
  %v1400 = vadd.f32 %v1339, %v1399
  %1401 = vmatmul.bf16.gmra.mxu0 %v1315
  %v1402 = vpop.f32.mrf.mxu0
  %v1403 = vadd.f32 %v1339, %v1402
  %v1404 = vpop.f32.mrf.mxu0
  %v1405 = vadd.f32 %v1339, %v1404
  %1406 = vmatmul.bf16.gmra.mxu0 %v1316
  %v1407 = vpop.f32.mrf.mxu0
  %v1408 = vadd.f32 %v1339, %v1407
  %v1409 = vpop.f32.mrf.mxu0
  %v1410 = vadd.f32 %v1339, %v1409
  %1411 = vmatmul.bf16.gmra.mxu0 %v1317
  %v1412 = vpop.f32.mrf.mxu0
  %v1413 = vadd.f32 %v1339, %v1412
  %v1414 = vpop.f32.mrf.mxu0
  %v1415 = vadd.f32 %v1339, %v1414
  %1416 = vmatmul.bf16.gmra.mxu0 %v1318
  %v1417 = vpop.f32.mrf.mxu0
  %v1418 = vadd.f32 %v1339, %v1417
  %v1419 = vpop.f32.mrf.mxu0
  %v1420 = vadd.f32 %v1339, %v1419
  %1421 = vmatmul.bf16.gmra.mxu0 %v1319
  %v1422 = vpop.f32.mrf.mxu0
  %v1423 = vadd.f32 %v1339, %v1422
  %v1424 = vpop.f32.mrf.mxu0
  %v1425 = vadd.f32 %v1339, %v1424
  %1426 = vmatmul.bf16.gmra.mxu0 %v1320
  %v1427 = vpop.f32.mrf.mxu0
  %v1428 = vadd.f32 %v1339, %v1427
  %v1429 = vpop.f32.mrf.mxu0
  %v1430 = vadd.f32 %v1339, %v1429
  %1431 = vmatmul.bf16.gmra.mxu0 %v1321
  %v1432 = vpop.f32.mrf.mxu0
  %v1433 = vadd.f32 %v1339, %v1432
  %v1434 = vpop.f32.mrf.mxu0
  %v1435 = vadd.f32 %v1339, %v1434
  %1436 = vdwg.mxu0
  %v1437 = vmax.f32 %v1398, 0.0
  %v1438 = vmax.f32 %v1400, 0.0
  %v1439 = vmax.f32 %v1403, 0.0
  %v1440 = vmax.f32 %v1405, 0.0
  %v1441 = vmax.f32 %v1408, 0.0
  %v1442 = vmax.f32 %v1410, 0.0
  %v1443 = vmax.f32 %v1413, 0.0
  %v1444 = vmax.f32 %v1415, 0.0
  %v1445 = vmax.f32 %v1418, 0.0
  %v1446 = vmax.f32 %v1420, 0.0
  %v1447 = vmax.f32 %v1423, 0.0
  %v1448 = vmax.f32 %v1425, 0.0
  %v1449 = vmax.f32 %v1428, 0.0
  %v1450 = vmax.f32 %v1430, 0.0
  %v1451 = vmax.f32 %v1433, 0.0
  %v1452 = vmax.f32 %v1435, 0.0
  %v1453 = vpack.c.bf16 %v1438, %v1437
  %v1454 = vpack.c.bf16 %v1440, %v1439
  %v1455 = vpack.c.bf16 %v1442, %v1441
  %v1456 = vpack.c.bf16 %v1444, %v1443
  %v1457 = vpack.c.bf16 %v1446, %v1445
  %v1458 = vpack.c.bf16 %v1448, %v1447
  %v1459 = vpack.c.bf16 %v1450, %v1449
  %v1460 = vpack.c.bf16 %v1452, %v1451
  %s1461 = scalar_lea.vmem %s4, 128
  %v1462 = vld [vmem:[%s1461] sm:$0xf]
  %v1463 = vld [vmem:[%s1461 + $0x4] sm:$0xf]
  %v1464 = vld [vmem:[%s1461 + $0x8] sm:$0xf]
  %v1465 = vld [vmem:[%s1461 + $0xc] sm:$0xf]
  %v1466 = vld [vmem:[%s1461 + $0x10] sm:$0xf]
  %v1467 = vld [vmem:[%s1461 + $0x14] sm:$0xf]
  %v1468 = vld [vmem:[%s1461 + $0x18] sm:$0xf]
  %v1469 = vld [vmem:[%s1461 + $0x1c] sm:$0xf]
  %v1470 = vld [vmem:[%s1461 + $0x20] sm:$0xf]
  %v1471 = vld [vmem:[%s1461 + $0x24] sm:$0xf]
  %v1472 = vld [vmem:[%s1461 + $0x28] sm:$0xf]
  %v1473 = vld [vmem:[%s1461 + $0x2c] sm:$0xf]
  %v1474 = vld [vmem:[%s1461 + $0x30] sm:$0xf]
  %v1475 = vld [vmem:[%s1461 + $0x34] sm:$0xf]
  %v1476 = vld [vmem:[%s1461 + $0x38] sm:$0xf]
  %v1477 = vld [vmem:[%s1461 + $0x3c] sm:$0xf]
  %v1478 = vperm.slane %v1223, 1
  %v1495 = vunpack.c.l.b16 %v1462
  %v1496 = vunpack.c.l.b16 %v1463
  %v1497 = vunpack.c.l.b16 %v1464
  %v1498 = vunpack.c.l.b16 %v1465
  %v1499 = vunpack.c.l.b16 %v1466
  %v1500 = vunpack.c.l.b16 %v1467
  %v1501 = vunpack.c.l.b16 %v1468
  %v1502 = vunpack.c.l.b16 %v1469
  %v1503 = vunpack.c.l.b16 %v1470
  %v1504 = vunpack.c.l.b16 %v1471
  %v1505 = vunpack.c.l.b16 %v1472
  %v1506 = vunpack.c.l.b16 %v1473
  %v1507 = vunpack.c.l.b16 %v1474
  %v1508 = vunpack.c.l.b16 %v1475
  %v1509 = vunpack.c.l.b16 %v1476
  %v1510 = vunpack.c.l.b16 %v1477
  %v1511 = vpack.c.b16 %v1496, %v1495
  %v1512 = vpack.c.b16 %v1498, %v1497
  %v1513 = vpack.c.b16 %v1500, %v1499
  %v1514 = vpack.c.b16 %v1502, %v1501
  %v1515 = vpack.c.b16 %v1504, %v1503
  %v1516 = vpack.c.b16 %v1506, %v1505
  %v1517 = vpack.c.b16 %v1508, %v1507
  %v1518 = vpack.c.b16 %v1510, %v1509
  %1527 = vmatpush.bf16.msra.mxu0 %v1518
  %1528 = vmatpush.bf16.msra.mxu0 %v1517
  %1529 = vmatpush.bf16.msra.mxu0 %v1516
  %1530 = vmatpush.bf16.msra.mxu0 %v1515
  %1531 = vmatpush.bf16.msra.mxu0 %v1514
  %1532 = vmatpush.bf16.msra.mxu0 %v1513
  %1533 = vmatpush.bf16.msra.mxu0 %v1512
  %1534 = vmatpush.bf16.msra.mxu0 %v1511
  %1535 = vmatmul.bf16.gmra.mxu0 %v1453
  %v1536 = vpop.f32.mrf.mxu0
  %v1537 = vadd.f32 %v1478, %v1536
  %v1538 = vpop.f32.mrf.mxu0
  %v1539 = vadd.f32 %v1478, %v1538
  %1540 = vmatmul.bf16.gmra.mxu0 %v1454
  %v1541 = vpop.f32.mrf.mxu0
  %v1542 = vadd.f32 %v1478, %v1541
  %v1543 = vpop.f32.mrf.mxu0
  %v1544 = vadd.f32 %v1478, %v1543
  %1545 = vmatmul.bf16.gmra.mxu0 %v1455
  %v1546 = vpop.f32.mrf.mxu0
  %v1547 = vadd.f32 %v1478, %v1546
  %v1548 = vpop.f32.mrf.mxu0
  %v1549 = vadd.f32 %v1478, %v1548
  %1550 = vmatmul.bf16.gmra.mxu0 %v1456
  %v1551 = vpop.f32.mrf.mxu0
  %v1552 = vadd.f32 %v1478, %v1551
  %v1553 = vpop.f32.mrf.mxu0
  %v1554 = vadd.f32 %v1478, %v1553
  %1555 = vmatmul.bf16.gmra.mxu0 %v1457
  %v1556 = vpop.f32.mrf.mxu0
  %v1557 = vadd.f32 %v1478, %v1556
  %v1558 = vpop.f32.mrf.mxu0
  %v1559 = vadd.f32 %v1478, %v1558
  %1560 = vmatmul.bf16.gmra.mxu0 %v1458
  %v1561 = vpop.f32.mrf.mxu0
  %v1562 = vadd.f32 %v1478, %v1561
  %v1563 = vpop.f32.mrf.mxu0
  %v1564 = vadd.f32 %v1478, %v1563
  %1565 = vmatmul.bf16.gmra.mxu0 %v1459
  %v1566 = vpop.f32.mrf.mxu0
  %v1567 = vadd.f32 %v1478, %v1566
  %v1568 = vpop.f32.mrf.mxu0
  %v1569 = vadd.f32 %v1478, %v1568
  %1570 = vmatmul.bf16.gmra.mxu0 %v1460
  %v1571 = vpop.f32.mrf.mxu0
  %v1572 = vadd.f32 %v1478, %v1571
  %v1573 = vpop.f32.mrf.mxu0
  %v1574 = vadd.f32 %v1478, %v1573
  %1575 = vdwg.mxu0
  %v1576 = vmul.f32 %v1537, %v104
  %v1577 = vmul.f32 %v1539, %v105
  %v1578 = vmul.f32 %v1542, %v106
  %v1579 = vmul.f32 %v1544, %v107
  %v1580 = vmul.f32 %v1547, %v108
  %v1581 = vmul.f32 %v1549, %v109
  %v1582 = vmul.f32 %v1552, %v110
  %v1583 = vmul.f32 %v1554, %v111
  %v1584 = vmul.f32 %v1557, %v112
  %v1585 = vmul.f32 %v1559, %v113
  %v1586 = vmul.f32 %v1562, %v114
  %v1587 = vmul.f32 %v1564, %v115
  %v1588 = vmul.f32 %v1567, %v116
  %v1589 = vmul.f32 %v1569, %v117
  %v1590 = vmul.f32 %v1572, %v118
  %v1591 = vmul.f32 %v1574, %v119
  %v1592 = vadd.f32 %v1576, %v1577
  %v1593 = vadd.f32 %v1592, %v1578
  %v1594 = vadd.f32 %v1593, %v1579
  %v1595 = vadd.f32 %v1594, %v1580
  %v1596 = vadd.f32 %v1595, %v1581
  %v1597 = vadd.f32 %v1596, %v1582
  %v1598 = vadd.f32 %v1597, %v1583
  %v1599 = vadd.f32 %v1598, %v1584
  %v1600 = vadd.f32 %v1599, %v1585
  %v1601 = vadd.f32 %v1600, %v1586
  %v1602 = vadd.f32 %v1601, %v1587
  %v1603 = vadd.f32 %v1602, %v1588
  %v1604 = vadd.f32 %v1603, %v1589
  %v1605 = vadd.f32 %v1604, %v1590
  %v1606 = vadd.f32 %v1605, %v1591
  %v1607 = vrot.slane %v1606, 4
  %v1608 = vadd.f32 %v1606, %v1607
  %v1609 = vrot.slane %v1608, 2
  %v1610 = vadd.f32 %v1608, %v1609
  %v1611 = vrot.slane %v1610, 1
  %v1612 = vadd.f32 %v1610, %v1611
  %v1613 = vmul.f32 %v1612, 0.0625
  %v1614 = vsub.f32 %v1537, %v1613
  %v1615 = vsub.f32 %v1539, %v1613
  %v1616 = vsub.f32 %v1542, %v1613
  %v1617 = vsub.f32 %v1544, %v1613
  %v1618 = vsub.f32 %v1547, %v1613
  %v1619 = vsub.f32 %v1549, %v1613
  %v1620 = vsub.f32 %v1552, %v1613
  %v1621 = vsub.f32 %v1554, %v1613
  %v1622 = vsub.f32 %v1557, %v1613
  %v1623 = vsub.f32 %v1559, %v1613
  %v1624 = vsub.f32 %v1562, %v1613
  %v1625 = vsub.f32 %v1564, %v1613
  %v1626 = vsub.f32 %v1567, %v1613
  %v1627 = vsub.f32 %v1569, %v1613
  %v1628 = vsub.f32 %v1572, %v1613
  %v1629 = vsub.f32 %v1574, %v1613
  %v1630 = vmul.f32 %v1614, %v104
  %v1631 = vmul.f32 %v1615, %v105
  %v1632 = vmul.f32 %v1616, %v106
  %v1633 = vmul.f32 %v1617, %v107
  %v1634 = vmul.f32 %v1618, %v108
  %v1635 = vmul.f32 %v1619, %v109
  %v1636 = vmul.f32 %v1620, %v110
  %v1637 = vmul.f32 %v1621, %v111
  %v1638 = vmul.f32 %v1622, %v112
  %v1639 = vmul.f32 %v1623, %v113
  %v1640 = vmul.f32 %v1624, %v114
  %v1641 = vmul.f32 %v1625, %v115
  %v1642 = vmul.f32 %v1626, %v116
  %v1643 = vmul.f32 %v1627, %v117
  %v1644 = vmul.f32 %v1628, %v118
  %v1645 = vmul.f32 %v1629, %v119
  %v1646 = vmul.f32 %v1630, %v1630
  %v1647 = vmul.f32 %v1631, %v1631
  %v1648 = vmul.f32 %v1632, %v1632
  %v1649 = vmul.f32 %v1633, %v1633
  %v1650 = vmul.f32 %v1634, %v1634
  %v1651 = vmul.f32 %v1635, %v1635
  %v1652 = vmul.f32 %v1636, %v1636
  %v1653 = vmul.f32 %v1637, %v1637
  %v1654 = vmul.f32 %v1638, %v1638
  %v1655 = vmul.f32 %v1639, %v1639
  %v1656 = vmul.f32 %v1640, %v1640
  %v1657 = vmul.f32 %v1641, %v1641
  %v1658 = vmul.f32 %v1642, %v1642
  %v1659 = vmul.f32 %v1643, %v1643
  %v1660 = vmul.f32 %v1644, %v1644
  %v1661 = vmul.f32 %v1645, %v1645
  %v1662 = vadd.f32 %v1646, %v1647
  %v1663 = vadd.f32 %v1662, %v1648
  %v1664 = vadd.f32 %v1663, %v1649
  %v1665 = vadd.f32 %v1664, %v1650
  %v1666 = vadd.f32 %v1665, %v1651
  %v1667 = vadd.f32 %v1666, %v1652
  %v1668 = vadd.f32 %v1667, %v1653
  %v1669 = vadd.f32 %v1668, %v1654
  %v1670 = vadd.f32 %v1669, %v1655
  %v1671 = vadd.f32 %v1670, %v1656
  %v1672 = vadd.f32 %v1671, %v1657
  %v1673 = vadd.f32 %v1672, %v1658
  %v1674 = vadd.f32 %v1673, %v1659
  %v1675 = vadd.f32 %v1674, %v1660
  %v1676 = vadd.f32 %v1675, %v1661
  %v1677 = vrot.slane %v1676, 4
  %v1678 = vadd.f32 %v1676, %v1677
  %v1679 = vrot.slane %v1678, 2
  %v1680 = vadd.f32 %v1678, %v1679
  %v1681 = vrot.slane %v1680, 1
  %v1682 = vadd.f32 %v1680, %v1681
  %v1683 = vmul.f32 %v1682, 0.0625
  %v1684 = vadd.f32 %v1683, 1e-05
  %v1685 = vrsqrt.pop %v1684
  %v1686 = vmul.f32 %v1685, %v1684
  %v1687 = vmul.f32 %v1686, %v1685
  %v1688 = vmul.f32 0.5, %v1687
  %v1689 = vsub.f32 1.5, %v1688
  %v1690 = vmul.f32 %v1685, %v1689
  %vm1691 = vweird.f32 %v1684
  %vm1692 = vweird.f32 %v1685
  %vm1693 = vmor %vm1691, %vm1692
  %v1694 = vsel %vm1693, %v1685, %v1690
  %v1695 = vmul.f32 %v1223, %v1694
  %v1696 = vmul.f32 %v1613, %v1695
  %v1698 = vrot.slane %v1696, 7
  %v1700 = vsub.f32 %v1223, %v1698
  %v1701 = vperm.slane %v1695, 2
  %v1702 = vmul.f32 %v1537, %v1701
  %v1703 = vmul.f32 %v1539, %v1701
  %v1704 = vmul.f32 %v1542, %v1701
  %v1705 = vmul.f32 %v1544, %v1701
  %v1706 = vmul.f32 %v1547, %v1701
  %v1707 = vmul.f32 %v1549, %v1701
  %v1708 = vmul.f32 %v1552, %v1701
  %v1709 = vmul.f32 %v1554, %v1701
  %v1710 = vmul.f32 %v1557, %v1701
  %v1711 = vmul.f32 %v1559, %v1701
  %v1712 = vmul.f32 %v1562, %v1701
  %v1713 = vmul.f32 %v1564, %v1701
  %v1714 = vmul.f32 %v1567, %v1701
  %v1715 = vmul.f32 %v1569, %v1701
  %v1716 = vmul.f32 %v1572, %v1701
  %v1717 = vmul.f32 %v1574, %v1701
  %v1718 = vperm.slane %v1700, 3
  %v1719 = vadd.f32 %v1702, %v1718
  %v1720 = vadd.f32 %v1703, %v1718
  %v1721 = vadd.f32 %v1704, %v1718
  %v1722 = vadd.f32 %v1705, %v1718
  %v1723 = vadd.f32 %v1706, %v1718
  %v1724 = vadd.f32 %v1707, %v1718
  %v1725 = vadd.f32 %v1708, %v1718
  %v1726 = vadd.f32 %v1709, %v1718
  %v1727 = vadd.f32 %v1710, %v1718
  %v1728 = vadd.f32 %v1711, %v1718
  %v1729 = vadd.f32 %v1712, %v1718
  %v1730 = vadd.f32 %v1713, %v1718
  %v1731 = vadd.f32 %v1714, %v1718
  %v1732 = vadd.f32 %v1715, %v1718
  %v1733 = vadd.f32 %v1716, %v1718
  %v1734 = vadd.f32 %v1717, %v1718
  %v1735 = vmax.f32 %v1719, 0.0
  %v1736 = vmax.f32 %v1720, 0.0
  %v1737 = vmax.f32 %v1721, 0.0
  %v1738 = vmax.f32 %v1722, 0.0
  %v1739 = vmax.f32 %v1723, 0.0
  %v1740 = vmax.f32 %v1724, 0.0
  %v1741 = vmax.f32 %v1725, 0.0
  %v1742 = vmax.f32 %v1726, 0.0
  %v1743 = vmax.f32 %v1727, 0.0
  %v1744 = vmax.f32 %v1728, 0.0
  %v1745 = vmax.f32 %v1729, 0.0
  %v1746 = vmax.f32 %v1730, 0.0
  %v1747 = vmax.f32 %v1731, 0.0
  %v1748 = vmax.f32 %v1732, 0.0
  %v1749 = vmax.f32 %v1733, 0.0
  %v1750 = vmax.f32 %v1734, 0.0
  %s1751 = scalar_lea.vmem %s5, 24
  %v1752 = vld [vmem:[%s1751] sm:$0xff]
  %v1753 = vpack.c.bf16 %v1736, %v1735
  %v1754 = vpack.c.bf16 %v1738, %v1737
  %v1755 = vpack.c.bf16 %v1740, %v1739
  %v1756 = vpack.c.bf16 %v1742, %v1741
  %v1757 = vpack.c.bf16 %v1744, %v1743
  %v1758 = vpack.c.bf16 %v1746, %v1745
  %v1759 = vpack.c.bf16 %v1748, %v1747
  %v1760 = vpack.c.bf16 %v1750, %v1749
  %s1761 = scalar_lea.vmem %s2, 192
  %v1762 = vld [vmem:[%s1761] sm:$0xf]
  %v1763 = vld [vmem:[%s1761 + $0x4] sm:$0xf]
  %v1764 = vld [vmem:[%s1761 + $0x8] sm:$0xf]
  %v1765 = vld [vmem:[%s1761 + $0xc] sm:$0xf]
  %v1766 = vld [vmem:[%s1761 + $0x10] sm:$0xf]
  %v1767 = vld [vmem:[%s1761 + $0x14] sm:$0xf]
  %v1768 = vld [vmem:[%s1761 + $0x18] sm:$0xf]
  %v1769 = vld [vmem:[%s1761 + $0x1c] sm:$0xf]
  %v1770 = vld [vmem:[%s1761 + $0x20] sm:$0xf]
  %v1771 = vld [vmem:[%s1761 + $0x24] sm:$0xf]
  %v1772 = vld [vmem:[%s1761 + $0x28] sm:$0xf]
  %v1773 = vld [vmem:[%s1761 + $0x2c] sm:$0xf]
  %v1774 = vld [vmem:[%s1761 + $0x30] sm:$0xf]
  %v1775 = vld [vmem:[%s1761 + $0x34] sm:$0xf]
  %v1776 = vld [vmem:[%s1761 + $0x38] sm:$0xf]
  %v1777 = vld [vmem:[%s1761 + $0x3c] sm:$0xf]
  %v1778 = vunpack.c.l.bf16 %v1762
  %v1779 = vunpack.c.l.bf16 %v1763
  %v1780 = vunpack.c.l.bf16 %v1764
  %v1781 = vunpack.c.l.bf16 %v1765
  %v1782 = vunpack.c.l.bf16 %v1766
  %v1783 = vunpack.c.l.bf16 %v1767
  %v1784 = vunpack.c.l.bf16 %v1768
  %v1785 = vunpack.c.l.bf16 %v1769
  %v1786 = vunpack.c.l.bf16 %v1770
  %v1787 = vunpack.c.l.bf16 %v1771
  %v1788 = vunpack.c.l.bf16 %v1772
  %v1789 = vunpack.c.l.bf16 %v1773
  %v1790 = vunpack.c.l.bf16 %v1774
  %v1791 = vunpack.c.l.bf16 %v1775
  %v1792 = vunpack.c.l.bf16 %v1776
  %v1793 = vunpack.c.l.bf16 %v1777
  %1794 = vmatpush.bf16.msra.mxu0 %v1760
  %1795 = vmatpush.bf16.msra.mxu0 %v1759
  %1796 = vmatpush.bf16.msra.mxu0 %v1758
  %1797 = vmatpush.bf16.msra.mxu0 %v1757
  %1798 = vmatpush.bf16.msra.mxu0 %v1756
  %1799 = vmatpush.bf16.msra.mxu0 %v1755
  %1800 = vmatpush.bf16.msra.mxu0 %v1754
  %1801 = vmatpush.bf16.msra.mxu0 %v1753
  %1802 = vmatmul.bf16.gmra.mxu0 %v193
  %v1803 = vpop.f32.mrf.mxu0
  %v1804 = vadd.f32 %v1778, %v1803
  %v1805 = vpop.f32.mrf.mxu0
  %v1806 = vadd.f32 %v1779, %v1805
  %1807 = vmatmul.bf16.gmra.mxu0 %v194
  %v1808 = vpop.f32.mrf.mxu0
  %v1809 = vadd.f32 %v1780, %v1808
  %v1810 = vpop.f32.mrf.mxu0
  %v1811 = vadd.f32 %v1781, %v1810
  %1812 = vmatmul.bf16.gmra.mxu0 %v195
  %v1813 = vpop.f32.mrf.mxu0
  %v1814 = vadd.f32 %v1782, %v1813
  %v1815 = vpop.f32.mrf.mxu0
  %v1816 = vadd.f32 %v1783, %v1815
  %1817 = vmatmul.bf16.gmra.mxu0 %v196
  %v1818 = vpop.f32.mrf.mxu0
  %v1819 = vadd.f32 %v1784, %v1818
  %v1820 = vpop.f32.mrf.mxu0
  %v1821 = vadd.f32 %v1785, %v1820
  %1822 = vmatmul.bf16.gmra.mxu0 %v197
  %v1823 = vpop.f32.mrf.mxu0
  %v1824 = vadd.f32 %v1786, %v1823
  %v1825 = vpop.f32.mrf.mxu0
  %v1826 = vadd.f32 %v1787, %v1825
  %1827 = vmatmul.bf16.gmra.mxu0 %v198
  %v1828 = vpop.f32.mrf.mxu0
  %v1829 = vadd.f32 %v1788, %v1828
  %v1830 = vpop.f32.mrf.mxu0
  %v1831 = vadd.f32 %v1789, %v1830
  %1832 = vmatmul.bf16.gmra.mxu0 %v199
  %v1833 = vpop.f32.mrf.mxu0
  %v1834 = vadd.f32 %v1790, %v1833
  %v1835 = vpop.f32.mrf.mxu0
  %v1836 = vadd.f32 %v1791, %v1835
  %1837 = vmatmul.bf16.gmra.mxu0 %v200
  %v1838 = vpop.f32.mrf.mxu0
  %v1839 = vadd.f32 %v1792, %v1838
  %v1840 = vpop.f32.mrf.mxu0
  %v1841 = vadd.f32 %v1793, %v1840
  %1842 = vdwg.mxu0
  %v1843 = vpack.c.bf16 %v1806, %v1804
  %v1844 = vpack.c.bf16 %v1811, %v1809
  %v1845 = vpack.c.bf16 %v1816, %v1814
  %v1846 = vpack.c.bf16 %v1821, %v1819
  %v1847 = vpack.c.bf16 %v1826, %v1824
  %v1848 = vpack.c.bf16 %v1831, %v1829
  %v1849 = vpack.c.bf16 %v1836, %v1834
  %v1850 = vpack.c.bf16 %v1841, %v1839
  %s1851 = scalar_lea.vmem %s3, 192
  %v1852 = vld [vmem:[%s1851] sm:$0xf]
  %v1853 = vld [vmem:[%s1851 + $0x4] sm:$0xf]
  %v1854 = vld [vmem:[%s1851 + $0x8] sm:$0xf]
  %v1855 = vld [vmem:[%s1851 + $0xc] sm:$0xf]
  %v1856 = vld [vmem:[%s1851 + $0x10] sm:$0xf]
  %v1857 = vld [vmem:[%s1851 + $0x14] sm:$0xf]
  %v1858 = vld [vmem:[%s1851 + $0x18] sm:$0xf]
  %v1859 = vld [vmem:[%s1851 + $0x1c] sm:$0xf]
  %v1860 = vld [vmem:[%s1851 + $0x20] sm:$0xf]
  %v1861 = vld [vmem:[%s1851 + $0x24] sm:$0xf]
  %v1862 = vld [vmem:[%s1851 + $0x28] sm:$0xf]
  %v1863 = vld [vmem:[%s1851 + $0x2c] sm:$0xf]
  %v1864 = vld [vmem:[%s1851 + $0x30] sm:$0xf]
  %v1865 = vld [vmem:[%s1851 + $0x34] sm:$0xf]
  %v1866 = vld [vmem:[%s1851 + $0x38] sm:$0xf]
  %v1867 = vld [vmem:[%s1851 + $0x3c] sm:$0xf]
  %v1868 = vperm.slane %v1752, 0
  %v1885 = vunpack.c.l.b16 %v1852
  %v1886 = vunpack.c.l.b16 %v1853
  %v1887 = vunpack.c.l.b16 %v1854
  %v1888 = vunpack.c.l.b16 %v1855
  %v1889 = vunpack.c.l.b16 %v1856
  %v1890 = vunpack.c.l.b16 %v1857
  %v1891 = vunpack.c.l.b16 %v1858
  %v1892 = vunpack.c.l.b16 %v1859
  %v1893 = vunpack.c.l.b16 %v1860
  %v1894 = vunpack.c.l.b16 %v1861
  %v1895 = vunpack.c.l.b16 %v1862
  %v1896 = vunpack.c.l.b16 %v1863
  %v1897 = vunpack.c.l.b16 %v1864
  %v1898 = vunpack.c.l.b16 %v1865
  %v1899 = vunpack.c.l.b16 %v1866
  %v1900 = vunpack.c.l.b16 %v1867
  %v1901 = vpack.c.b16 %v1886, %v1885
  %v1902 = vpack.c.b16 %v1888, %v1887
  %v1903 = vpack.c.b16 %v1890, %v1889
  %v1904 = vpack.c.b16 %v1892, %v1891
  %v1905 = vpack.c.b16 %v1894, %v1893
  %v1906 = vpack.c.b16 %v1896, %v1895
  %v1907 = vpack.c.b16 %v1898, %v1897
  %v1908 = vpack.c.b16 %v1900, %v1899
  %1917 = vmatpush.bf16.msra.mxu0 %v1908
  %1918 = vmatpush.bf16.msra.mxu0 %v1907
  %1919 = vmatpush.bf16.msra.mxu0 %v1906
  %1920 = vmatpush.bf16.msra.mxu0 %v1905
  %1921 = vmatpush.bf16.msra.mxu0 %v1904
  %1922 = vmatpush.bf16.msra.mxu0 %v1903
  %1923 = vmatpush.bf16.msra.mxu0 %v1902
  %1924 = vmatpush.bf16.msra.mxu0 %v1901
  %1925 = vmatmul.bf16.gmra.mxu0 %v1843
  %v1926 = vpop.f32.mrf.mxu0
  %v1927 = vadd.f32 %v1868, %v1926
  %v1928 = vpop.f32.mrf.mxu0
  %v1929 = vadd.f32 %v1868, %v1928
  %1930 = vmatmul.bf16.gmra.mxu0 %v1844
  %v1931 = vpop.f32.mrf.mxu0
  %v1932 = vadd.f32 %v1868, %v1931
  %v1933 = vpop.f32.mrf.mxu0
  %v1934 = vadd.f32 %v1868, %v1933
  %1935 = vmatmul.bf16.gmra.mxu0 %v1845
  %v1936 = vpop.f32.mrf.mxu0
  %v1937 = vadd.f32 %v1868, %v1936
  %v1938 = vpop.f32.mrf.mxu0
  %v1939 = vadd.f32 %v1868, %v1938
  %1940 = vmatmul.bf16.gmra.mxu0 %v1846
  %v1941 = vpop.f32.mrf.mxu0
  %v1942 = vadd.f32 %v1868, %v1941
  %v1943 = vpop.f32.mrf.mxu0
  %v1944 = vadd.f32 %v1868, %v1943
  %1945 = vmatmul.bf16.gmra.mxu0 %v1847
  %v1946 = vpop.f32.mrf.mxu0
  %v1947 = vadd.f32 %v1868, %v1946
  %v1948 = vpop.f32.mrf.mxu0
  %v1949 = vadd.f32 %v1868, %v1948
  %1950 = vmatmul.bf16.gmra.mxu0 %v1848
  %v1951 = vpop.f32.mrf.mxu0
  %v1952 = vadd.f32 %v1868, %v1951
  %v1953 = vpop.f32.mrf.mxu0
  %v1954 = vadd.f32 %v1868, %v1953
  %1955 = vmatmul.bf16.gmra.mxu0 %v1849
  %v1956 = vpop.f32.mrf.mxu0
  %v1957 = vadd.f32 %v1868, %v1956
  %v1958 = vpop.f32.mrf.mxu0
  %v1959 = vadd.f32 %v1868, %v1958
  %1960 = vmatmul.bf16.gmra.mxu0 %v1850
  %v1961 = vpop.f32.mrf.mxu0
  %v1962 = vadd.f32 %v1868, %v1961
  %v1963 = vpop.f32.mrf.mxu0
  %v1964 = vadd.f32 %v1868, %v1963
  %1965 = vdwg.mxu0
  %v1966 = vmax.f32 %v1927, 0.0
  %v1967 = vmax.f32 %v1929, 0.0
  %v1968 = vmax.f32 %v1932, 0.0
  %v1969 = vmax.f32 %v1934, 0.0
  %v1970 = vmax.f32 %v1937, 0.0
  %v1971 = vmax.f32 %v1939, 0.0
  %v1972 = vmax.f32 %v1942, 0.0
  %v1973 = vmax.f32 %v1944, 0.0
  %v1974 = vmax.f32 %v1947, 0.0
  %v1975 = vmax.f32 %v1949, 0.0
  %v1976 = vmax.f32 %v1952, 0.0
  %v1977 = vmax.f32 %v1954, 0.0
  %v1978 = vmax.f32 %v1957, 0.0
  %v1979 = vmax.f32 %v1959, 0.0
  %v1980 = vmax.f32 %v1962, 0.0
  %v1981 = vmax.f32 %v1964, 0.0
  %v1982 = vpack.c.bf16 %v1967, %v1966
  %v1983 = vpack.c.bf16 %v1969, %v1968
  %v1984 = vpack.c.bf16 %v1971, %v1970
  %v1985 = vpack.c.bf16 %v1973, %v1972
  %v1986 = vpack.c.bf16 %v1975, %v1974
  %v1987 = vpack.c.bf16 %v1977, %v1976
  %v1988 = vpack.c.bf16 %v1979, %v1978
  %v1989 = vpack.c.bf16 %v1981, %v1980
  %s1990 = scalar_lea.vmem %s4, 192
  %v1991 = vld [vmem:[%s1990] sm:$0xf]
  %v1992 = vld [vmem:[%s1990 + $0x4] sm:$0xf]
  %v1993 = vld [vmem:[%s1990 + $0x8] sm:$0xf]
  %v1994 = vld [vmem:[%s1990 + $0xc] sm:$0xf]
  %v1995 = vld [vmem:[%s1990 + $0x10] sm:$0xf]
  %v1996 = vld [vmem:[%s1990 + $0x14] sm:$0xf]
  %v1997 = vld [vmem:[%s1990 + $0x18] sm:$0xf]
  %v1998 = vld [vmem:[%s1990 + $0x1c] sm:$0xf]
  %v1999 = vld [vmem:[%s1990 + $0x20] sm:$0xf]
  %v2000 = vld [vmem:[%s1990 + $0x24] sm:$0xf]
  %v2001 = vld [vmem:[%s1990 + $0x28] sm:$0xf]
  %v2002 = vld [vmem:[%s1990 + $0x2c] sm:$0xf]
  %v2003 = vld [vmem:[%s1990 + $0x30] sm:$0xf]
  %v2004 = vld [vmem:[%s1990 + $0x34] sm:$0xf]
  %v2005 = vld [vmem:[%s1990 + $0x38] sm:$0xf]
  %v2006 = vld [vmem:[%s1990 + $0x3c] sm:$0xf]
  %v2007 = vperm.slane %v1752, 1
  %v2024 = vunpack.c.l.b16 %v1991
  %v2025 = vunpack.c.l.b16 %v1992
  %v2026 = vunpack.c.l.b16 %v1993
  %v2027 = vunpack.c.l.b16 %v1994
  %v2028 = vunpack.c.l.b16 %v1995
  %v2029 = vunpack.c.l.b16 %v1996
  %v2030 = vunpack.c.l.b16 %v1997
  %v2031 = vunpack.c.l.b16 %v1998
  %v2032 = vunpack.c.l.b16 %v1999
  %v2033 = vunpack.c.l.b16 %v2000
  %v2034 = vunpack.c.l.b16 %v2001
  %v2035 = vunpack.c.l.b16 %v2002
  %v2036 = vunpack.c.l.b16 %v2003
  %v2037 = vunpack.c.l.b16 %v2004
  %v2038 = vunpack.c.l.b16 %v2005
  %v2039 = vunpack.c.l.b16 %v2006
  %v2040 = vpack.c.b16 %v2025, %v2024
  %v2041 = vpack.c.b16 %v2027, %v2026
  %v2042 = vpack.c.b16 %v2029, %v2028
  %v2043 = vpack.c.b16 %v2031, %v2030
  %v2044 = vpack.c.b16 %v2033, %v2032
  %v2045 = vpack.c.b16 %v2035, %v2034
  %v2046 = vpack.c.b16 %v2037, %v2036
  %v2047 = vpack.c.b16 %v2039, %v2038
  %2056 = vmatpush.bf16.msra.mxu0 %v2047
  %2057 = vmatpush.bf16.msra.mxu0 %v2046
  %2058 = vmatpush.bf16.msra.mxu0 %v2045
  %2059 = vmatpush.bf16.msra.mxu0 %v2044
  %2060 = vmatpush.bf16.msra.mxu0 %v2043
  %2061 = vmatpush.bf16.msra.mxu0 %v2042
  %2062 = vmatpush.bf16.msra.mxu0 %v2041
  %2063 = vmatpush.bf16.msra.mxu0 %v2040
  %2064 = vmatmul.bf16.gmra.mxu0 %v1982
  %v2065 = vpop.f32.mrf.mxu0
  %v2066 = vadd.f32 %v2007, %v2065
  %v2067 = vpop.f32.mrf.mxu0
  %v2068 = vadd.f32 %v2007, %v2067
  %2069 = vmatmul.bf16.gmra.mxu0 %v1983
  %v2070 = vpop.f32.mrf.mxu0
  %v2071 = vadd.f32 %v2007, %v2070
  %v2072 = vpop.f32.mrf.mxu0
  %v2073 = vadd.f32 %v2007, %v2072
  %2074 = vmatmul.bf16.gmra.mxu0 %v1984
  %v2075 = vpop.f32.mrf.mxu0
  %v2076 = vadd.f32 %v2007, %v2075
  %v2077 = vpop.f32.mrf.mxu0
  %v2078 = vadd.f32 %v2007, %v2077
  %2079 = vmatmul.bf16.gmra.mxu0 %v1985
  %v2080 = vpop.f32.mrf.mxu0
  %v2081 = vadd.f32 %v2007, %v2080
  %v2082 = vpop.f32.mrf.mxu0
  %v2083 = vadd.f32 %v2007, %v2082
  %2084 = vmatmul.bf16.gmra.mxu0 %v1986
  %v2085 = vpop.f32.mrf.mxu0
  %v2086 = vadd.f32 %v2007, %v2085
  %v2087 = vpop.f32.mrf.mxu0
  %v2088 = vadd.f32 %v2007, %v2087
  %2089 = vmatmul.bf16.gmra.mxu0 %v1987
  %v2090 = vpop.f32.mrf.mxu0
  %v2091 = vadd.f32 %v2007, %v2090
  %v2092 = vpop.f32.mrf.mxu0
  %v2093 = vadd.f32 %v2007, %v2092
  %2094 = vmatmul.bf16.gmra.mxu0 %v1988
  %v2095 = vpop.f32.mrf.mxu0
  %v2096 = vadd.f32 %v2007, %v2095
  %v2097 = vpop.f32.mrf.mxu0
  %v2098 = vadd.f32 %v2007, %v2097
  %2099 = vmatmul.bf16.gmra.mxu0 %v1989
  %v2100 = vpop.f32.mrf.mxu0
  %v2101 = vadd.f32 %v2007, %v2100
  %v2102 = vpop.f32.mrf.mxu0
  %v2103 = vadd.f32 %v2007, %v2102
  %2104 = vdwg.mxu0
  %v2105 = vmul.f32 %v2066, %v104
  %v2106 = vmul.f32 %v2068, %v105
  %v2107 = vmul.f32 %v2071, %v106
  %v2108 = vmul.f32 %v2073, %v107
  %v2109 = vmul.f32 %v2076, %v108
  %v2110 = vmul.f32 %v2078, %v109
  %v2111 = vmul.f32 %v2081, %v110
  %v2112 = vmul.f32 %v2083, %v111
  %v2113 = vmul.f32 %v2086, %v112
  %v2114 = vmul.f32 %v2088, %v113
  %v2115 = vmul.f32 %v2091, %v114
  %v2116 = vmul.f32 %v2093, %v115
  %v2117 = vmul.f32 %v2096, %v116
  %v2118 = vmul.f32 %v2098, %v117
  %v2119 = vmul.f32 %v2101, %v118
  %v2120 = vmul.f32 %v2103, %v119
  %v2121 = vadd.f32 %v2105, %v2106
  %v2122 = vadd.f32 %v2121, %v2107
  %v2123 = vadd.f32 %v2122, %v2108
  %v2124 = vadd.f32 %v2123, %v2109
  %v2125 = vadd.f32 %v2124, %v2110
  %v2126 = vadd.f32 %v2125, %v2111
  %v2127 = vadd.f32 %v2126, %v2112
  %v2128 = vadd.f32 %v2127, %v2113
  %v2129 = vadd.f32 %v2128, %v2114
  %v2130 = vadd.f32 %v2129, %v2115
  %v2131 = vadd.f32 %v2130, %v2116
  %v2132 = vadd.f32 %v2131, %v2117
  %v2133 = vadd.f32 %v2132, %v2118
  %v2134 = vadd.f32 %v2133, %v2119
  %v2135 = vadd.f32 %v2134, %v2120
  %v2136 = vrot.slane %v2135, 4
  %v2137 = vadd.f32 %v2135, %v2136
  %v2138 = vrot.slane %v2137, 2
  %v2139 = vadd.f32 %v2137, %v2138
  %v2140 = vrot.slane %v2139, 1
  %v2141 = vadd.f32 %v2139, %v2140
  %v2142 = vmul.f32 %v2141, 0.0625
  %v2143 = vsub.f32 %v2066, %v2142
  %v2144 = vsub.f32 %v2068, %v2142
  %v2145 = vsub.f32 %v2071, %v2142
  %v2146 = vsub.f32 %v2073, %v2142
  %v2147 = vsub.f32 %v2076, %v2142
  %v2148 = vsub.f32 %v2078, %v2142
  %v2149 = vsub.f32 %v2081, %v2142
  %v2150 = vsub.f32 %v2083, %v2142
  %v2151 = vsub.f32 %v2086, %v2142
  %v2152 = vsub.f32 %v2088, %v2142
  %v2153 = vsub.f32 %v2091, %v2142
  %v2154 = vsub.f32 %v2093, %v2142
  %v2155 = vsub.f32 %v2096, %v2142
  %v2156 = vsub.f32 %v2098, %v2142
  %v2157 = vsub.f32 %v2101, %v2142
  %v2158 = vsub.f32 %v2103, %v2142
  %v2159 = vmul.f32 %v2143, %v104
  %v2160 = vmul.f32 %v2144, %v105
  %v2161 = vmul.f32 %v2145, %v106
  %v2162 = vmul.f32 %v2146, %v107
  %v2163 = vmul.f32 %v2147, %v108
  %v2164 = vmul.f32 %v2148, %v109
  %v2165 = vmul.f32 %v2149, %v110
  %v2166 = vmul.f32 %v2150, %v111
  %v2167 = vmul.f32 %v2151, %v112
  %v2168 = vmul.f32 %v2152, %v113
  %v2169 = vmul.f32 %v2153, %v114
  %v2170 = vmul.f32 %v2154, %v115
  %v2171 = vmul.f32 %v2155, %v116
  %v2172 = vmul.f32 %v2156, %v117
  %v2173 = vmul.f32 %v2157, %v118
  %v2174 = vmul.f32 %v2158, %v119
  %v2175 = vmul.f32 %v2159, %v2159
  %v2176 = vmul.f32 %v2160, %v2160
  %v2177 = vmul.f32 %v2161, %v2161
  %v2178 = vmul.f32 %v2162, %v2162
  %v2179 = vmul.f32 %v2163, %v2163
  %v2180 = vmul.f32 %v2164, %v2164
  %v2181 = vmul.f32 %v2165, %v2165
  %v2182 = vmul.f32 %v2166, %v2166
  %v2183 = vmul.f32 %v2167, %v2167
  %v2184 = vmul.f32 %v2168, %v2168
  %v2185 = vmul.f32 %v2169, %v2169
  %v2186 = vmul.f32 %v2170, %v2170
  %v2187 = vmul.f32 %v2171, %v2171
  %v2188 = vmul.f32 %v2172, %v2172
  %v2189 = vmul.f32 %v2173, %v2173
  %v2190 = vmul.f32 %v2174, %v2174
  %v2191 = vadd.f32 %v2175, %v2176
  %v2192 = vadd.f32 %v2191, %v2177
  %v2193 = vadd.f32 %v2192, %v2178
  %v2194 = vadd.f32 %v2193, %v2179
  %v2195 = vadd.f32 %v2194, %v2180
  %v2196 = vadd.f32 %v2195, %v2181
  %v2197 = vadd.f32 %v2196, %v2182
  %v2198 = vadd.f32 %v2197, %v2183
  %v2199 = vadd.f32 %v2198, %v2184
  %v2200 = vadd.f32 %v2199, %v2185
  %v2201 = vadd.f32 %v2200, %v2186
  %v2202 = vadd.f32 %v2201, %v2187
  %v2203 = vadd.f32 %v2202, %v2188
  %v2204 = vadd.f32 %v2203, %v2189
  %v2205 = vadd.f32 %v2204, %v2190
  %v2206 = vrot.slane %v2205, 4
  %v2207 = vadd.f32 %v2205, %v2206
  %v2208 = vrot.slane %v2207, 2
  %v2209 = vadd.f32 %v2207, %v2208
  %v2210 = vrot.slane %v2209, 1
  %v2211 = vadd.f32 %v2209, %v2210
  %v2212 = vmul.f32 %v2211, 0.0625
  %v2213 = vadd.f32 %v2212, 1e-05
  %v2214 = vrsqrt.pop %v2213
  %v2215 = vmul.f32 %v2214, %v2213
  %v2216 = vmul.f32 %v2215, %v2214
  %v2217 = vmul.f32 0.5, %v2216
  %v2218 = vsub.f32 1.5, %v2217
  %v2219 = vmul.f32 %v2214, %v2218
  %vm2220 = vweird.f32 %v2213
  %vm2221 = vweird.f32 %v2214
  %vm2222 = vmor %vm2220, %vm2221
  %v2223 = vsel %vm2222, %v2214, %v2219
  %v2224 = vmul.f32 %v1752, %v2223
  %v2225 = vmul.f32 %v2142, %v2224
  %v2227 = vrot.slane %v2225, 7
  %v2229 = vsub.f32 %v1752, %v2227
  %v2230 = vperm.slane %v2224, 2
  %v2231 = vmul.f32 %v2066, %v2230
  %v2232 = vmul.f32 %v2068, %v2230
  %v2233 = vmul.f32 %v2071, %v2230
  %v2234 = vmul.f32 %v2073, %v2230
  %v2235 = vmul.f32 %v2076, %v2230
  %v2236 = vmul.f32 %v2078, %v2230
  %v2237 = vmul.f32 %v2081, %v2230
  %v2238 = vmul.f32 %v2083, %v2230
  %v2239 = vmul.f32 %v2086, %v2230
  %v2240 = vmul.f32 %v2088, %v2230
  %v2241 = vmul.f32 %v2091, %v2230
  %v2242 = vmul.f32 %v2093, %v2230
  %v2243 = vmul.f32 %v2096, %v2230
  %v2244 = vmul.f32 %v2098, %v2230
  %v2245 = vmul.f32 %v2101, %v2230
  %v2246 = vmul.f32 %v2103, %v2230
  %v2247 = vperm.slane %v2229, 3
  %v2248 = vadd.f32 %v2231, %v2247
  %v2249 = vadd.f32 %v2232, %v2247
  %v2250 = vadd.f32 %v2233, %v2247
  %v2251 = vadd.f32 %v2234, %v2247
  %v2252 = vadd.f32 %v2235, %v2247
  %v2253 = vadd.f32 %v2236, %v2247
  %v2254 = vadd.f32 %v2237, %v2247
  %v2255 = vadd.f32 %v2238, %v2247
  %v2256 = vadd.f32 %v2239, %v2247
  %v2257 = vadd.f32 %v2240, %v2247
  %v2258 = vadd.f32 %v2241, %v2247
  %v2259 = vadd.f32 %v2242, %v2247
  %v2260 = vadd.f32 %v2243, %v2247
  %v2261 = vadd.f32 %v2244, %v2247
  %v2262 = vadd.f32 %v2245, %v2247
  %v2263 = vadd.f32 %v2246, %v2247
  %v2264 = vmax.f32 %v2248, 0.0
  %v2265 = vmax.f32 %v2249, 0.0
  %v2266 = vmax.f32 %v2250, 0.0
  %v2267 = vmax.f32 %v2251, 0.0
  %v2268 = vmax.f32 %v2252, 0.0
  %v2269 = vmax.f32 %v2253, 0.0
  %v2270 = vmax.f32 %v2254, 0.0
  %v2271 = vmax.f32 %v2255, 0.0
  %v2272 = vmax.f32 %v2256, 0.0
  %v2273 = vmax.f32 %v2257, 0.0
  %v2274 = vmax.f32 %v2258, 0.0
  %v2275 = vmax.f32 %v2259, 0.0
  %v2276 = vmax.f32 %v2260, 0.0
  %v2277 = vmax.f32 %v2261, 0.0
  %v2278 = vmax.f32 %v2262, 0.0
  %v2279 = vmax.f32 %v2263, 0.0
  %s2280 = scalar_lea.vmem %s5, 32
  %v2281 = vld [vmem:[%s2280] sm:$0xff]
  %v2282 = vpack.c.bf16 %v2265, %v2264
  %v2283 = vpack.c.bf16 %v2267, %v2266
  %v2284 = vpack.c.bf16 %v2269, %v2268
  %v2285 = vpack.c.bf16 %v2271, %v2270
  %v2286 = vpack.c.bf16 %v2273, %v2272
  %v2287 = vpack.c.bf16 %v2275, %v2274
  %v2288 = vpack.c.bf16 %v2277, %v2276
  %v2289 = vpack.c.bf16 %v2279, %v2278
  %s2290 = scalar_lea.vmem %s2, 256
  %v2291 = vld [vmem:[%s2290] sm:$0xf]
  %v2292 = vld [vmem:[%s2290 + $0x4] sm:$0xf]
  %v2293 = vld [vmem:[%s2290 + $0x8] sm:$0xf]
  %v2294 = vld [vmem:[%s2290 + $0xc] sm:$0xf]
  %v2295 = vld [vmem:[%s2290 + $0x10] sm:$0xf]
  %v2296 = vld [vmem:[%s2290 + $0x14] sm:$0xf]
  %v2297 = vld [vmem:[%s2290 + $0x18] sm:$0xf]
  %v2298 = vld [vmem:[%s2290 + $0x1c] sm:$0xf]
  %v2299 = vld [vmem:[%s2290 + $0x20] sm:$0xf]
  %v2300 = vld [vmem:[%s2290 + $0x24] sm:$0xf]
  %v2301 = vld [vmem:[%s2290 + $0x28] sm:$0xf]
  %v2302 = vld [vmem:[%s2290 + $0x2c] sm:$0xf]
  %v2303 = vld [vmem:[%s2290 + $0x30] sm:$0xf]
  %v2304 = vld [vmem:[%s2290 + $0x34] sm:$0xf]
  %v2305 = vld [vmem:[%s2290 + $0x38] sm:$0xf]
  %v2306 = vld [vmem:[%s2290 + $0x3c] sm:$0xf]
  %v2307 = vunpack.c.l.bf16 %v2291
  %v2308 = vunpack.c.l.bf16 %v2292
  %v2309 = vunpack.c.l.bf16 %v2293
  %v2310 = vunpack.c.l.bf16 %v2294
  %v2311 = vunpack.c.l.bf16 %v2295
  %v2312 = vunpack.c.l.bf16 %v2296
  %v2313 = vunpack.c.l.bf16 %v2297
  %v2314 = vunpack.c.l.bf16 %v2298
  %v2315 = vunpack.c.l.bf16 %v2299
  %v2316 = vunpack.c.l.bf16 %v2300
  %v2317 = vunpack.c.l.bf16 %v2301
  %v2318 = vunpack.c.l.bf16 %v2302
  %v2319 = vunpack.c.l.bf16 %v2303
  %v2320 = vunpack.c.l.bf16 %v2304
  %v2321 = vunpack.c.l.bf16 %v2305
  %v2322 = vunpack.c.l.bf16 %v2306
  %2323 = vmatpush.bf16.msra.mxu0 %v2289
  %2324 = vmatpush.bf16.msra.mxu0 %v2288
  %2325 = vmatpush.bf16.msra.mxu0 %v2287
  %2326 = vmatpush.bf16.msra.mxu0 %v2286
  %2327 = vmatpush.bf16.msra.mxu0 %v2285
  %2328 = vmatpush.bf16.msra.mxu0 %v2284
  %2329 = vmatpush.bf16.msra.mxu0 %v2283
  %2330 = vmatpush.bf16.msra.mxu0 %v2282
  %2331 = vmatmul.bf16.gmra.mxu0 %v193
  %v2332 = vpop.f32.mrf.mxu0
  %v2333 = vadd.f32 %v2307, %v2332
  %v2334 = vpop.f32.mrf.mxu0
  %v2335 = vadd.f32 %v2308, %v2334
  %2336 = vmatmul.bf16.gmra.mxu0 %v194
  %v2337 = vpop.f32.mrf.mxu0
  %v2338 = vadd.f32 %v2309, %v2337
  %v2339 = vpop.f32.mrf.mxu0
  %v2340 = vadd.f32 %v2310, %v2339
  %2341 = vmatmul.bf16.gmra.mxu0 %v195
  %v2342 = vpop.f32.mrf.mxu0
  %v2343 = vadd.f32 %v2311, %v2342
  %v2344 = vpop.f32.mrf.mxu0
  %v2345 = vadd.f32 %v2312, %v2344
  %2346 = vmatmul.bf16.gmra.mxu0 %v196
  %v2347 = vpop.f32.mrf.mxu0
  %v2348 = vadd.f32 %v2313, %v2347
  %v2349 = vpop.f32.mrf.mxu0
  %v2350 = vadd.f32 %v2314, %v2349
  %2351 = vmatmul.bf16.gmra.mxu0 %v197
  %v2352 = vpop.f32.mrf.mxu0
  %v2353 = vadd.f32 %v2315, %v2352
  %v2354 = vpop.f32.mrf.mxu0
  %v2355 = vadd.f32 %v2316, %v2354
  %2356 = vmatmul.bf16.gmra.mxu0 %v198
  %v2357 = vpop.f32.mrf.mxu0
  %v2358 = vadd.f32 %v2317, %v2357
  %v2359 = vpop.f32.mrf.mxu0
  %v2360 = vadd.f32 %v2318, %v2359
  %2361 = vmatmul.bf16.gmra.mxu0 %v199
  %v2362 = vpop.f32.mrf.mxu0
  %v2363 = vadd.f32 %v2319, %v2362
  %v2364 = vpop.f32.mrf.mxu0
  %v2365 = vadd.f32 %v2320, %v2364
  %2366 = vmatmul.bf16.gmra.mxu0 %v200
  %v2367 = vpop.f32.mrf.mxu0
  %v2368 = vadd.f32 %v2321, %v2367
  %v2369 = vpop.f32.mrf.mxu0
  %v2370 = vadd.f32 %v2322, %v2369
  %2371 = vdwg.mxu0
  %v2372 = vpack.c.bf16 %v2335, %v2333
  %v2373 = vpack.c.bf16 %v2340, %v2338
  %v2374 = vpack.c.bf16 %v2345, %v2343
  %v2375 = vpack.c.bf16 %v2350, %v2348
  %v2376 = vpack.c.bf16 %v2355, %v2353
  %v2377 = vpack.c.bf16 %v2360, %v2358
  %v2378 = vpack.c.bf16 %v2365, %v2363
  %v2379 = vpack.c.bf16 %v2370, %v2368
  %s2380 = scalar_lea.vmem %s3, 256
  %v2381 = vld [vmem:[%s2380] sm:$0xf]
  %v2382 = vld [vmem:[%s2380 + $0x4] sm:$0xf]
  %v2383 = vld [vmem:[%s2380 + $0x8] sm:$0xf]
  %v2384 = vld [vmem:[%s2380 + $0xc] sm:$0xf]
  %v2385 = vld [vmem:[%s2380 + $0x10] sm:$0xf]
  %v2386 = vld [vmem:[%s2380 + $0x14] sm:$0xf]
  %v2387 = vld [vmem:[%s2380 + $0x18] sm:$0xf]
  %v2388 = vld [vmem:[%s2380 + $0x1c] sm:$0xf]
  %v2389 = vld [vmem:[%s2380 + $0x20] sm:$0xf]
  %v2390 = vld [vmem:[%s2380 + $0x24] sm:$0xf]
  %v2391 = vld [vmem:[%s2380 + $0x28] sm:$0xf]
  %v2392 = vld [vmem:[%s2380 + $0x2c] sm:$0xf]
  %v2393 = vld [vmem:[%s2380 + $0x30] sm:$0xf]
  %v2394 = vld [vmem:[%s2380 + $0x34] sm:$0xf]
  %v2395 = vld [vmem:[%s2380 + $0x38] sm:$0xf]
  %v2396 = vld [vmem:[%s2380 + $0x3c] sm:$0xf]
  %v2397 = vperm.slane %v2281, 0
  %v2414 = vunpack.c.l.b16 %v2381
  %v2415 = vunpack.c.l.b16 %v2382
  %v2416 = vunpack.c.l.b16 %v2383
  %v2417 = vunpack.c.l.b16 %v2384
  %v2418 = vunpack.c.l.b16 %v2385
  %v2419 = vunpack.c.l.b16 %v2386
  %v2420 = vunpack.c.l.b16 %v2387
  %v2421 = vunpack.c.l.b16 %v2388
  %v2422 = vunpack.c.l.b16 %v2389
  %v2423 = vunpack.c.l.b16 %v2390
  %v2424 = vunpack.c.l.b16 %v2391
  %v2425 = vunpack.c.l.b16 %v2392
  %v2426 = vunpack.c.l.b16 %v2393
  %v2427 = vunpack.c.l.b16 %v2394
  %v2428 = vunpack.c.l.b16 %v2395
  %v2429 = vunpack.c.l.b16 %v2396
  %v2430 = vpack.c.b16 %v2415, %v2414
  %v2431 = vpack.c.b16 %v2417, %v2416
  %v2432 = vpack.c.b16 %v2419, %v2418
  %v2433 = vpack.c.b16 %v2421, %v2420
  %v2434 = vpack.c.b16 %v2423, %v2422
  %v2435 = vpack.c.b16 %v2425, %v2424
  %v2436 = vpack.c.b16 %v2427, %v2426
  %v2437 = vpack.c.b16 %v2429, %v2428
  %2446 = vmatpush.bf16.msra.mxu0 %v2437
  %2447 = vmatpush.bf16.msra.mxu0 %v2436
  %2448 = vmatpush.bf16.msra.mxu0 %v2435
  %2449 = vmatpush.bf16.msra.mxu0 %v2434
  %2450 = vmatpush.bf16.msra.mxu0 %v2433
  %2451 = vmatpush.bf16.msra.mxu0 %v2432
  %2452 = vmatpush.bf16.msra.mxu0 %v2431
  %2453 = vmatpush.bf16.msra.mxu0 %v2430
  %2454 = vmatmul.bf16.gmra.mxu0 %v2372
  %v2455 = vpop.f32.mrf.mxu0
  %v2456 = vadd.f32 %v2397, %v2455
  %v2457 = vpop.f32.mrf.mxu0
  %v2458 = vadd.f32 %v2397, %v2457
  %2459 = vmatmul.bf16.gmra.mxu0 %v2373
  %v2460 = vpop.f32.mrf.mxu0
  %v2461 = vadd.f32 %v2397, %v2460
  %v2462 = vpop.f32.mrf.mxu0
  %v2463 = vadd.f32 %v2397, %v2462
  %2464 = vmatmul.bf16.gmra.mxu0 %v2374
  %v2465 = vpop.f32.mrf.mxu0
  %v2466 = vadd.f32 %v2397, %v2465
  %v2467 = vpop.f32.mrf.mxu0
  %v2468 = vadd.f32 %v2397, %v2467
  %2469 = vmatmul.bf16.gmra.mxu0 %v2375
  %v2470 = vpop.f32.mrf.mxu0
  %v2471 = vadd.f32 %v2397, %v2470
  %v2472 = vpop.f32.mrf.mxu0
  %v2473 = vadd.f32 %v2397, %v2472
  %2474 = vmatmul.bf16.gmra.mxu0 %v2376
  %v2475 = vpop.f32.mrf.mxu0
  %v2476 = vadd.f32 %v2397, %v2475
  %v2477 = vpop.f32.mrf.mxu0
  %v2478 = vadd.f32 %v2397, %v2477
  %2479 = vmatmul.bf16.gmra.mxu0 %v2377
  %v2480 = vpop.f32.mrf.mxu0
  %v2481 = vadd.f32 %v2397, %v2480
  %v2482 = vpop.f32.mrf.mxu0
  %v2483 = vadd.f32 %v2397, %v2482
  %2484 = vmatmul.bf16.gmra.mxu0 %v2378
  %v2485 = vpop.f32.mrf.mxu0
  %v2486 = vadd.f32 %v2397, %v2485
  %v2487 = vpop.f32.mrf.mxu0
  %v2488 = vadd.f32 %v2397, %v2487
  %2489 = vmatmul.bf16.gmra.mxu0 %v2379
  %v2490 = vpop.f32.mrf.mxu0
  %v2491 = vadd.f32 %v2397, %v2490
  %v2492 = vpop.f32.mrf.mxu0
  %v2493 = vadd.f32 %v2397, %v2492
  %2494 = vdwg.mxu0
  %v2495 = vmax.f32 %v2456, 0.0
  %v2496 = vmax.f32 %v2458, 0.0
  %v2497 = vmax.f32 %v2461, 0.0
  %v2498 = vmax.f32 %v2463, 0.0
  %v2499 = vmax.f32 %v2466, 0.0
  %v2500 = vmax.f32 %v2468, 0.0
  %v2501 = vmax.f32 %v2471, 0.0
  %v2502 = vmax.f32 %v2473, 0.0
  %v2503 = vmax.f32 %v2476, 0.0
  %v2504 = vmax.f32 %v2478, 0.0
  %v2505 = vmax.f32 %v2481, 0.0
  %v2506 = vmax.f32 %v2483, 0.0
  %v2507 = vmax.f32 %v2486, 0.0
  %v2508 = vmax.f32 %v2488, 0.0
  %v2509 = vmax.f32 %v2491, 0.0
  %v2510 = vmax.f32 %v2493, 0.0
  %v2511 = vpack.c.bf16 %v2496, %v2495
  %v2512 = vpack.c.bf16 %v2498, %v2497
  %v2513 = vpack.c.bf16 %v2500, %v2499
  %v2514 = vpack.c.bf16 %v2502, %v2501
  %v2515 = vpack.c.bf16 %v2504, %v2503
  %v2516 = vpack.c.bf16 %v2506, %v2505
  %v2517 = vpack.c.bf16 %v2508, %v2507
  %v2518 = vpack.c.bf16 %v2510, %v2509
  %s2519 = scalar_lea.vmem %s4, 256
  %v2520 = vld [vmem:[%s2519] sm:$0xf]
  %v2521 = vld [vmem:[%s2519 + $0x4] sm:$0xf]
  %v2522 = vld [vmem:[%s2519 + $0x8] sm:$0xf]
  %v2523 = vld [vmem:[%s2519 + $0xc] sm:$0xf]
  %v2524 = vld [vmem:[%s2519 + $0x10] sm:$0xf]
  %v2525 = vld [vmem:[%s2519 + $0x14] sm:$0xf]
  %v2526 = vld [vmem:[%s2519 + $0x18] sm:$0xf]
  %v2527 = vld [vmem:[%s2519 + $0x1c] sm:$0xf]
  %v2528 = vld [vmem:[%s2519 + $0x20] sm:$0xf]
  %v2529 = vld [vmem:[%s2519 + $0x24] sm:$0xf]
  %v2530 = vld [vmem:[%s2519 + $0x28] sm:$0xf]
  %v2531 = vld [vmem:[%s2519 + $0x2c] sm:$0xf]
  %v2532 = vld [vmem:[%s2519 + $0x30] sm:$0xf]
  %v2533 = vld [vmem:[%s2519 + $0x34] sm:$0xf]
  %v2534 = vld [vmem:[%s2519 + $0x38] sm:$0xf]
  %v2535 = vld [vmem:[%s2519 + $0x3c] sm:$0xf]
  %v2536 = vperm.slane %v2281, 1
  %v2553 = vunpack.c.l.b16 %v2520
  %v2554 = vunpack.c.l.b16 %v2521
  %v2555 = vunpack.c.l.b16 %v2522
  %v2556 = vunpack.c.l.b16 %v2523
  %v2557 = vunpack.c.l.b16 %v2524
  %v2558 = vunpack.c.l.b16 %v2525
  %v2559 = vunpack.c.l.b16 %v2526
  %v2560 = vunpack.c.l.b16 %v2527
  %v2561 = vunpack.c.l.b16 %v2528
  %v2562 = vunpack.c.l.b16 %v2529
  %v2563 = vunpack.c.l.b16 %v2530
  %v2564 = vunpack.c.l.b16 %v2531
  %v2565 = vunpack.c.l.b16 %v2532
  %v2566 = vunpack.c.l.b16 %v2533
  %v2567 = vunpack.c.l.b16 %v2534
  %v2568 = vunpack.c.l.b16 %v2535
  %v2569 = vpack.c.b16 %v2554, %v2553
  %v2570 = vpack.c.b16 %v2556, %v2555
  %v2571 = vpack.c.b16 %v2558, %v2557
  %v2572 = vpack.c.b16 %v2560, %v2559
  %v2573 = vpack.c.b16 %v2562, %v2561
  %v2574 = vpack.c.b16 %v2564, %v2563
  %v2575 = vpack.c.b16 %v2566, %v2565
  %v2576 = vpack.c.b16 %v2568, %v2567
  %2585 = vmatpush.bf16.msra.mxu0 %v2576
  %2586 = vmatpush.bf16.msra.mxu0 %v2575
  %2587 = vmatpush.bf16.msra.mxu0 %v2574
  %2588 = vmatpush.bf16.msra.mxu0 %v2573
  %2589 = vmatpush.bf16.msra.mxu0 %v2572
  %2590 = vmatpush.bf16.msra.mxu0 %v2571
  %2591 = vmatpush.bf16.msra.mxu0 %v2570
  %2592 = vmatpush.bf16.msra.mxu0 %v2569
  %2593 = vmatmul.bf16.gmra.mxu0 %v2511
  %v2594 = vpop.f32.mrf.mxu0
  %v2595 = vadd.f32 %v2536, %v2594
  %v2596 = vpop.f32.mrf.mxu0
  %v2597 = vadd.f32 %v2536, %v2596
  %2598 = vmatmul.bf16.gmra.mxu0 %v2512
  %v2599 = vpop.f32.mrf.mxu0
  %v2600 = vadd.f32 %v2536, %v2599
  %v2601 = vpop.f32.mrf.mxu0
  %v2602 = vadd.f32 %v2536, %v2601
  %2603 = vmatmul.bf16.gmra.mxu0 %v2513
  %v2604 = vpop.f32.mrf.mxu0
  %v2605 = vadd.f32 %v2536, %v2604
  %v2606 = vpop.f32.mrf.mxu0
  %v2607 = vadd.f32 %v2536, %v2606
  %2608 = vmatmul.bf16.gmra.mxu0 %v2514
  %v2609 = vpop.f32.mrf.mxu0
  %v2610 = vadd.f32 %v2536, %v2609
  %v2611 = vpop.f32.mrf.mxu0
  %v2612 = vadd.f32 %v2536, %v2611
  %2613 = vmatmul.bf16.gmra.mxu0 %v2515
  %v2614 = vpop.f32.mrf.mxu0
  %v2615 = vadd.f32 %v2536, %v2614
  %v2616 = vpop.f32.mrf.mxu0
  %v2617 = vadd.f32 %v2536, %v2616
  %2618 = vmatmul.bf16.gmra.mxu0 %v2516
  %v2619 = vpop.f32.mrf.mxu0
  %v2620 = vadd.f32 %v2536, %v2619
  %v2621 = vpop.f32.mrf.mxu0
  %v2622 = vadd.f32 %v2536, %v2621
  %2623 = vmatmul.bf16.gmra.mxu0 %v2517
  %v2624 = vpop.f32.mrf.mxu0
  %v2625 = vadd.f32 %v2536, %v2624
  %v2626 = vpop.f32.mrf.mxu0
  %v2627 = vadd.f32 %v2536, %v2626
  %2628 = vmatmul.bf16.gmra.mxu0 %v2518
  %v2629 = vpop.f32.mrf.mxu0
  %v2630 = vadd.f32 %v2536, %v2629
  %v2631 = vpop.f32.mrf.mxu0
  %v2632 = vadd.f32 %v2536, %v2631
  %2633 = vdwg.mxu0
  %v2634 = vmul.f32 %v2595, %v104
  %v2635 = vmul.f32 %v2597, %v105
  %v2636 = vmul.f32 %v2600, %v106
  %v2637 = vmul.f32 %v2602, %v107
  %v2638 = vmul.f32 %v2605, %v108
  %v2639 = vmul.f32 %v2607, %v109
  %v2640 = vmul.f32 %v2610, %v110
  %v2641 = vmul.f32 %v2612, %v111
  %v2642 = vmul.f32 %v2615, %v112
  %v2643 = vmul.f32 %v2617, %v113
  %v2644 = vmul.f32 %v2620, %v114
  %v2645 = vmul.f32 %v2622, %v115
  %v2646 = vmul.f32 %v2625, %v116
  %v2647 = vmul.f32 %v2627, %v117
  %v2648 = vmul.f32 %v2630, %v118
  %v2649 = vmul.f32 %v2632, %v119
  %v2650 = vadd.f32 %v2634, %v2635
  %v2651 = vadd.f32 %v2650, %v2636
  %v2652 = vadd.f32 %v2651, %v2637
  %v2653 = vadd.f32 %v2652, %v2638
  %v2654 = vadd.f32 %v2653, %v2639
  %v2655 = vadd.f32 %v2654, %v2640
  %v2656 = vadd.f32 %v2655, %v2641
  %v2657 = vadd.f32 %v2656, %v2642
  %v2658 = vadd.f32 %v2657, %v2643
  %v2659 = vadd.f32 %v2658, %v2644
  %v2660 = vadd.f32 %v2659, %v2645
  %v2661 = vadd.f32 %v2660, %v2646
  %v2662 = vadd.f32 %v2661, %v2647
  %v2663 = vadd.f32 %v2662, %v2648
  %v2664 = vadd.f32 %v2663, %v2649
  %v2665 = vrot.slane %v2664, 4
  %v2666 = vadd.f32 %v2664, %v2665
  %v2667 = vrot.slane %v2666, 2
  %v2668 = vadd.f32 %v2666, %v2667
  %v2669 = vrot.slane %v2668, 1
  %v2670 = vadd.f32 %v2668, %v2669
  %v2671 = vmul.f32 %v2670, 0.0625
  %v2672 = vsub.f32 %v2595, %v2671
  %v2673 = vsub.f32 %v2597, %v2671
  %v2674 = vsub.f32 %v2600, %v2671
  %v2675 = vsub.f32 %v2602, %v2671
  %v2676 = vsub.f32 %v2605, %v2671
  %v2677 = vsub.f32 %v2607, %v2671
  %v2678 = vsub.f32 %v2610, %v2671
  %v2679 = vsub.f32 %v2612, %v2671
  %v2680 = vsub.f32 %v2615, %v2671
  %v2681 = vsub.f32 %v2617, %v2671
  %v2682 = vsub.f32 %v2620, %v2671
  %v2683 = vsub.f32 %v2622, %v2671
  %v2684 = vsub.f32 %v2625, %v2671
  %v2685 = vsub.f32 %v2627, %v2671
  %v2686 = vsub.f32 %v2630, %v2671
  %v2687 = vsub.f32 %v2632, %v2671
  %v2688 = vmul.f32 %v2672, %v104
  %v2689 = vmul.f32 %v2673, %v105
  %v2690 = vmul.f32 %v2674, %v106
  %v2691 = vmul.f32 %v2675, %v107
  %v2692 = vmul.f32 %v2676, %v108
  %v2693 = vmul.f32 %v2677, %v109
  %v2694 = vmul.f32 %v2678, %v110
  %v2695 = vmul.f32 %v2679, %v111
  %v2696 = vmul.f32 %v2680, %v112
  %v2697 = vmul.f32 %v2681, %v113
  %v2698 = vmul.f32 %v2682, %v114
  %v2699 = vmul.f32 %v2683, %v115
  %v2700 = vmul.f32 %v2684, %v116
  %v2701 = vmul.f32 %v2685, %v117
  %v2702 = vmul.f32 %v2686, %v118
  %v2703 = vmul.f32 %v2687, %v119
  %v2704 = vmul.f32 %v2688, %v2688
  %v2705 = vmul.f32 %v2689, %v2689
  %v2706 = vmul.f32 %v2690, %v2690
  %v2707 = vmul.f32 %v2691, %v2691
  %v2708 = vmul.f32 %v2692, %v2692
  %v2709 = vmul.f32 %v2693, %v2693
  %v2710 = vmul.f32 %v2694, %v2694
  %v2711 = vmul.f32 %v2695, %v2695
  %v2712 = vmul.f32 %v2696, %v2696
  %v2713 = vmul.f32 %v2697, %v2697
  %v2714 = vmul.f32 %v2698, %v2698
  %v2715 = vmul.f32 %v2699, %v2699
  %v2716 = vmul.f32 %v2700, %v2700
  %v2717 = vmul.f32 %v2701, %v2701
  %v2718 = vmul.f32 %v2702, %v2702
  %v2719 = vmul.f32 %v2703, %v2703
  %v2720 = vadd.f32 %v2704, %v2705
  %v2721 = vadd.f32 %v2720, %v2706
  %v2722 = vadd.f32 %v2721, %v2707
  %v2723 = vadd.f32 %v2722, %v2708
  %v2724 = vadd.f32 %v2723, %v2709
  %v2725 = vadd.f32 %v2724, %v2710
  %v2726 = vadd.f32 %v2725, %v2711
  %v2727 = vadd.f32 %v2726, %v2712
  %v2728 = vadd.f32 %v2727, %v2713
  %v2729 = vadd.f32 %v2728, %v2714
  %v2730 = vadd.f32 %v2729, %v2715
  %v2731 = vadd.f32 %v2730, %v2716
  %v2732 = vadd.f32 %v2731, %v2717
  %v2733 = vadd.f32 %v2732, %v2718
  %v2734 = vadd.f32 %v2733, %v2719
  %v2735 = vrot.slane %v2734, 4
  %v2736 = vadd.f32 %v2734, %v2735
  %v2737 = vrot.slane %v2736, 2
  %v2738 = vadd.f32 %v2736, %v2737
  %v2739 = vrot.slane %v2738, 1
  %v2740 = vadd.f32 %v2738, %v2739
  %v2741 = vmul.f32 %v2740, 0.0625
  %v2742 = vadd.f32 %v2741, 1e-05
  %v2743 = vrsqrt.pop %v2742
  %v2744 = vmul.f32 %v2743, %v2742
  %v2745 = vmul.f32 %v2744, %v2743
  %v2746 = vmul.f32 0.5, %v2745
  %v2747 = vsub.f32 1.5, %v2746
  %v2748 = vmul.f32 %v2743, %v2747
  %vm2749 = vweird.f32 %v2742
  %vm2750 = vweird.f32 %v2743
  %vm2751 = vmor %vm2749, %vm2750
  %v2752 = vsel %vm2751, %v2743, %v2748
  %v2753 = vmul.f32 %v2281, %v2752
  %v2754 = vmul.f32 %v2671, %v2753
  %v2756 = vrot.slane %v2754, 7
  %v2758 = vsub.f32 %v2281, %v2756
  %v2759 = vperm.slane %v2753, 2
  %v2760 = vmul.f32 %v2595, %v2759
  %v2761 = vmul.f32 %v2597, %v2759
  %v2762 = vmul.f32 %v2600, %v2759
  %v2763 = vmul.f32 %v2602, %v2759
  %v2764 = vmul.f32 %v2605, %v2759
  %v2765 = vmul.f32 %v2607, %v2759
  %v2766 = vmul.f32 %v2610, %v2759
  %v2767 = vmul.f32 %v2612, %v2759
  %v2768 = vmul.f32 %v2615, %v2759
  %v2769 = vmul.f32 %v2617, %v2759
  %v2770 = vmul.f32 %v2620, %v2759
  %v2771 = vmul.f32 %v2622, %v2759
  %v2772 = vmul.f32 %v2625, %v2759
  %v2773 = vmul.f32 %v2627, %v2759
  %v2774 = vmul.f32 %v2630, %v2759
  %v2775 = vmul.f32 %v2632, %v2759
  %v2776 = vperm.slane %v2758, 3
  %v2777 = vadd.f32 %v2760, %v2776
  %v2778 = vadd.f32 %v2761, %v2776
  %v2779 = vadd.f32 %v2762, %v2776
  %v2780 = vadd.f32 %v2763, %v2776
  %v2781 = vadd.f32 %v2764, %v2776
  %v2782 = vadd.f32 %v2765, %v2776
  %v2783 = vadd.f32 %v2766, %v2776
  %v2784 = vadd.f32 %v2767, %v2776
  %v2785 = vadd.f32 %v2768, %v2776
  %v2786 = vadd.f32 %v2769, %v2776
  %v2787 = vadd.f32 %v2770, %v2776
  %v2788 = vadd.f32 %v2771, %v2776
  %v2789 = vadd.f32 %v2772, %v2776
  %v2790 = vadd.f32 %v2773, %v2776
  %v2791 = vadd.f32 %v2774, %v2776
  %v2792 = vadd.f32 %v2775, %v2776
  %2793 = vst [vmem:[%s6] sm:$0xff] %v2777
  %2794 = vst [vmem:[%s6 + $0x8] sm:$0xff] %v2778
  %2795 = vst [vmem:[%s6 + $0x10] sm:$0xff] %v2779
  %2796 = vst [vmem:[%s6 + $0x18] sm:$0xff] %v2780
  %2797 = vst [vmem:[%s6 + $0x20] sm:$0xff] %v2781
  %2798 = vst [vmem:[%s6 + $0x28] sm:$0xff] %v2782
  %2799 = vst [vmem:[%s6 + $0x30] sm:$0xff] %v2783
  %2800 = vst [vmem:[%s6 + $0x38] sm:$0xff] %v2784
  %2801 = vst [vmem:[%s6 + $0x40] sm:$0xff] %v2785
  %2802 = vst [vmem:[%s6 + $0x48] sm:$0xff] %v2786
  %2803 = vst [vmem:[%s6 + $0x50] sm:$0xff] %v2787
  %2804 = vst [vmem:[%s6 + $0x58] sm:$0xff] %v2788
  %2805 = vst [vmem:[%s6 + $0x60] sm:$0xff] %v2789
  %2806 = vst [vmem:[%s6 + $0x68] sm:$0xff] %v2790
  %2807 = vst [vmem:[%s6 + $0x70] sm:$0xff] %v2791
  %2808 = vst [vmem:[%s6 + $0x78] sm:$0xff] %v2792
  // Predicated region
  $region26: #{gnn_forward.1} parent=0 // pred_check
    _
  $region27: #{gnn_forward.1} parent=0 // pred_check_branch
    %2810 = sbr.rel (0) target = $region29
  $region28: #{gnn_forward.1} parent=0 // pred_region
    _
  $region29: #{gnn_forward.1} parent=0 // pred_fallthru
    _
  // Predicated region
  $region30: #{gnn_forward.1} parent=0 // pred_check
    _
  $region31: #{gnn_forward.1} parent=0 // pred_check_branch
    %2812 = sbr.rel (0) target = $region33
  $region32: #{gnn_forward.1} parent=0 // pred_region
    _
  $region33: #{gnn_forward.1} parent=0 // pred_fallthru
    _

</llo_original>
